<compile_context>
chip_gen: v7x
topology: tpu7x:2x2x1
jax: 0.10.0
libtpu: 0.0.40
codegen_flags: <defaults>
</compile_context>

<pallas_src>
import functools

import jax
import jax.numpy as jnp
from jax.experimental import pallas as pl
from jax.experimental.pallas import tpu as pltpu


# ---------------------------------------------------------------------------
# Kernel 1: layers 1-3 (hidden MLP).  Grid = (batch tiles,), 'parallel'.
# ---------------------------------------------------------------------------
def _hidden_kernel(feat_ref, w1_ref, b1_ref, w2_ref, b2_ref, w3_ref, b3_ref,
                   h_ref):
    # Layer 1: Linear(num_hist*emb -> hid) + (Dropout=id) + Tanh
    h = jnp.dot(feat_ref[...], w1_ref[...],
                preferred_element_type=jnp.float32) + b1_ref[...]
    h = jnp.tanh(h)
    # Layer 2: Linear(hid -> 4*hid) + (Dropout=id) + Tanh
    h = jnp.dot(h.astype(jnp.bfloat16), w2_ref[...],
                preferred_element_type=jnp.float32) + b2_ref[...]
    h = jnp.tanh(h)
    # Layer 3: Linear(4*hid -> hid) + (Dropout=id) + Tanh
    h = jnp.dot(h.astype(jnp.bfloat16), w3_ref[...],
                preferred_element_type=jnp.float32) + b3_ref[...]
    h_ref[...] = jnp.tanh(h).astype(h_ref.dtype)


# ---------------------------------------------------------------------------
# Kernel 2: layer 4 (output projection).  Grid = (vocab tiles, batch tiles).
# w4's block index depends only on the outer vocab axis -> streamed once.
# ---------------------------------------------------------------------------
def _logits_kernel(h_ref, w4_ref, b4_ref, out_ref):
    logits = jnp.dot(h_ref[...], w4_ref[...],
                     preferred_element_type=jnp.float32) + b4_ref[...]
    out_ref[...] = logits.astype(out_ref.dtype)


@functools.partial(
    jax.jit,
    static_argnames=("batch_tile", "vocab_tile", "out_dtype",
                     "single_buffer_consts"))
def _fnn_lm_forward(words, params, batch_tile, vocab_tile, out_dtype,
                    single_buffer_consts):
    emb_table = params["emb"]
    B, num_hist = words.shape
    emb_size = emb_table.shape[1]

    # Glue: embedding gather + flatten (torch's emb.view(B, -1)).
    # TODO(synk): fuse the gather into kernel 1 via scalar-prefetched ids.
    emb = jnp.take(emb_table.astype(jnp.bfloat16), words, axis=0)
    feat = emb.reshape(B, num_hist * emb_size)

    # prepare_fwd_params() already stores weights/emb in bf16, so these casts
    # are identities inside the jit (no extra HBM copies); they only act as a
    # safety net when f32 params are passed directly.
    w1 = params["w1"].astype(jnp.bfloat16); b1 = params["b1"]
    w2 = params["w2"].astype(jnp.bfloat16); b2 = params["b2"]
    w3 = params["w3"].astype(jnp.bfloat16); b3 = params["b3"]
    w4 = params["w4"].astype(jnp.bfloat16); b4 = params["b4"]

    feat_dim = w1.shape[0]
    hid = w1.shape[1]
    hid4 = w2.shape[1]
    nwords = w4.shape[1]

    bt = min(batch_tile, B)          # full-B block is always legal
    vt = min(vocab_tile, nwords)     # full-vocab block is always legal
    n_b = pl.cdiv(B, bt)
    n_v = pl.cdiv(nwords, vt)
    out_bytes = jnp.dtype(out_dtype).itemsize
    n_const = 1 if single_buffer_consts else 2

    def const_spec(arr):
        # Constant block index -> DMA'd once; single-buffer it when supported.
        if single_buffer_consts:
            return pl.BlockSpec(arr.shape, lambda i: (0, 0),
                                pipeline_mode=pl.Buffered(1))
        return pl.BlockSpec(arr.shape, lambda i: (0, 0))

    # ---------------- Phase 1: hidden activations H [B, hid] ----------------
    vmem1 = (
        2 * bt * feat_dim * 2                              # feat tile (bf16, x2)
        + n_const * (w1.size + w2.size + w3.size) * 2      # weights (bf16)
        + n_const * (b1.size + b2.size + b3.size) * 4      # biases (f32)
        + 2 * bt * hid * 2                                 # H out tile (bf16, x2)
        + 2 * bt * hid4 * 4 + 2 * bt * hid * 4             # f32 intermediates
        + bt * hid4 * 2 + bt * hid * 2                     # bf16 re-casts
    )
    vmem1 = int(min(max(vmem1 + (4 << 20), 32 << 20), 100 << 20))

    hidden = pl.pallas_call(
        _hidden_kernel,
        out_shape=jax.ShapeDtypeStruct((B, hid), jnp.bfloat16),
        grid_spec=pltpu.PrefetchScalarGridSpec(
            num_scalar_prefetch=0,
            grid=(n_b,),
            in_specs=[
                pl.BlockSpec((bt, feat_dim), lambda i: (i, 0)),
                const_spec(w1), const_spec(b1),
                const_spec(w2), const_spec(b2),
                const_spec(w3), const_spec(b3),
            ],
            out_specs=pl.BlockSpec((bt, hid), lambda i: (i, 0)),
        ),
        compiler_params=pltpu.CompilerParams(
            dimension_semantics=("parallel",),
            vmem_limit_bytes=vmem1,
        ),
    )(feat, w1, b1, w2, b2, w3, b3)

    # ---------------- Phase 2: logits = H @ w4 + b4 -------------------------
    vmem2 = (
        2 * bt * hid * 2            # H tile (bf16, double-buffered)
        + 2 * hid * vt * 2          # w4 tile (bf16, double-buffered)
        + 2 * vt * 4                # b4 tile (f32)
        + 2 * bt * vt * out_bytes   # out tile (double-buffered)
        + bt * vt * 4               # f32 logits intermediate before cast
    )
    vmem2 = int(min(max(vmem2 + (4 << 20), 32 << 20), 100 << 20))

    logits = pl.pallas_call(
        _logits_kernel,
        out_shape=jax.ShapeDtypeStruct((B, nwords), out_dtype),
        grid_spec=pltpu.PrefetchScalarGridSpec(
            num_scalar_prefetch=0,
            grid=(n_v, n_b),                                 # vocab outer, batch inner
            in_specs=[
                pl.BlockSpec((bt, hid), lambda j, i: (i, 0)),  # H tile
                pl.BlockSpec((hid, vt), lambda j, i: (0, j)),  # w4: resident over i
                pl.BlockSpec((1, vt), lambda j, i: (0, j)),    # b4
            ],
            out_specs=pl.BlockSpec((bt, vt), lambda j, i: (i, j)),
        ),
        compiler_params=pltpu.CompilerParams(
            # Both axes independent; megacore shards the (large) vocab axis.
            dimension_semantics=("parallel", "parallel"),
            vmem_limit_bytes=vmem2,
        ),
    )(hidden, w4, b4)
    return logits


def fnn_lm_forward(words, params, *, batch_tile=256, vocab_tile=4096,
                   out_dtype=jnp.bfloat16):
    """Forward pass of FNN_LM.

    words : int32 [B, num_hist]
    params: dict with 'emb' [nwords, emb], 'w1'..'w4' (in,out), 'b1'..'b4' (1,out)
            (pass through prepare_fwd_params() once to avoid in-jit bf16 casts)
    returns logits [B, nwords] of dtype `out_dtype` (default bf16; use f32 if
            the downstream loss needs it).

    batch_tile should be a multiple of 8 (ideally 16+ for bf16 sublane packing)
    or >= B; vocab_tile a multiple of 128 or >= nwords.
    """
    try:
        return _fnn_lm_forward(words, params, batch_tile=batch_tile,
                               vocab_tile=vocab_tile, out_dtype=out_dtype,
                               single_buffer_consts=True)
    except Exception:
        # Fallback for jax versions where BlockSpec(pipeline_mode=Buffered(1))
        # is unsupported: identical kernels, default double-buffering.
        return _fnn_lm_forward(words, params, batch_tile=batch_tile,
                               vocab_tile=vocab_tile, out_dtype=out_dtype,
                               single_buffer_consts=False)


def prepare_fwd_params(params):
    """One-time (outside jit) bf16 cast of the large tensors.

    Avoids re-materializing bf16 copies of the weights/embedding on every
    forward call (the in-jit astype becomes an identity)."""
    fwd = dict(params)
    fwd["emb"] = params["emb"].astype(jnp.bfloat16)
    for k in ("w1", "w2", "w3", "w4"):
        fwd[k] = params[k].astype(jnp.bfloat16)
    return fwd


def init_params(key, nwords, emb_size, hid_size, num_hist):
    """Deterministic parameter init (shapes match FNN_LM.__init__)."""
    ks = jax.random.split(key, 5)
    feat_dim = num_hist * emb_size

    def linear(kw, fan_in, fan_out):
        # Uniform(-1/sqrt(fan_in), 1/sqrt(fan_in)), like torch's default.
        bound = 1.0 / jnp.sqrt(float(fan_in))
        w = jax.random.uniform(kw, (fan_in, fan_out), jnp.float32, -bound, bound)
        kb = jax.random.fold_in(kw, 1)
        b = jax.random.uniform(kb, (1, fan_out), jnp.float32, -bound, bound)
        return w, b

    params = {}
    params["emb"] = jax.random.normal(ks[0], (nwords, emb_size), jnp.float32)
    params["w1"], params["b1"] = linear(ks[1], feat_dim, hid_size)
    params["w2"], params["b2"] = linear(ks[2], hid_size, hid_size * 4)
    params["w3"], params["b3"] = linear(ks[3], hid_size * 4, hid_size)
    params["w4"], params["b4"] = linear(ks[4], hid_size, nwords)
    return params


def reference_forward_f32(words, params):
    """Pure-f32 JAX reference (torch eval-mode semantics)."""
    emb = jnp.take(params["emb"], words, axis=0)
    feat = emb.reshape(words.shape[0], -1)
    h = jnp.tanh(feat @ params["w1"] + params["b1"])
    h = jnp.tanh(h @ params["w2"] + params["b2"])
    h = jnp.tanh(h @ params["w3"] + params["b3"])
    return h @ params["w4"] + params["b4"]


def reference_forward_matched(words, params):
    """JAX reference matching the kernel numerics (bf16 operands, f32 accum),
    returning f32 logits (i.e. the value the kernel rounds to out_dtype)."""
    emb = jnp.take(params["emb"].astype(jnp.bfloat16), words, axis=0)
    feat = emb.reshape(words.shape[0], -1)
    w1 = params["w1"].astype(jnp.bfloat16)
    w2 = params["w2"].astype(jnp.bfloat16)
    w3 = params["w3"].astype(jnp.bfloat16)
    w4 = params["w4"].astype(jnp.bfloat16)
    h = jnp.tanh(jnp.dot(feat, w1, preferred_element_type=jnp.float32)
                 + params["b1"])
    h = jnp.tanh(jnp.dot(h.astype(jnp.bfloat16), w2,
                         preferred_element_type=jnp.float32) + params["b2"])
    h = jnp.tanh(jnp.dot(h.astype(jnp.bfloat16), w3,
                         preferred_element_type=jnp.float32) + params["b3"])
    h = h.astype(jnp.bfloat16)
    return jnp.dot(h, w4, preferred_element_type=jnp.float32) + params["b4"]


if __name__ == "__main__":
    # Small, module-consistent shapes; hid / 4*hid / vocab are multiples of 128
    # for lane density, and tiles are chosen so both grid axes have >1 step.
    nwords = 512
    emb_size = 32
    hid_size = 128
    num_hist = 4
    batch = 16

    key = jax.random.PRNGKey(0)
    k_params, k_words = jax.random.split(key)

    params = init_params(k_params, nwords, emb_size, hid_size, num_hist)
    fwd_params = prepare_fwd_params(params)   # one-time bf16 cast, outside jit
    words = jax.random.randint(k_words, (batch, num_hist), 0, nwords,
                               dtype=jnp.int32)

    # 2 batch tiles x 2 vocab tiles exercises both pipelines and the
    # w4-resident inner batch loop.
    logits_bf16 = fnn_lm_forward(words, fwd_params, batch_tile=8,
                                 vocab_tile=256)                 # default bf16 out
    logits_bf16 = jax.block_until_ready(logits_bf16)
    logits_f32 = fnn_lm_forward(words, fwd_params, batch_tile=8,
                                vocab_tile=256, out_dtype=jnp.float32)
    logits_f32 = jax.block_until_ready(logits_f32)

    ref_matched = reference_forward_matched(words, params)
    ref_f32 = reference_forward_f32(words, params)

    assert logits_bf16.shape == (batch, nwords) and logits_bf16.dtype == jnp.bfloat16
    assert logits_f32.shape == (batch, nwords) and logits_f32.dtype == jnp.float32

    # f32-logit path: tight check against the numerics-matched reference.
    err = float(jnp.max(jnp.abs(logits_f32 - ref_matched)))
    assert jnp.allclose(logits_f32, ref_matched, atol=2e-3, rtol=2e-3), err
    # bf16-logit path: matched reference modulo the final bf16 rounding.
    lb = logits_bf16.astype(jnp.float32)
    err = float(jnp.max(jnp.abs(lb - ref_matched)))
    assert jnp.allclose(lb, ref_matched, atol=3e-2, rtol=3e-2), err
    # Loose check vs. pure-f32 torch-equivalent semantics (bf16 MXU operands).
    err = float(jnp.max(jnp.abs(logits_f32 - ref_f32)))
    assert jnp.allclose(logits_f32, ref_f32, atol=7.5e-2, rtol=7.5e-2), err

    print("KERNEL_OK")
</pallas_src>

<mosaic_0001>
module attributes {stable_mosaic.version = 11 : i64} {
  func.func @_hidden_kernel(%arg0: i32, %arg1: memref<8x128xbf16, #tpu.memory_space<vmem>>, %arg2: memref<128x128xbf16, #tpu.memory_space<vmem>>, %arg3: memref<1x128xf32, #tpu.memory_space<vmem>>, %arg4: memref<128x512xbf16, #tpu.memory_space<vmem>>, %arg5: memref<1x512xf32, #tpu.memory_space<vmem>>, %arg6: memref<512x128xbf16, #tpu.memory_space<vmem>>, %arg7: memref<1x128xf32, #tpu.memory_space<vmem>>, %arg8: memref<8x128xbf16, #tpu.memory_space<vmem>>) attributes {dimension_semantics = [#tpu.dimension_semantics<parallel>], iteration_bounds = array<i64: 2>, scalar_prefetch = 0 : i64, scratch_operands = 0 : i64, tpu.core_type = #tpu.core_type<tc>, window_params = [{transform_indices = @transform_0, window_bounds = array<i64: 8, 128>}, {pipeline_mode = #tpu.pipeline_mode<synchronous>, transform_indices = @transform_1, window_bounds = array<i64: 128, 128>}, {pipeline_mode = #tpu.pipeline_mode<synchronous>, transform_indices = @transform_2, window_bounds = array<i64: 1, 128>}, {pipeline_mode = #tpu.pipeline_mode<synchronous>, transform_indices = @transform_3, window_bounds = array<i64: 128, 512>}, {pipeline_mode = #tpu.pipeline_mode<synchronous>, transform_indices = @transform_4, window_bounds = array<i64: 1, 512>}, {pipeline_mode = #tpu.pipeline_mode<synchronous>, transform_indices = @transform_5, window_bounds = array<i64: 512, 128>}, {pipeline_mode = #tpu.pipeline_mode<synchronous>, transform_indices = @transform_6, window_bounds = array<i64: 1, 128>}, {transform_indices = @transform_7, window_bounds = array<i64: 8, 128>}]} {
    %c0 = arith.constant 0 : index
    %c0_0 = arith.constant 0 : index
    %0 = vector.load %arg1[%c0, %c0_0] : memref<8x128xbf16, #tpu.memory_space<vmem>>, vector<8x128xbf16>
    %c0_1 = arith.constant 0 : index
    %c0_2 = arith.constant 0 : index
    %1 = vector.load %arg2[%c0_1, %c0_2] : memref<128x128xbf16, #tpu.memory_space<vmem>>, vector<128x128xbf16>
    %cst = arith.constant dense<0.000000e+00> : vector<8x128xf32>
    %2 = tpu.matmul %0, %1, %cst {dimension_numbers = #tpu.dot_dimension_numbers<[1], [0], [0], [1], [0, 0, 1, 1], [], []>} : vector<8x128xbf16>, vector<128x128xbf16>, vector<8x128xf32> -> vector<8x128xf32>
    %c0_3 = arith.constant 0 : index
    %c0_4 = arith.constant 0 : index
    %3 = vector.load %arg3[%c0_3, %c0_4] : memref<1x128xf32, #tpu.memory_space<vmem>>, vector<1x128xf32>
    %4 = vector.broadcast %3 : vector<1x128xf32> to vector<8x128xf32>
    %5 = arith.addf %2, %4 : vector<8x128xf32>
    %6 = math.tanh %5 : vector<8x128xf32>
    %7 = arith.truncf %6 : vector<8x128xf32> to vector<8x128xbf16>
    %c0_5 = arith.constant 0 : index
    %c0_6 = arith.constant 0 : index
    %8 = vector.load %arg4[%c0_5, %c0_6] : memref<128x512xbf16, #tpu.memory_space<vmem>>, vector<128x512xbf16>
    %cst_7 = arith.constant dense<0.000000e+00> : vector<8x512xf32>
    %9 = tpu.matmul %7, %8, %cst_7 {dimension_numbers = #tpu.dot_dimension_numbers<[1], [0], [0], [1], [0, 0, 1, 1], [], []>} : vector<8x128xbf16>, vector<128x512xbf16>, vector<8x512xf32> -> vector<8x512xf32>
    %c0_8 = arith.constant 0 : index
    %c0_9 = arith.constant 0 : index
    %10 = vector.load %arg5[%c0_8, %c0_9] : memref<1x512xf32, #tpu.memory_space<vmem>>, vector<1x512xf32>
    %11 = vector.broadcast %10 : vector<1x512xf32> to vector<8x512xf32>
    %12 = arith.addf %9, %11 : vector<8x512xf32>
    %13 = math.tanh %12 : vector<8x512xf32>
    %14 = arith.truncf %13 : vector<8x512xf32> to vector<8x512xbf16>
    %c0_10 = arith.constant 0 : index
    %c0_11 = arith.constant 0 : index
    %15 = vector.load %arg6[%c0_10, %c0_11] : memref<512x128xbf16, #tpu.memory_space<vmem>>, vector<512x128xbf16>
    %cst_12 = arith.constant dense<0.000000e+00> : vector<8x128xf32>
    %16 = tpu.matmul %14, %15, %cst_12 {dimension_numbers = #tpu.dot_dimension_numbers<[1], [0], [0], [1], [0, 0, 1, 1], [], []>} : vector<8x512xbf16>, vector<512x128xbf16>, vector<8x128xf32> -> vector<8x128xf32>
    %c0_13 = arith.constant 0 : index
    %c0_14 = arith.constant 0 : index
    %17 = vector.load %arg7[%c0_13, %c0_14] : memref<1x128xf32, #tpu.memory_space<vmem>>, vector<1x128xf32>
    %18 = vector.broadcast %17 : vector<1x128xf32> to vector<8x128xf32>
    %19 = arith.addf %16, %18 : vector<8x128xf32>
    %20 = math.tanh %19 : vector<8x128xf32>
    %21 = arith.truncf %20 : vector<8x128xf32> to vector<8x128xbf16>
    %c0_15 = arith.constant 0 : index
    %c0_16 = arith.constant 0 : index
    %22 = vector.load %arg8[%c0_15, %c0_16] : memref<8x128xbf16, #tpu.memory_space<vmem>>, vector<8x128xbf16>
    tpu.vector_store %arg8[%c0_15, %c0_16], %21 {strides = array<i32>} : memref<8x128xbf16, #tpu.memory_space<vmem>>, vector<8x128xbf16>,
    return
  }
  func.func @transform_0(%arg0: i32) -> (i32, i32) {
    %c0_i32 = arith.constant 0 : i32
    %c0_i32_0 = arith.constant 0 : i32
    return %arg0, %c0_i32 : i32, i32
  }
  func.func @transform_1(%arg0: i32) -> (i32, i32) {
    %c0_i32 = arith.constant 0 : i32
    %c0_i32_0 = arith.constant 0 : i32
    %c0_i32_1 = arith.constant 0 : i32
    return %c0_i32, %c0_i32_0 : i32, i32
  }
  func.func @transform_2(%arg0: i32) -> (i32, i32) {
    %c0_i32 = arith.constant 0 : i32
    %c0_i32_0 = arith.constant 0 : i32
    %c0_i32_1 = arith.constant 0 : i32
    return %c0_i32, %c0_i32_0 : i32, i32
  }
  func.func @transform_3(%arg0: i32) -> (i32, i32) {
    %c0_i32 = arith.constant 0 : i32
    %c0_i32_0 = arith.constant 0 : i32
    %c0_i32_1 = arith.constant 0 : i32
    return %c0_i32, %c0_i32_0 : i32, i32
  }
  func.func @transform_4(%arg0: i32) -> (i32, i32) {
    %c0_i32 = arith.constant 0 : i32
    %c0_i32_0 = arith.constant 0 : i32
    %c0_i32_1 = arith.constant 0 : i32
    return %c0_i32, %c0_i32_0 : i32, i32
  }
  func.func @transform_5(%arg0: i32) -> (i32, i32) {
    %c0_i32 = arith.constant 0 : i32
    %c0_i32_0 = arith.constant 0 : i32
    %c0_i32_1 = arith.constant 0 : i32
    return %c0_i32, %c0_i32_0 : i32, i32
  }
  func.func @transform_6(%arg0: i32) -> (i32, i32) {
    %c0_i32 = arith.constant 0 : i32
    %c0_i32_0 = arith.constant 0 : i32
    %c0_i32_1 = arith.constant 0 : i32
    return %c0_i32, %c0_i32_0 : i32, i32
  }
  func.func @transform_7(%arg0: i32) -> (i32, i32) {
    %c0_i32 = arith.constant 0 : i32
    %c0_i32_0 = arith.constant 0 : i32
    return %arg0, %c0_i32 : i32, i32
  }
}

module attributes {stable_mosaic.version = 11 : i64} {
  func.func @_logits_kernel(%arg0: i32, %arg1: i32, %arg2: memref<8x128xbf16, #tpu.memory_space<vmem>>, %arg3: memref<128x256xbf16, #tpu.memory_space<vmem>>, %arg4: memref<1x256xf32, #tpu.memory_space<vmem>>, %arg5: memref<8x256xbf16, #tpu.memory_space<vmem>>) attributes {dimension_semantics = [#tpu.dimension_semantics<parallel>, #tpu.dimension_semantics<parallel>], iteration_bounds = array<i64: 2, 2>, scalar_prefetch = 0 : i64, scratch_operands = 0 : i64, tpu.core_type = #tpu.core_type<tc>, window_params = [{transform_indices = @transform_0, window_bounds = array<i64: 8, 128>}, {transform_indices = @transform_1, window_bounds = array<i64: 128, 256>}, {transform_indices = @transform_2, window_bounds = array<i64: 1, 256>}, {transform_indices = @transform_3, window_bounds = array<i64: 8, 256>}]} {
    %c0 = arith.constant 0 : index
    %c0_0 = arith.constant 0 : index
    %0 = vector.load %arg2[%c0, %c0_0] : memref<8x128xbf16, #tpu.memory_space<vmem>>, vector<8x128xbf16>
    %c0_1 = arith.constant 0 : index
    %c0_2 = arith.constant 0 : index
    %1 = vector.load %arg3[%c0_1, %c0_2] : memref<128x256xbf16, #tpu.memory_space<vmem>>, vector<128x256xbf16>
    %cst = arith.constant dense<0.000000e+00> : vector<8x256xf32>
    %2 = tpu.matmul %0, %1, %cst {dimension_numbers = #tpu.dot_dimension_numbers<[1], [0], [0], [1], [0, 0, 1, 1], [], []>} : vector<8x128xbf16>, vector<128x256xbf16>, vector<8x256xf32> -> vector<8x256xf32>
    %c0_3 = arith.constant 0 : index
    %c0_4 = arith.constant 0 : index
    %3 = vector.load %arg4[%c0_3, %c0_4] : memref<1x256xf32, #tpu.memory_space<vmem>>, vector<1x256xf32>
    %4 = vector.broadcast %3 : vector<1x256xf32> to vector<8x256xf32>
    %5 = arith.addf %2, %4 : vector<8x256xf32>
    %6 = arith.truncf %5 : vector<8x256xf32> to vector<8x256xbf16>
    %c0_5 = arith.constant 0 : index
    %c0_6 = arith.constant 0 : index
    %7 = vector.load %arg5[%c0_5, %c0_6] : memref<8x256xbf16, #tpu.memory_space<vmem>>, vector<8x256xbf16>
    tpu.vector_store %arg5[%c0_5, %c0_6], %6 {strides = array<i32>} : memref<8x256xbf16, #tpu.memory_space<vmem>>, vector<8x256xbf16>,
    return
  }
  func.func @transform_0(%arg0: i32, %arg1: i32) -> (i32, i32) {
    %c0_i32 = arith.constant 0 : i32
    %c0_i32_0 = arith.constant 0 : i32
    return %arg1, %c0_i32 : i32, i32
  }
  func.func @transform_1(%arg0: i32, %arg1: i32) -> (i32, i32) {
    %c0_i32 = arith.constant 0 : i32
    %c0_i32_0 = arith.constant 0 : i32
    return %c0_i32, %arg0 : i32, i32
  }
  func.func @transform_2(%arg0: i32, %arg1: i32) -> (i32, i32) {
    %c0_i32 = arith.constant 0 : i32
    %c0_i32_0 = arith.constant 0 : i32
    return %c0_i32, %arg0 : i32, i32
  }
  func.func @transform_3(%arg0: i32, %arg1: i32) -> (i32, i32) {
    %c0_i32 = arith.constant 0 : i32
    return %arg1, %arg0 : i32, i32
  }
}

module attributes {stable_mosaic.version = 11 : i64} {
  func.func @_hidden_kernel(%arg0: i32, %arg1: memref<8x128xbf16, #tpu.memory_space<vmem>>, %arg2: memref<128x128xbf16, #tpu.memory_space<vmem>>, %arg3: memref<1x128xf32, #tpu.memory_space<vmem>>, %arg4: memref<128x512xbf16, #tpu.memory_space<vmem>>, %arg5: memref<1x512xf32, #tpu.memory_space<vmem>>, %arg6: memref<512x128xbf16, #tpu.memory_space<vmem>>, %arg7: memref<1x128xf32, #tpu.memory_space<vmem>>, %arg8: memref<8x128xbf16, #tpu.memory_space<vmem>>) attributes {dimension_semantics = [#tpu.dimension_semantics<parallel>], iteration_bounds = array<i64: 2>, scalar_prefetch = 0 : i64, scratch_operands = 0 : i64, tpu.core_type = #tpu.core_type<tc>, window_params = [{transform_indices = @transform_0, window_bounds = array<i64: 8, 128>}, {pipeline_mode = #tpu.pipeline_mode<synchronous>, transform_indices = @transform_1, window_bounds = array<i64: 128, 128>}, {pipeline_mode = #tpu.pipeline_mode<synchronous>, transform_indices = @transform_2, window_bounds = array<i64: 1, 128>}, {pipeline_mode = #tpu.pipeline_mode<synchronous>, transform_indices = @transform_3, window_bounds = array<i64: 128, 512>}, {pipeline_mode = #tpu.pipeline_mode<synchronous>, transform_indices = @transform_4, window_bounds = array<i64: 1, 512>}, {pipeline_mode = #tpu.pipeline_mode<synchronous>, transform_indices = @transform_5, window_bounds = array<i64: 512, 128>}, {pipeline_mode = #tpu.pipeline_mode<synchronous>, transform_indices = @transform_6, window_bounds = array<i64: 1, 128>}, {transform_indices = @transform_7, window_bounds = array<i64: 8, 128>}]} {
    %c0 = arith.constant 0 : index
    %c0_0 = arith.constant 0 : index
    %0 = vector.load %arg1[%c0, %c0_0] : memref<8x128xbf16, #tpu.memory_space<vmem>>, vector<8x128xbf16>
    %c0_1 = arith.constant 0 : index
    %c0_2 = arith.constant 0 : index
    %1 = vector.load %arg2[%c0_1, %c0_2] : memref<128x128xbf16, #tpu.memory_space<vmem>>, vector<128x128xbf16>
    %cst = arith.constant dense<0.000000e+00> : vector<8x128xf32>
    %2 = tpu.matmul %0, %1, %cst {dimension_numbers = #tpu.dot_dimension_numbers<[1], [0], [0], [1], [0, 0, 1, 1], [], []>} : vector<8x128xbf16>, vector<128x128xbf16>, vector<8x128xf32> -> vector<8x128xf32>
    %c0_3 = arith.constant 0 : index
    %c0_4 = arith.constant 0 : index
    %3 = vector.load %arg3[%c0_3, %c0_4] : memref<1x128xf32, #tpu.memory_space<vmem>>, vector<1x128xf32>
    %4 = vector.broadcast %3 : vector<1x128xf32> to vector<8x128xf32>
    %5 = arith.addf %2, %4 : vector<8x128xf32>
    %6 = math.tanh %5 : vector<8x128xf32>
    %7 = arith.truncf %6 : vector<8x128xf32> to vector<8x128xbf16>
    %c0_5 = arith.constant 0 : index
    %c0_6 = arith.constant 0 : index
    %8 = vector.load %arg4[%c0_5, %c0_6] : memref<128x512xbf16, #tpu.memory_space<vmem>>, vector<128x512xbf16>
    %cst_7 = arith.constant dense<0.000000e+00> : vector<8x512xf32>
    %9 = tpu.matmul %7, %8, %cst_7 {dimension_numbers = #tpu.dot_dimension_numbers<[1], [0], [0], [1], [0, 0, 1, 1], [], []>} : vector<8x128xbf16>, vector<128x512xbf16>, vector<8x512xf32> -> vector<8x512xf32>
    %c0_8 = arith.constant 0 : index
    %c0_9 = arith.constant 0 : index
    %10 = vector.load %arg5[%c0_8, %c0_9] : memref<1x512xf32, #tpu.memory_space<vmem>>, vector<1x512xf32>
    %11 = vector.broadcast %10 : vector<1x512xf32> to vector<8x512xf32>
    %12 = arith.addf %9, %11 : vector<8x512xf32>
    %13 = math.tanh %12 : vector<8x512xf32>
    %14 = arith.truncf %13 : vector<8x512xf32> to vector<8x512xbf16>
    %c0_10 = arith.constant 0 : index
    %c0_11 = arith.constant 0 : index
    %15 = vector.load %arg6[%c0_10, %c0_11] : memref<512x128xbf16, #tpu.memory_space<vmem>>, vector<512x128xbf16>
    %cst_12 = arith.constant dense<0.000000e+00> : vector<8x128xf32>
    %16 = tpu.matmul %14, %15, %cst_12 {dimension_numbers = #tpu.dot_dimension_numbers<[1], [0], [0], [1], [0, 0, 1, 1], [], []>} : vector<8x512xbf16>, vector<512x128xbf16>, vector<8x128xf32> -> vector<8x128xf32>
    %c0_13 = arith.constant 0 : index
    %c0_14 = arith.constant 0 : index
    %17 = vector.load %arg7[%c0_13, %c0_14] : memref<1x128xf32, #tpu.memory_space<vmem>>, vector<1x128xf32>
    %18 = vector.broadcast %17 : vector<1x128xf32> to vector<8x128xf32>
    %19 = arith.addf %16, %18 : vector<8x128xf32>
    %20 = math.tanh %19 : vector<8x128xf32>
    %21 = arith.truncf %20 : vector<8x128xf32> to vector<8x128xbf16>
    %c0_15 = arith.constant 0 : index
    %c0_16 = arith.constant 0 : index
    %22 = vector.load %arg8[%c0_15, %c0_16] : memref<8x128xbf16, #tpu.memory_space<vmem>>, vector<8x128xbf16>
    tpu.vector_store %arg8[%c0_15, %c0_16], %21 {strides = array<i32>} : memref<8x128xbf16, #tpu.memory_space<vmem>>, vector<8x128xbf16>,
    return
  }
  func.func @transform_0(%arg0: i32) -> (i32, i32) {
    %c0_i32 = arith.constant 0 : i32
    %c0_i32_0 = arith.constant 0 : i32
    return %arg0, %c0_i32 : i32, i32
  }
  func.func @transform_1(%arg0: i32) -> (i32, i32) {
    %c0_i32 = arith.constant 0 : i32
    %c0_i32_0 = arith.constant 0 : i32
    %c0_i32_1 = arith.constant 0 : i32
    return %c0_i32, %c0_i32_0 : i32, i32
  }
  func.func @transform_2(%arg0: i32) -> (i32, i32) {
    %c0_i32 = arith.constant 0 : i32
    %c0_i32_0 = arith.constant 0 : i32
    %c0_i32_1 = arith.constant 0 : i32
    return %c0_i32, %c0_i32_0 : i32, i32
  }
  func.func @transform_3(%arg0: i32) -> (i32, i32) {
    %c0_i32 = arith.constant 0 : i32
    %c0_i32_0 = arith.constant 0 : i32
    %c0_i32_1 = arith.constant 0 : i32
    return %c0_i32, %c0_i32_0 : i32, i32
  }
  func.func @transform_4(%arg0: i32) -> (i32, i32) {
    %c0_i32 = arith.constant 0 : i32
    %c0_i32_0 = arith.constant 0 : i32
    %c0_i32_1 = arith.constant 0 : i32
    return %c0_i32, %c0_i32_0 : i32, i32
  }
  func.func @transform_5(%arg0: i32) -> (i32, i32) {
    %c0_i32 = arith.constant 0 : i32
    %c0_i32_0 = arith.constant 0 : i32
    %c0_i32_1 = arith.constant 0 : i32
    return %c0_i32, %c0_i32_0 : i32, i32
  }
  func.func @transform_6(%arg0: i32) -> (i32, i32) {
    %c0_i32 = arith.constant 0 : i32
    %c0_i32_0 = arith.constant 0 : i32
    %c0_i32_1 = arith.constant 0 : i32
    return %c0_i32, %c0_i32_0 : i32, i32
  }
  func.func @transform_7(%arg0: i32) -> (i32, i32) {
    %c0_i32 = arith.constant 0 : i32
    %c0_i32_0 = arith.constant 0 : i32
    return %arg0, %c0_i32 : i32, i32
  }
}

module attributes {stable_mosaic.version = 11 : i64} {
  func.func @_logits_kernel(%arg0: i32, %arg1: i32, %arg2: memref<8x128xbf16, #tpu.memory_space<vmem>>, %arg3: memref<128x256xbf16, #tpu.memory_space<vmem>>, %arg4: memref<1x256xf32, #tpu.memory_space<vmem>>, %arg5: memref<8x256xbf16, #tpu.memory_space<vmem>>) attributes {dimension_semantics = [#tpu.dimension_semantics<parallel>, #tpu.dimension_semantics<parallel>], iteration_bounds = array<i64: 2, 2>, scalar_prefetch = 0 : i64, scratch_operands = 0 : i64, tpu.core_type = #tpu.core_type<tc>, window_params = [{transform_indices = @transform_0, window_bounds = array<i64: 8, 128>}, {transform_indices = @transform_1, window_bounds = array<i64: 128, 256>}, {transform_indices = @transform_2, window_bounds = array<i64: 1, 256>}, {transform_indices = @transform_3, window_bounds = array<i64: 8, 256>}]} {
    %c0 = arith.constant 0 : index
    %c0_0 = arith.constant 0 : index
    %0 = vector.load %arg2[%c0, %c0_0] : memref<8x128xbf16, #tpu.memory_space<vmem>>, vector<8x128xbf16>
    %c0_1 = arith.constant 0 : index
    %c0_2 = arith.constant 0 : index
    %1 = vector.load %arg3[%c0_1, %c0_2] : memref<128x256xbf16, #tpu.memory_space<vmem>>, vector<128x256xbf16>
    %cst = arith.constant dense<0.000000e+00> : vector<8x256xf32>
    %2 = tpu.matmul %0, %1, %cst {dimension_numbers = #tpu.dot_dimension_numbers<[1], [0], [0], [1], [0, 0, 1, 1], [], []>} : vector<8x128xbf16>, vector<128x256xbf16>, vector<8x256xf32> -> vector<8x256xf32>
    %c0_3 = arith.constant 0 : index
    %c0_4 = arith.constant 0 : index
    %3 = vector.load %arg4[%c0_3, %c0_4] : memref<1x256xf32, #tpu.memory_space<vmem>>, vector<1x256xf32>
    %4 = vector.broadcast %3 : vector<1x256xf32> to vector<8x256xf32>
    %5 = arith.addf %2, %4 : vector<8x256xf32>
    %6 = arith.truncf %5 : vector<8x256xf32> to vector<8x256xbf16>
    %c0_5 = arith.constant 0 : index
    %c0_6 = arith.constant 0 : index
    %7 = vector.load %arg5[%c0_5, %c0_6] : memref<8x256xbf16, #tpu.memory_space<vmem>>, vector<8x256xbf16>
    tpu.vector_store %arg5[%c0_5, %c0_6], %6 {strides = array<i32>} : memref<8x256xbf16, #tpu.memory_space<vmem>>, vector<8x256xbf16>,
    return
  }
  func.func @transform_0(%arg0: i32, %arg1: i32) -> (i32, i32) {
    %c0_i32 = arith.constant 0 : i32
    %c0_i32_0 = arith.constant 0 : i32
    return %arg1, %c0_i32 : i32, i32
  }
  func.func @transform_1(%arg0: i32, %arg1: i32) -> (i32, i32) {
    %c0_i32 = arith.constant 0 : i32
    %c0_i32_0 = arith.constant 0 : i32
    return %c0_i32, %arg0 : i32, i32
  }
  func.func @transform_2(%arg0: i32, %arg1: i32) -> (i32, i32) {
    %c0_i32 = arith.constant 0 : i32
    %c0_i32_0 = arith.constant 0 : i32
    return %c0_i32, %arg0 : i32, i32
  }
  func.func @transform_3(%arg0: i32, %arg1: i32) -> (i32, i32) {
    %c0_i32 = arith.constant 0 : i32
    return %arg1, %arg0 : i32, i32
  }
}

</mosaic_0001>

<llo_original>
// kernel: _fnn_lm_forward.3
$region0: #{_fnn_lm_forward.3}
  #allocation0 [shape = 'u32[]', space=smem, size = 0x4, offset = 0x4, fixed_abs, tag = 'smem constant byte address 0x4 - core index']
  #allocation1 [shape = 'u32[144,128]{1,0:T(1,128)}', space=vmem, size = 0x12000, scoped, tag = 'internal scratch']
  %s0 = inlined_call_operand.vmem [shape: bf16[16,128], index: 0, kind: input, shape index: {}]
  %s1 = inlined_call_operand.vmem [shape: bf16[128,512], index: 1, kind: input, shape index: {}]
  %s2 = inlined_call_operand.vmem [shape: f32[1,512], index: 2, kind: input, shape index: {}]
  %s3 = inlined_call_operand.hbm [shape: bf16[16,512], index: 3, kind: output, shape index: {}]
  %s4 = sld [smem:[#allocation0]]
  $region83: #{_fnn_lm_forward.3} parent=0
    _
  %s6 = ssub.s32 1, %s4
  %s7 = scalar_select 0, %s6, %s4
  $region1: #{_fnn_lm_forward.3} parent=0
    #allocation2 [shape = 'u8[131072]{0}', space=vmem, size = 0x20000, scoped, tag = 'input window, operand 1']
    #allocation3 [shape = 'u8[8192]{0}', space=vmem, size = 0x2000, scoped, tag = 'output window, operand 0']
    #allocation4 [shape = 's32[2]{0}', space=sflag, size = 0x8, scoped, tag = 'scoped memory for _fnn_lm_forward.3']
    %8 = vsyncpa [#allocation4], 0
    %s9 = scalar_lea.sflag [#allocation4], 1
    %10 = vsyncpa %s9, 0
    loop: start=0, step=1, limit=6
    $region2: #{_fnn_lm_forward.3} parent=1 // loop_pre_header
      _
    $region3: #{_fnn_lm_forward.3} parent=1 // loop_header
      %s12 = sphi 0, %s16
      %p13 = scmp.ge.s32.totalorder %s12, 6
      %s19 = sphi 0, %s31
      %s20 = sphi 0, %s27
      %s21 = sphi 0, %s19
      %s22 = sphi 0, %s20
      %s23 = sphi 0, %s21
      %s24 = sphi 0, %s22
      %s34 = sphi 0, %s36
      %s37 = sphi 0, %s34
      %s38 = sphi 0, %s37
      %s54 = sphi 0, %s38
      %s60 = sphi 0, %s62
      %s63 = sphi 0, %s60
      %s64 = sphi 0, %s63
      %s80 = sphi 0, %s64
      %s86 = sphi 0, %s88
      %s89 = sphi 0, %s86
      %s90 = sphi 0, %s89
      %s106 = sphi 0, %s90
      %s114 = sphi 0, %s116
      %s117 = sphi 0, %s114
      %s118 = sphi 0, %s117
      %s134 = sphi 0, %s118
    $region4: #{_fnn_lm_forward.3} parent=1 // loop_header_branch
      %15 = sbr.rel (%p13) target = $region8
    $region5: #{_fnn_lm_forward.3} parent=1 // loop_body
      %s17 = ssub.s32 %s12, 1
      %s18 = ssub.s32 %s12, 2
      %s25 = sadd.s32 1, %s20
      %p26 = scmp.ge.s32.totalorder %s25, 2
      %s27 = scalar_select %p26, 0, %s25
      %s28 = sadd.s32 1, %s19
      %s29 = scalar_select %p26, %s28, %s19
      %p30 = scmp.ge.s32.totalorder %s29, 2
      %s31 = scalar_select %p30, 0, %s29
      %s32 = ssub.s32 %s20, %s27
      %p33 = scmp.eq.s32.totalorder %s32, 0
      %s35 = sadd.s32 %s34, 1
      %s36 = scalar_select %p33, %s34, %s35
      %p39 = pneg %p33
      %p40 = scmp.eq.s32.totalorder %s12, 3
      %p41 = por %p39, %p40
      %p42 = scmp.ne.s32.totalorder %s34, %s37
      %p43 = scmp.eq.s32.totalorder %s12, 0
      %p44 = por %p42, %p43
      %p45 = scmp.ne.s32.totalorder %s34, %s37
      %p46 = scmp.eq.s32.totalorder %s17, 3
      %p47 = por %p45, %p46
      %p48 = scmp.ne.s32.totalorder %s37, %s38
      %p49 = scmp.eq.s32.totalorder %s17, 0
      %p50 = por %p48, %p49
      %p51 = scmp.ne.s32.totalorder %s37, %s38
      %p52 = scmp.eq.s32.totalorder %s18, 3
      %p53 = por %p51, %p52
      %p55 = scmp.ne.s32.totalorder %s38, %s54
      %p56 = scmp.eq.s32.totalorder %s18, 0
      %p57 = por %p55, %p56
      %s58 = ssub.s32 %s19, %s31
      %p59 = scmp.eq.s32.totalorder %s58, 0
      %s61 = sadd.s32 %s60, 1
      %s62 = scalar_select %p59, %s60, %s61
      %p65 = pneg %p59
      %p66 = scmp.eq.s32.totalorder %s12, 3
      %p67 = por %p65, %p66
      %p68 = scmp.ne.s32.totalorder %s60, %s63
      %p69 = scmp.eq.s32.totalorder %s12, 0
      %p70 = por %p68, %p69
      %p71 = scmp.ne.s32.totalorder %s60, %s63
      %p72 = scmp.eq.s32.totalorder %s17, 3
      %p73 = por %p71, %p72
      %p74 = scmp.ne.s32.totalorder %s63, %s64
      %p75 = scmp.eq.s32.totalorder %s17, 0
      %p76 = por %p74, %p75
      %p77 = scmp.ne.s32.totalorder %s63, %s64
      %p78 = scmp.eq.s32.totalorder %s18, 3
      %p79 = por %p77, %p78
      %p81 = scmp.ne.s32.totalorder %s64, %s80
      %p82 = scmp.eq.s32.totalorder %s18, 0
      %p83 = por %p81, %p82
      %s84 = ssub.s32 %s19, %s31
      %p85 = scmp.eq.s32.totalorder %s84, 0
      %s87 = sadd.s32 %s86, 1
      %s88 = scalar_select %p85, %s86, %s87
      %p91 = pneg %p85
      %p92 = scmp.eq.s32.totalorder %s12, 3
      %p93 = por %p91, %p92
      %p94 = scmp.ne.s32.totalorder %s86, %s89
      %p95 = scmp.eq.s32.totalorder %s12, 0
      %p96 = por %p94, %p95
      %p97 = scmp.ne.s32.totalorder %s86, %s89
      %p98 = scmp.eq.s32.totalorder %s17, 3
      %p99 = por %p97, %p98
      %p100 = scmp.ne.s32.totalorder %s89, %s90
      %p101 = scmp.eq.s32.totalorder %s17, 0
      %p102 = por %p100, %p101
      %p103 = scmp.ne.s32.totalorder %s89, %s90
      %p104 = scmp.eq.s32.totalorder %s18, 3
      %p105 = por %p103, %p104
      %p107 = scmp.ne.s32.totalorder %s90, %s106
      %p108 = scmp.eq.s32.totalorder %s18, 0
      %p109 = por %p107, %p108
      %s110 = ssub.s32 %s20, %s27
      %s111 = ssub.s32 %s19, %s31
      %s112 = sor.u32 %s110, %s111
      %p113 = scmp.eq.s32.totalorder %s112, 0
      %s115 = sadd.s32 %s114, 1
      %s116 = scalar_select %p113, %s114, %s115
      %p119 = pneg %p113
      %p120 = scmp.eq.s32.totalorder %s12, 3
      %p121 = por %p119, %p120
      %p122 = scmp.ne.s32.totalorder %s114, %s117
      %p123 = scmp.eq.s32.totalorder %s12, 0
      %p124 = por %p122, %p123
      %p125 = scmp.ne.s32.totalorder %s114, %s117
      %p126 = scmp.eq.s32.totalorder %s17, 3
      %p127 = por %p125, %p126
      %p128 = scmp.ne.s32.totalorder %s117, %s118
      %p129 = scmp.eq.s32.totalorder %s17, 0
      %p130 = por %p128, %p129
      %p131 = scmp.ne.s32.totalorder %s117, %s118
      %p132 = scmp.eq.s32.totalorder %s18, 3
      %p133 = por %p131, %p132
      %p135 = scmp.ne.s32.totalorder %s118, %s134
      %p136 = scmp.eq.s32.totalorder %s18, 0
      %p137 = por %p135, %p136
      %p138 = scmp.le.s32.totalorder 1, %s12
      %p139 = scmp.lt.s32.totalorder %s12, 5
      %p140 = pnand %p138, %p139
      %p141 = pneg %p140
      // Predicated region
      $region9: #{_fnn_lm_forward.3} parent=5 // pred_check
        _
      $region10: #{_fnn_lm_forward.3} parent=5 // pred_check_branch
        %143 = sbr.rel (%p140) target = $region12
      $region11: #{_fnn_lm_forward.3} parent=5 // pred_region
        %s144 = ssub.s32 %s12, 1
      $region12: #{_fnn_lm_forward.3} parent=5 // pred_fallthru
        _
      %p145 = scmp.lt.s32.totalorder %s12, 4
      // Predicated region
      $region13: #{_fnn_lm_forward.3} parent=5 // pred_check
        %p146 = pneg %p145
      $region14: #{_fnn_lm_forward.3} parent=5 // pred_check_branch
        %148 = sbr.rel (%p146) target = $region16
      $region15: #{_fnn_lm_forward.3} parent=5 // pred_region
        // Predicated region
        $region17: #{_fnn_lm_forward.3} parent=15 // pred_check
          %p149 = pneg %p44
        $region18: #{_fnn_lm_forward.3} parent=15 // pred_check_branch
          %151 = sbr.rel (%p149) target = $region20
        $region19: #{_fnn_lm_forward.3} parent=15 // pred_region
          %p152 = scmp.lt.s32.totalorder %s20, 1
          %s153 = scalar_select %p152, %s20, 1
          %s154 = smul.addr %s153, 4
          %s155 = scalar_lea.vmem %s0, %s154
        $region20: #{_fnn_lm_forward.3} parent=15 // pred_fallthru
          _
        // Predicated region
        $region21: #{_fnn_lm_forward.3} parent=15 // pred_check
          %p156 = pneg %p70
        $region22: #{_fnn_lm_forward.3} parent=15 // pred_check_branch
          %158 = sbr.rel (%p156) target = $region24
        $region23: #{_fnn_lm_forward.3} parent=15 // pred_region
          %s159 = sand.u32 %s60, 1
          %s160 = sand.u32 %s60, 1
          %s161 = smul.addr %s160, 128
          %s162 = scalar_lea.vmem [#allocation2], %s161
          %s163 = smul.u32 2, %s19
          %s164 = smul.addr %s163, 4
          %s165 = scalar_lea.vmem %s1, %s164
          // Predicated region
          $region25: #{_fnn_lm_forward.3} parent=23 // pred_check
            _
          $region26: #{_fnn_lm_forward.3} parent=23 // pred_check_branch
            %167 = sbr.rel (0) target = $region28
          $region27: #{_fnn_lm_forward.3} parent=23 // pred_region
            // Predicated region
            $region29: #{_fnn_lm_forward.3} parent=27 // pred_check
              _
            $region30: #{_fnn_lm_forward.3} parent=27 // pred_check_branch
              %169 = sbr.rel (0) target = $region32
            $region31: #{_fnn_lm_forward.3} parent=27 // pred_region
              // Predicated region
              $region44: #{_fnn_lm_forward.3} parent=31 // pred_check
                _
              $region45: #{_fnn_lm_forward.3} parent=31 // pred_check_branch
                %214 = sbr.rel (0) target = $region47
              $region46: #{_fnn_lm_forward.3} parent=31 // pred_region
                loop: start=0, step=1, limit=1
                $region48: #{_fnn_lm_forward.3} parent=46 // loop_pre_header
                  _
                $region49: #{_fnn_lm_forward.3} parent=46 // loop_header
                  %s216 = sphi 0, %s220
                  %p217 = scmp.ge.s32.totalorder %s216, 1
                  %s221 = sphi %s165, %s165
                  %s222 = sphi %s162, %s162
                $region50: #{_fnn_lm_forward.3} parent=46 // loop_header_branch
                  %219 = sbr.rel (%p217) target = $region54
                $region51: #{_fnn_lm_forward.3} parent=46 // loop_body
                  %v223 = vld [vmem:[%s221] sm:$0xff]
                  %224 = vst [vmem:[%s222] sm:$0xff] %v223
                  %v225 = vld [vmem:[%s221 + $0x10] sm:$0xff]
                  %226 = vst [vmem:[%s222 + $0x8] sm:$0xff] %v225
                  %v227 = vld [vmem:[%s221 + $0x20] sm:$0xff]
                  %228 = vst [vmem:[%s222 + $0x10] sm:$0xff] %v227
                  %v229 = vld [vmem:[%s221 + $0x30] sm:$0xff]
                  %230 = vst [vmem:[%s222 + $0x18] sm:$0xff] %v229
                  %v231 = vld [vmem:[%s221 + $0x40] sm:$0xff]
                  %232 = vst [vmem:[%s222 + $0x20] sm:$0xff] %v231
                  %v233 = vld [vmem:[%s221 + $0x50] sm:$0xff]
                  %234 = vst [vmem:[%s222 + $0x28] sm:$0xff] %v233
                  %v235 = vld [vmem:[%s221 + $0x60] sm:$0xff]
                  %236 = vst [vmem:[%s222 + $0x30] sm:$0xff] %v235
                  %v237 = vld [vmem:[%s221 + $0x70] sm:$0xff]
                  %238 = vst [vmem:[%s222 + $0x38] sm:$0xff] %v237
                  %v239 = vld [vmem:[%s221 + $0x80] sm:$0xff]
                  %240 = vst [vmem:[%s222 + $0x40] sm:$0xff] %v239
                  %v241 = vld [vmem:[%s221 + $0x90] sm:$0xff]
                  %242 = vst [vmem:[%s222 + $0x48] sm:$0xff] %v241
                  %v243 = vld [vmem:[%s221 + $0xa0] sm:$0xff]
                  %244 = vst [vmem:[%s222 + $0x50] sm:$0xff] %v243
                  %v245 = vld [vmem:[%s221 + $0xb0] sm:$0xff]
                  %246 = vst [vmem:[%s222 + $0x58] sm:$0xff] %v245
                  %v247 = vld [vmem:[%s221 + $0xc0] sm:$0xff]
                  %248 = vst [vmem:[%s222 + $0x60] sm:$0xff] %v247
                  %v249 = vld [vmem:[%s221 + $0xd0] sm:$0xff]
                  %250 = vst [vmem:[%s222 + $0x68] sm:$0xff] %v249
                  %v251 = vld [vmem:[%s221 + $0xe0] sm:$0xff]
                  %252 = vst [vmem:[%s222 + $0x70] sm:$0xff] %v251
                  %v253 = vld [vmem:[%s221 + $0xf0] sm:$0xff]
                  %254 = vst [vmem:[%s222 + $0x78] sm:$0xff] %v253
                $region52: #{_fnn_lm_forward.3} parent=46 // loop_footer
                  %s220 = sadd.s32 1, %s216
                $region53: #{_fnn_lm_forward.3} parent=46 // loop_footer_branch
                  %215 = sbr.rel target = $region49
                $region54: #{_fnn_lm_forward.3} parent=46 // loop_exit
                  _
              $region47: #{_fnn_lm_forward.3} parent=31 // pred_fallthru
                _
              // Predicated region
              $region55: #{_fnn_lm_forward.3} parent=31 // pred_check
                _
              $region56: #{_fnn_lm_forward.3} parent=31 // pred_check_branch
                %256 = sbr.rel target = $region58
              $region57: #{_fnn_lm_forward.3} parent=31 // pred_region
                _
              $region58: #{_fnn_lm_forward.3} parent=31 // pred_fallthru
                _
            $region32: #{_fnn_lm_forward.3} parent=27 // pred_fallthru
              _
            // Predicated region
            $region33: #{_fnn_lm_forward.3} parent=27 // pred_check
              _
            $region34: #{_fnn_lm_forward.3} parent=27 // pred_check_branch
              %171 = sbr.rel target = $region36
            $region35: #{_fnn_lm_forward.3} parent=27 // pred_region
              loop: start=0, step=1, limit=1
              $region37: #{_fnn_lm_forward.3} parent=35 // loop_pre_header
                _
              $region38: #{_fnn_lm_forward.3} parent=35 // loop_header
                %s174 = sphi 0, %s178
                %p175 = scmp.ge.s32.totalorder %s174, 1
                %s179 = sphi %s165, %s165
                %s180 = sphi %s162, %s162
              $region39: #{_fnn_lm_forward.3} parent=35 // loop_header_branch
                %177 = sbr.rel (%p175) target = $region43
              $region40: #{_fnn_lm_forward.3} parent=35 // loop_body
                %v181 = vld [vmem:[%s179] sm:$0xff]
                %182 = vst [vmem:[%s180] sm:$0xff] %v181
                %v183 = vld [vmem:[%s179 + $0x10] sm:$0xff]
                %184 = vst [vmem:[%s180 + $0x8] sm:$0xff] %v183
                %v185 = vld [vmem:[%s179 + $0x20] sm:$0xff]
                %186 = vst [vmem:[%s180 + $0x10] sm:$0xff] %v185
                %v187 = vld [vmem:[%s179 + $0x30] sm:$0xff]
                %188 = vst [vmem:[%s180 + $0x18] sm:$0xff] %v187
                %v189 = vld [vmem:[%s179 + $0x40] sm:$0xff]
                %190 = vst [vmem:[%s180 + $0x20] sm:$0xff] %v189
                %v191 = vld [vmem:[%s179 + $0x50] sm:$0xff]
                %192 = vst [vmem:[%s180 + $0x28] sm:$0xff] %v191
                %v193 = vld [vmem:[%s179 + $0x60] sm:$0xff]
                %194 = vst [vmem:[%s180 + $0x30] sm:$0xff] %v193
                %v195 = vld [vmem:[%s179 + $0x70] sm:$0xff]
                %196 = vst [vmem:[%s180 + $0x38] sm:$0xff] %v195
                %v197 = vld [vmem:[%s179 + $0x80] sm:$0xff]
                %198 = vst [vmem:[%s180 + $0x40] sm:$0xff] %v197
                %v199 = vld [vmem:[%s179 + $0x90] sm:$0xff]
                %200 = vst [vmem:[%s180 + $0x48] sm:$0xff] %v199
                %v201 = vld [vmem:[%s179 + $0xa0] sm:$0xff]
                %202 = vst [vmem:[%s180 + $0x50] sm:$0xff] %v201
                %v203 = vld [vmem:[%s179 + $0xb0] sm:$0xff]
                %204 = vst [vmem:[%s180 + $0x58] sm:$0xff] %v203
                %v205 = vld [vmem:[%s179 + $0xc0] sm:$0xff]
                %206 = vst [vmem:[%s180 + $0x60] sm:$0xff] %v205
                %v207 = vld [vmem:[%s179 + $0xd0] sm:$0xff]
                %208 = vst [vmem:[%s180 + $0x68] sm:$0xff] %v207
                %v209 = vld [vmem:[%s179 + $0xe0] sm:$0xff]
                %210 = vst [vmem:[%s180 + $0x70] sm:$0xff] %v209
                %v211 = vld [vmem:[%s179 + $0xf0] sm:$0xff]
                %212 = vst [vmem:[%s180 + $0x78] sm:$0xff] %v211
              $region41: #{_fnn_lm_forward.3} parent=35 // loop_footer
                %s178 = sadd.s32 1, %s174
              $region42: #{_fnn_lm_forward.3} parent=35 // loop_footer_branch
                %173 = sbr.rel target = $region38
              $region43: #{_fnn_lm_forward.3} parent=35 // loop_exit
                _
            $region36: #{_fnn_lm_forward.3} parent=27 // pred_fallthru
              _
          $region28: #{_fnn_lm_forward.3} parent=23 // pred_fallthru
            _
          %257 = vnop
        $region24: #{_fnn_lm_forward.3} parent=15 // pred_fallthru
          _
        // Predicated region
        $region59: #{_fnn_lm_forward.3} parent=15 // pred_check
          %p258 = pneg %p96
        $region60: #{_fnn_lm_forward.3} parent=15 // pred_check_branch
          %260 = sbr.rel (%p258) target = $region62
        $region61: #{_fnn_lm_forward.3} parent=15 // pred_region
          %s261 = smul.u32 2, %s19
          %p262 = scmp.lt.s32.totalorder %s261, 3
          %s263 = scalar_select %p262, %s261, 3
          %s264 = scalar_lea.vmem %s2, %s263
          %s265 = smul.u32 2, %s19
        $region62: #{_fnn_lm_forward.3} parent=15 // pred_fallthru
          _
      $region16: #{_fnn_lm_forward.3} parent=5 // pred_fallthru
        _
      %p266 = scmp.le.s32.totalorder 1, %s12
      %p267 = scmp.lt.s32.totalorder %s12, 5
      %p268 = pnand %p266, %p267
      %p269 = pneg %p268
      // Predicated region
      $region63: #{_fnn_lm_forward.3} parent=5 // pred_check
        _
      $region64: #{_fnn_lm_forward.3} parent=5 // pred_check_branch
        %271 = sbr.rel (%p268) target = $region66
      $region65: #{_fnn_lm_forward.3} parent=5 // pred_region
        %s272 = ssub.s32 %s12, 1
        %s273 = sand.u32 %s63, 1
        %s274 = sand.u32 %s63, 1
        %s275 = smul.addr %s274, 128
        %s276 = scalar_lea.vmem [#allocation2], %s275
        // Predicated region
        $region67: #{_fnn_lm_forward.3} parent=65 // pred_check
          %p277 = pneg %p76
        $region68: #{_fnn_lm_forward.3} parent=65 // pred_check_branch
          %279 = sbr.rel (%p277) target = $region70
        $region69: #{_fnn_lm_forward.3} parent=65 // pred_region
          _
        $region70: #{_fnn_lm_forward.3} parent=65 // pred_fallthru
          _
        %p280 = scmp.lt.s32.totalorder %s22, 1
        %s281 = scalar_select %p280, %s22, 1
        %s282 = smul.addr %s281, 4
        %s283 = scalar_lea.vmem %s0, %s282
        %p284 = pneg %p50
        %p285 = pneg %p47
        %s286 = sand.u32 %s63, 1
        %s287 = sand.u32 %s63, 1
        %s288 = smul.addr %s287, 128
        %s289 = scalar_lea.vmem [#allocation2], %s288
        %p290 = pneg %p76
        %p291 = pneg %p73
        %s292 = smul.u32 2, %s21
        %p293 = scmp.lt.s32.totalorder %s292, 3
        %s294 = scalar_select %p293, %s292, 3
        %s295 = scalar_lea.vmem %s2, %s294
        %p296 = pneg %p102
        %p297 = pneg %p99
        %p298 = pneg %p130
        %p299 = pneg %p127
        %s300 = sand.u32 %s117, 1
        %s301 = scalar_lea.sflag [#allocation4], %s300
        %s302 = sand.u32 %s117, 1
        %s303 = smul.addr %s302, 8
        %s304 = scalar_lea.vmem [#allocation3], %s303
        %p305 = scmp.lt.s32.totalorder %s22, 1
        %s306 = scalar_select %p305, %s22, 1
        %s307 = smul.addr %s306, 4
        %s308 = scalar_lea.vmem %s0, %s307
        %s309 = smul.u32 2, %s21
        %s310 = smul.u32 2, %s21
        %p311 = scmp.lt.s32.totalorder %s310, 3
        %s312 = scalar_select %p311, %s310, 3
        %s313 = scalar_lea.vmem %s2, %s312
        %s314 = smul.u32 2, %s21
        %s315 = smul.u32 2, %s21
        %v317 = vld [vmem:[%s308] sm:$0xf]
        %v318 = vld [vmem:[%s276] sm:$0xff]
        %v319 = vld [vmem:[%s276 + $0x8] sm:$0xff]
        %v320 = vld [vmem:[%s276 + $0x10] sm:$0xff]
        %v321 = vld [vmem:[%s276 + $0x18] sm:$0xff]
        %v322 = vld [vmem:[%s276 + $0x20] sm:$0xff]
        %v323 = vld [vmem:[%s276 + $0x28] sm:$0xff]
        %v324 = vld [vmem:[%s276 + $0x30] sm:$0xff]
        %v325 = vld [vmem:[%s276 + $0x38] sm:$0xff]
        %v326 = vld [vmem:[%s276 + $0x40] sm:$0xff]
        %v327 = vld [vmem:[%s276 + $0x48] sm:$0xff]
        %v328 = vld [vmem:[%s276 + $0x50] sm:$0xff]
        %v329 = vld [vmem:[%s276 + $0x58] sm:$0xff]
        %v330 = vld [vmem:[%s276 + $0x60] sm:$0xff]
        %v331 = vld [vmem:[%s276 + $0x68] sm:$0xff]
        %v332 = vld [vmem:[%s276 + $0x70] sm:$0xff]
        %v333 = vld [vmem:[%s276 + $0x78] sm:$0xff]
        %v334 = vld [vmem:[%s313] sm:$0x3]
        %v336 = vlaneseq
        %v337 = vshrl.u32 %v336, 7
        %v338 = vsub.s32 0, %v337
        %v339 = vrot.slane %v334, %v338
        %v340 = vlaneseq
        %v341 = vshrl.u32 %v340, 7
        %v342 = vsub.s32 1, %v341
        %v343 = vrot.slane %v334, %v342
        %v362 = vunpack.c.l.b16 %v318
        %v363 = vunpack.c.h.b16 %v318
        %v364 = vunpack.c.l.b16 %v319
        %v365 = vunpack.c.h.b16 %v319
        %v366 = vunpack.c.l.b16 %v320
        %v367 = vunpack.c.h.b16 %v320
        %v368 = vunpack.c.l.b16 %v321
        %v369 = vunpack.c.h.b16 %v321
        %v370 = vunpack.c.l.b16 %v322
        %v371 = vunpack.c.h.b16 %v322
        %v372 = vunpack.c.l.b16 %v323
        %v373 = vunpack.c.h.b16 %v323
        %v374 = vunpack.c.l.b16 %v324
        %v375 = vunpack.c.h.b16 %v324
        %v376 = vunpack.c.l.b16 %v325
        %v377 = vunpack.c.h.b16 %v325
        %v378 = vunpack.c.l.b16 %v326
        %v379 = vunpack.c.h.b16 %v326
        %v380 = vunpack.c.l.b16 %v327
        %v381 = vunpack.c.h.b16 %v327
        %v382 = vunpack.c.l.b16 %v328
        %v383 = vunpack.c.h.b16 %v328
        %v384 = vunpack.c.l.b16 %v329
        %v385 = vunpack.c.h.b16 %v329
        %v386 = vunpack.c.l.b16 %v330
        %v387 = vunpack.c.h.b16 %v330
        %v388 = vunpack.c.l.b16 %v331
        %v389 = vunpack.c.h.b16 %v331
        %v390 = vunpack.c.l.b16 %v332
        %v391 = vunpack.c.h.b16 %v332
        %v392 = vunpack.c.l.b16 %v333
        %v393 = vunpack.c.h.b16 %v333
        %v394 = vpack.c.b16 %v364, %v362
        %v395 = vpack.c.b16 %v365, %v363
        %v396 = vpack.c.b16 %v368, %v366
        %v397 = vpack.c.b16 %v369, %v367
        %v398 = vpack.c.b16 %v372, %v370
        %v399 = vpack.c.b16 %v373, %v371
        %v400 = vpack.c.b16 %v376, %v374
        %v401 = vpack.c.b16 %v377, %v375
        %v402 = vpack.c.b16 %v380, %v378
        %v403 = vpack.c.b16 %v381, %v379
        %v404 = vpack.c.b16 %v384, %v382
        %v405 = vpack.c.b16 %v385, %v383
        %v406 = vpack.c.b16 %v388, %v386
        %v407 = vpack.c.b16 %v389, %v387
        %v408 = vpack.c.b16 %v392, %v390
        %v409 = vpack.c.b16 %v393, %v391
        %426 = vmatprep.subr.bf16.mxu0 %v395
        %427 = vmatpush1.bf16.msra.mxu0 %v394
        %428 = vmatprep.subr.bf16.mxu0 %v397
        %429 = vmatpush1.bf16.msra.mxu0 %v396
        %430 = vmatprep.subr.bf16.mxu0 %v399
        %431 = vmatpush1.bf16.msra.mxu0 %v398
        %432 = vmatprep.subr.bf16.mxu0 %v401
        %433 = vmatpush1.bf16.msra.mxu0 %v400
        %434 = vmatprep.subr.bf16.mxu0 %v403
        %435 = vmatpush1.bf16.msra.mxu0 %v402
        %436 = vmatprep.subr.bf16.mxu0 %v405
        %437 = vmatpush1.bf16.msra.mxu0 %v404
        %438 = vmatprep.subr.bf16.mxu0 %v407
        %439 = vmatpush1.bf16.msra.mxu0 %v406
        %440 = vmatprep.subr.bf16.mxu0 %v409
        %441 = vmatpush1.bf16.msra.mxu0 %v408
        %442 = vmatprep.subr.bf16.mxu0 0
        %443 = vmatpush1.bf16.msra.mxu0 0
        %444 = vmatprep.subr.bf16.mxu0 0
        %445 = vmatpush1.bf16.msra.mxu0 0
        %446 = vmatprep.subr.bf16.mxu0 0
        %447 = vmatpush1.bf16.msra.mxu0 0
        %448 = vmatprep.subr.bf16.mxu0 0
        %449 = vmatpush1.bf16.msra.mxu0 0
        %450 = vmatprep.subr.bf16.mxu0 0
        %451 = vmatpush1.bf16.msra.mxu0 0
        %452 = vmatprep.subr.bf16.mxu0 0
        %453 = vmatpush1.bf16.msra.mxu0 0
        %454 = vmatprep.subr.bf16.mxu0 0
        %455 = vmatpush1.bf16.msra.mxu0 0
        %456 = vmatprep.subr.bf16.mxu0 0
        %457 = vmatpush1.bf16.msra.mxu0 0
        %458 = vmatprep.mubr.bf16.mxu0 0
        %459 = vmatmul.mubr.bf16.gmra.mrb[0].mxu0 %v317
        %v460 = vpop.f32.mrb[0].mxu0
        %v461 = vadd.f32 %v339, %v460
        %v462 = vpop.f32.mrb[0].mxu0
        %v463 = vadd.f32 %v343, %v462
        %v464 = vpop.f32.mrb[0].mxu0
        %v465 = vpop.f32.mrb[0].mxu0
        %466 = vdwg.mxu0
        %v467 = vpack.c.bf16 %v461, %v461
        %v468 = vpack.c.bf16 %v463, %v463
        %v471 = vunpack.c.l.b16 %v467
        %v472 = vunpack.c.l.b16 %v468
        %v473 = vpack.c.b16 %v472, %v471
        %475 = vst [vmem:[%s304] sm:$0xff] %v473
        %s476 = sand.u32 %s117, 1
        %s477 = scalar_lea.sflag [#allocation4], %s476
        %s478 = sand.u32 %s117, 1
        %s479 = smul.addr %s478, 8
        %s480 = scalar_lea.vmem [#allocation3], %s479
        // Predicated region
        $region71: #{_fnn_lm_forward.3} parent=65 // pred_check
          %p481 = pneg %p127
        $region72: #{_fnn_lm_forward.3} parent=65 // pred_check_branch
          %483 = sbr.rel (%p481) target = $region74
        $region73: #{_fnn_lm_forward.3} parent=65 // pred_region
          %s484 = smul.u32 2, %s21
          %s486 = ssub.s32 128, 128
          %487 = vsyncadd %s477, %s486
          %s488 = smul.addr %s22, 4
          %s489 = sadd.s32 %s484, %s488
          %s490 = smul.addr %s489, 64
          %s491 = scalar_lea.hbm %s3, %s490
          %s493 = sshll.u32 %s480, 4
          %s494 = int_to_ptr.vmem [resolvable:$true] %s493
          %496 = dma.vmem_to_hbm [thread:$0]  %s494, 128, %s491, %s477
        $region74: #{_fnn_lm_forward.3} parent=65 // pred_fallthru
          _
      $region66: #{_fnn_lm_forward.3} parent=5 // pred_fallthru
        _
      %p497 = scmp.le.s32.totalorder 2, %s12
      // Predicated region
      $region75: #{_fnn_lm_forward.3} parent=5 // pred_check
        %p498 = pneg %p497
      $region76: #{_fnn_lm_forward.3} parent=5 // pred_check_branch
        %500 = sbr.rel (%p498) target = $region78
      $region77: #{_fnn_lm_forward.3} parent=5 // pred_region
        %s501 = ssub.s32 %s12, 2
        // Predicated region
        $region79: #{_fnn_lm_forward.3} parent=77 // pred_check
          %p502 = pneg %p133
        $region80: #{_fnn_lm_forward.3} parent=77 // pred_check_branch
          %504 = sbr.rel (%p502) target = $region82
        $region81: #{_fnn_lm_forward.3} parent=77 // pred_region
          %s505 = sand.u32 %s118, 1
          %s506 = scalar_lea.sflag [#allocation4], %s505
          %s507 = sand.u32 %s118, 1
          %s508 = smul.addr %s507, 8
          %s509 = scalar_lea.vmem [#allocation3], %s508
          %510 = dma.done %s506, 128
        $region82: #{_fnn_lm_forward.3} parent=77 // pred_fallthru
          _
      $region78: #{_fnn_lm_forward.3} parent=5 // pred_fallthru
        _
    $region6: #{_fnn_lm_forward.3} parent=1 // loop_footer
      %s16 = sadd.s32 1, %s12
    $region7: #{_fnn_lm_forward.3} parent=1 // loop_footer_branch
      %11 = sbr.rel target = $region3
    $region8: #{_fnn_lm_forward.3} parent=1 // loop_exit
      _
    %511 = vsyncpa [#allocation4], 1
    %s512 = scalar_lea.sflag [#allocation4], 1
    %513 = vsyncpa %s512, 1

// kernel: _fnn_lm_forward.2
$region0: #{_fnn_lm_forward.2}
  #allocation0 [shape = 'u32[]', space=smem, size = 0x4, offset = 0x4, fixed_abs, tag = 'smem constant byte address 0x4 - core index']
  #allocation1 [shape = 'u32[144,128]{1,0:T(1,128)}', space=vmem, size = 0x12000, scoped, tag = 'internal scratch']
  %s0 = inlined_call_operand.vmem [shape: bf16[16,128], index: 0, kind: input, shape index: {}]
  %s1 = inlined_call_operand.vmem [shape: bf16[128,128], index: 1, kind: input, shape index: {}]
  %s2 = inlined_call_operand.vmem [shape: f32[1,128], index: 2, kind: input, shape index: {}]
  %s3 = inlined_call_operand.vmem [shape: bf16[128,512], index: 3, kind: input, shape index: {}]
  %s4 = inlined_call_operand.vmem [shape: f32[1,512], index: 4, kind: input, shape index: {}]
  %s5 = inlined_call_operand.vmem [shape: bf16[512,128], index: 5, kind: input, shape index: {}]
  %s6 = inlined_call_operand.vmem [shape: f32[1,128], index: 6, kind: input, shape index: {}]
  %s7 = inlined_call_operand.vmem [shape: bf16[16,128], index: 7, kind: output, shape index: {}]
  %s8 = sld [smem:[#allocation0]]
  $region61: #{_fnn_lm_forward.2} parent=0
    _
  %s10 = ssub.s32 1, %s8
  %s11 = scalar_select 0, %s10, %s8
  loop: start=0, step=1, limit=4
  $region2: #{_fnn_lm_forward.2} parent=0 // loop_pre_header
    _
  $region3: #{_fnn_lm_forward.2} parent=0 // loop_header
    %s13 = sphi 0, %s17
    %p14 = scmp.ge.s32.totalorder %s13, 4
    %s23 = sphi 0, %s25
    %s26 = sphi 0, %s23
    %s27 = sphi 0, %s26
    %s43 = sphi 0, %s27
    %s47 = sphi 0, %s47
    %s49 = sphi 0, %s47
    %s50 = sphi 0, %s49
    %s64 = sphi 0, %s50
    %s68 = sphi 0, %s68
    %s70 = sphi 0, %s68
    %s71 = sphi 0, %s70
    %s85 = sphi 0, %s71
    %s89 = sphi 0, %s89
    %s91 = sphi 0, %s89
    %s92 = sphi 0, %s91
    %s106 = sphi 0, %s92
    %s110 = sphi 0, %s110
    %s112 = sphi 0, %s110
    %s113 = sphi 0, %s112
    %s127 = sphi 0, %s113
    %s131 = sphi 0, %s131
    %s133 = sphi 0, %s131
    %s134 = sphi 0, %s133
    %s148 = sphi 0, %s134
    %s152 = sphi 0, %s152
    %s154 = sphi 0, %s152
    %s155 = sphi 0, %s154
    %s169 = sphi 0, %s155
    %s175 = sphi 0, %s177
    %s178 = sphi 0, %s175
    %s179 = sphi 0, %s178
    %s195 = sphi 0, %s179
  $region4: #{_fnn_lm_forward.2} parent=0 // loop_header_branch
    %16 = sbr.rel (%p14) target = $region8
  $region5: #{_fnn_lm_forward.2} parent=0 // loop_body
    %s18 = ssub.s32 %s13, 1
    %s19 = ssub.s32 %s13, 2
    %s20 = sadd.s32 %s13, 1
    %s21 = ssub.s32 %s13, %s20
    %p22 = scmp.eq.s32.totalorder %s21, 0
    %s24 = sadd.s32 %s23, 1
    %s25 = scalar_select %p22, %s23, %s24
    %p28 = pneg %p22
    %p29 = scmp.eq.s32.totalorder %s13, 1
    %p30 = por %p28, %p29
    %p31 = scmp.ne.s32.totalorder %s23, %s26
    %p32 = scmp.eq.s32.totalorder %s13, 0
    %p33 = por %p31, %p32
    %p34 = scmp.ne.s32.totalorder %s23, %s26
    %p35 = scmp.eq.s32.totalorder %s18, 1
    %p36 = por %p34, %p35
    %p37 = scmp.ne.s32.totalorder %s26, %s27
    %p38 = scmp.eq.s32.totalorder %s18, 0
    %p39 = por %p37, %p38
    %p40 = scmp.ne.s32.totalorder %s26, %s27
    %p41 = scmp.eq.s32.totalorder %s19, 1
    %p42 = por %p40, %p41
    %p44 = scmp.ne.s32.totalorder %s27, %s43
    %p45 = scmp.eq.s32.totalorder %s19, 0
    %p46 = por %p44, %p45
    %s48 = sadd.s32 %s47, 1
    %p51 = scmp.eq.s32.totalorder %s13, 1
    %p52 = scmp.ne.s32.totalorder %s47, %s49
    %p53 = scmp.eq.s32.totalorder %s13, 0
    %p54 = por %p52, %p53
    %p55 = scmp.ne.s32.totalorder %s47, %s49
    %p56 = scmp.eq.s32.totalorder %s18, 1
    %p57 = por %p55, %p56
    %p58 = scmp.ne.s32.totalorder %s49, %s50
    %p59 = scmp.eq.s32.totalorder %s18, 0
    %p60 = por %p58, %p59
    %p61 = scmp.ne.s32.totalorder %s49, %s50
    %p62 = scmp.eq.s32.totalorder %s19, 1
    %p63 = por %p61, %p62
    %p65 = scmp.ne.s32.totalorder %s50, %s64
    %p66 = scmp.eq.s32.totalorder %s19, 0
    %p67 = por %p65, %p66
    %s69 = sadd.s32 %s68, 1
    %p72 = scmp.eq.s32.totalorder %s13, 1
    %p73 = scmp.ne.s32.totalorder %s68, %s70
    %p74 = scmp.eq.s32.totalorder %s13, 0
    %p75 = por %p73, %p74
    %p76 = scmp.ne.s32.totalorder %s68, %s70
    %p77 = scmp.eq.s32.totalorder %s18, 1
    %p78 = por %p76, %p77
    %p79 = scmp.ne.s32.totalorder %s70, %s71
    %p80 = scmp.eq.s32.totalorder %s18, 0
    %p81 = por %p79, %p80
    %p82 = scmp.ne.s32.totalorder %s70, %s71
    %p83 = scmp.eq.s32.totalorder %s19, 1
    %p84 = por %p82, %p83
    %p86 = scmp.ne.s32.totalorder %s71, %s85
    %p87 = scmp.eq.s32.totalorder %s19, 0
    %p88 = por %p86, %p87
    %s90 = sadd.s32 %s89, 1
    %p93 = scmp.eq.s32.totalorder %s13, 1
    %p94 = scmp.ne.s32.totalorder %s89, %s91
    %p95 = scmp.eq.s32.totalorder %s13, 0
    %p96 = por %p94, %p95
    %p97 = scmp.ne.s32.totalorder %s89, %s91
    %p98 = scmp.eq.s32.totalorder %s18, 1
    %p99 = por %p97, %p98
    %p100 = scmp.ne.s32.totalorder %s91, %s92
    %p101 = scmp.eq.s32.totalorder %s18, 0
    %p102 = por %p100, %p101
    %p103 = scmp.ne.s32.totalorder %s91, %s92
    %p104 = scmp.eq.s32.totalorder %s19, 1
    %p105 = por %p103, %p104
    %p107 = scmp.ne.s32.totalorder %s92, %s106
    %p108 = scmp.eq.s32.totalorder %s19, 0
    %p109 = por %p107, %p108
    %s111 = sadd.s32 %s110, 1
    %p114 = scmp.eq.s32.totalorder %s13, 1
    %p115 = scmp.ne.s32.totalorder %s110, %s112
    %p116 = scmp.eq.s32.totalorder %s13, 0
    %p117 = por %p115, %p116
    %p118 = scmp.ne.s32.totalorder %s110, %s112
    %p119 = scmp.eq.s32.totalorder %s18, 1
    %p120 = por %p118, %p119
    %p121 = scmp.ne.s32.totalorder %s112, %s113
    %p122 = scmp.eq.s32.totalorder %s18, 0
    %p123 = por %p121, %p122
    %p124 = scmp.ne.s32.totalorder %s112, %s113
    %p125 = scmp.eq.s32.totalorder %s19, 1
    %p126 = por %p124, %p125
    %p128 = scmp.ne.s32.totalorder %s113, %s127
    %p129 = scmp.eq.s32.totalorder %s19, 0
    %p130 = por %p128, %p129
    %s132 = sadd.s32 %s131, 1
    %p135 = scmp.eq.s32.totalorder %s13, 1
    %p136 = scmp.ne.s32.totalorder %s131, %s133
    %p137 = scmp.eq.s32.totalorder %s13, 0
    %p138 = por %p136, %p137
    %p139 = scmp.ne.s32.totalorder %s131, %s133
    %p140 = scmp.eq.s32.totalorder %s18, 1
    %p141 = por %p139, %p140
    %p142 = scmp.ne.s32.totalorder %s133, %s134
    %p143 = scmp.eq.s32.totalorder %s18, 0
    %p144 = por %p142, %p143
    %p145 = scmp.ne.s32.totalorder %s133, %s134
    %p146 = scmp.eq.s32.totalorder %s19, 1
    %p147 = por %p145, %p146
    %p149 = scmp.ne.s32.totalorder %s134, %s148
    %p150 = scmp.eq.s32.totalorder %s19, 0
    %p151 = por %p149, %p150
    %s153 = sadd.s32 %s152, 1
    %p156 = scmp.eq.s32.totalorder %s13, 1
    %p157 = scmp.ne.s32.totalorder %s152, %s154
    %p158 = scmp.eq.s32.totalorder %s13, 0
    %p159 = por %p157, %p158
    %p160 = scmp.ne.s32.totalorder %s152, %s154
    %p161 = scmp.eq.s32.totalorder %s18, 1
    %p162 = por %p160, %p161
    %p163 = scmp.ne.s32.totalorder %s154, %s155
    %p164 = scmp.eq.s32.totalorder %s18, 0
    %p165 = por %p163, %p164
    %p166 = scmp.ne.s32.totalorder %s154, %s155
    %p167 = scmp.eq.s32.totalorder %s19, 1
    %p168 = por %p166, %p167
    %p170 = scmp.ne.s32.totalorder %s155, %s169
    %p171 = scmp.eq.s32.totalorder %s19, 0
    %p172 = por %p170, %p171
    %s173 = ssub.s32 %s13, %s20
    %p174 = scmp.eq.s32.totalorder %s173, 0
    %s176 = sadd.s32 %s175, 1
    %s177 = scalar_select %p174, %s175, %s176
    %p180 = pneg %p174
    %p181 = scmp.eq.s32.totalorder %s13, 1
    %p182 = por %p180, %p181
    %p183 = scmp.ne.s32.totalorder %s175, %s178
    %p184 = scmp.eq.s32.totalorder %s13, 0
    %p185 = por %p183, %p184
    %p186 = scmp.ne.s32.totalorder %s175, %s178
    %p187 = scmp.eq.s32.totalorder %s18, 1
    %p188 = por %p186, %p187
    %p189 = scmp.ne.s32.totalorder %s178, %s179
    %p190 = scmp.eq.s32.totalorder %s18, 0
    %p191 = por %p189, %p190
    %p192 = scmp.ne.s32.totalorder %s178, %s179
    %p193 = scmp.eq.s32.totalorder %s19, 1
    %p194 = por %p192, %p193
    %p196 = scmp.ne.s32.totalorder %s179, %s195
    %p197 = scmp.eq.s32.totalorder %s19, 0
    %p198 = por %p196, %p197
    %p199 = scmp.le.s32.totalorder 1, %s13
    %p200 = scmp.lt.s32.totalorder %s13, 3
    %p201 = pnand %p199, %p200
    %p202 = pneg %p201
    // Predicated region
    $region9: #{_fnn_lm_forward.2} parent=5 // pred_check
      _
    $region10: #{_fnn_lm_forward.2} parent=5 // pred_check_branch
      %204 = sbr.rel (%p201) target = $region12
    $region11: #{_fnn_lm_forward.2} parent=5 // pred_region
      %s205 = ssub.s32 %s13, 1
      // Predicated region
      $region13: #{_fnn_lm_forward.2} parent=11 // pred_check
        %p206 = pneg %p60
      $region14: #{_fnn_lm_forward.2} parent=11 // pred_check_branch
        %208 = sbr.rel (%p206) target = $region16
      $region15: #{_fnn_lm_forward.2} parent=11 // pred_region
        _
      $region16: #{_fnn_lm_forward.2} parent=11 // pred_fallthru
        _
      // Predicated region
      $region17: #{_fnn_lm_forward.2} parent=11 // pred_check
        %p209 = pneg %p81
      $region18: #{_fnn_lm_forward.2} parent=11 // pred_check_branch
        %211 = sbr.rel (%p209) target = $region20
      $region19: #{_fnn_lm_forward.2} parent=11 // pred_region
        _
      $region20: #{_fnn_lm_forward.2} parent=11 // pred_fallthru
        _
      // Predicated region
      $region21: #{_fnn_lm_forward.2} parent=11 // pred_check
        %p212 = pneg %p102
      $region22: #{_fnn_lm_forward.2} parent=11 // pred_check_branch
        %214 = sbr.rel (%p212) target = $region24
      $region23: #{_fnn_lm_forward.2} parent=11 // pred_region
        _
      $region24: #{_fnn_lm_forward.2} parent=11 // pred_fallthru
        _
      // Predicated region
      $region25: #{_fnn_lm_forward.2} parent=11 // pred_check
        %p215 = pneg %p123
      $region26: #{_fnn_lm_forward.2} parent=11 // pred_check_branch
        %217 = sbr.rel (%p215) target = $region28
      $region27: #{_fnn_lm_forward.2} parent=11 // pred_region
        _
      $region28: #{_fnn_lm_forward.2} parent=11 // pred_fallthru
        _
      // Predicated region
      $region29: #{_fnn_lm_forward.2} parent=11 // pred_check
        %p218 = pneg %p144
      $region30: #{_fnn_lm_forward.2} parent=11 // pred_check_branch
        %220 = sbr.rel (%p218) target = $region32
      $region31: #{_fnn_lm_forward.2} parent=11 // pred_region
        _
      $region32: #{_fnn_lm_forward.2} parent=11 // pred_fallthru
        _
      // Predicated region
      $region33: #{_fnn_lm_forward.2} parent=11 // pred_check
        %p221 = pneg %p165
      $region34: #{_fnn_lm_forward.2} parent=11 // pred_check_branch
        %223 = sbr.rel (%p221) target = $region36
      $region35: #{_fnn_lm_forward.2} parent=11 // pred_region
        _
      $region36: #{_fnn_lm_forward.2} parent=11 // pred_fallthru
        _
    $region12: #{_fnn_lm_forward.2} parent=5 // pred_fallthru
      _
    %p224 = scmp.lt.s32.totalorder %s13, 2
    // Predicated region
    $region37: #{_fnn_lm_forward.2} parent=5 // pred_check
      %p225 = pneg %p224
    $region38: #{_fnn_lm_forward.2} parent=5 // pred_check_branch
      %227 = sbr.rel (%p225) target = $region40
    $region39: #{_fnn_lm_forward.2} parent=5 // pred_region
      // Predicated region
      $region41: #{_fnn_lm_forward.2} parent=39 // pred_check
        %p228 = pneg %p33
      $region42: #{_fnn_lm_forward.2} parent=39 // pred_check_branch
        %230 = sbr.rel (%p228) target = $region44
      $region43: #{_fnn_lm_forward.2} parent=39 // pred_region
        %p231 = scmp.lt.s32.totalorder %s13, 1
        %s232 = scalar_select %p231, %s13, 1
        %s233 = smul.addr %s232, 4
        %s234 = scalar_lea.vmem %s0, %s233
      $region44: #{_fnn_lm_forward.2} parent=39 // pred_fallthru
        _
    $region40: #{_fnn_lm_forward.2} parent=5 // pred_fallthru
      _
    %p235 = scmp.le.s32.totalorder 1, %s13
    %p236 = scmp.lt.s32.totalorder %s13, 3
    %p237 = pnand %p235, %p236
    %p238 = pneg %p237
    // Predicated region
    $region45: #{_fnn_lm_forward.2} parent=5 // pred_check
      _
    $region46: #{_fnn_lm_forward.2} parent=5 // pred_check_branch
      %240 = sbr.rel (%p237) target = $region48
    $region47: #{_fnn_lm_forward.2} parent=5 // pred_region
      %s241 = ssub.s32 %s13, 1
      %p242 = scmp.lt.s32.totalorder %s18, 1
      %s243 = scalar_select %p242, %s18, 1
      %s244 = smul.addr %s243, 4
      %s245 = scalar_lea.vmem %s0, %s244
      %p246 = pneg %p39
      %p247 = pneg %p36
      %p248 = pneg %p60
      %p249 = pneg %p57
      %p250 = pneg %p81
      %p251 = pneg %p78
      %p252 = pneg %p102
      %p253 = pneg %p99
      %p254 = pneg %p123
      %p255 = pneg %p120
      %p256 = pneg %p144
      %p257 = pneg %p141
      %p258 = pneg %p165
      %p259 = pneg %p162
      %p260 = pneg %p191
      %p261 = pneg %p188
      %p262 = scmp.lt.s32.totalorder %s18, 1
      %s263 = scalar_select %p262, %s18, 1
      %s264 = smul.addr %s263, 4
      %s265 = scalar_lea.vmem %s7, %s264
      %p266 = scmp.lt.s32.totalorder %s18, 1
      %s267 = scalar_select %p266, %s18, 1
      %s268 = smul.addr %s267, 4
      %s269 = scalar_lea.vmem %s0, %s268
      %p270 = scmp.lt.s32.totalorder %s18, 1
      %s271 = scalar_select %p270, %s18, 1
      %s272 = smul.addr %s271, 4
      %s273 = scalar_lea.vmem %s7, %s272
      %v275 = vld [vmem:[%s269] sm:$0xf]
      %v276 = vld [vmem:[%s1] sm:$0xf]
      %v277 = vld [vmem:[%s1 + $0x4] sm:$0xf]
      %v278 = vld [vmem:[%s1 + $0x8] sm:$0xf]
      %v279 = vld [vmem:[%s1 + $0xc] sm:$0xf]
      %v280 = vld [vmem:[%s1 + $0x10] sm:$0xf]
      %v281 = vld [vmem:[%s1 + $0x14] sm:$0xf]
      %v282 = vld [vmem:[%s1 + $0x18] sm:$0xf]
      %v283 = vld [vmem:[%s1 + $0x1c] sm:$0xf]
      %v284 = vld [vmem:[%s1 + $0x20] sm:$0xf]
      %v285 = vld [vmem:[%s1 + $0x24] sm:$0xf]
      %v286 = vld [vmem:[%s1 + $0x28] sm:$0xf]
      %v287 = vld [vmem:[%s1 + $0x2c] sm:$0xf]
      %v288 = vld [vmem:[%s1 + $0x30] sm:$0xf]
      %v289 = vld [vmem:[%s1 + $0x34] sm:$0xf]
      %v290 = vld [vmem:[%s1 + $0x38] sm:$0xf]
      %v291 = vld [vmem:[%s1 + $0x3c] sm:$0xf]
      %v292 = vld [vmem:[%s2] sm:$0x1]
      %v294 = vlaneseq
      %v295 = vshrl.u32 %v294, 7
      %v296 = vsub.s32 0, %v295
      %v297 = vrot.slane %v292, %v296
      %v315 = vunpack.c.l.b16 %v276
      %v316 = vunpack.c.l.b16 %v277
      %v317 = vunpack.c.l.b16 %v278
      %v318 = vunpack.c.l.b16 %v279
      %v319 = vunpack.c.l.b16 %v280
      %v320 = vunpack.c.l.b16 %v281
      %v321 = vunpack.c.l.b16 %v282
      %v322 = vunpack.c.l.b16 %v283
      %v323 = vunpack.c.l.b16 %v284
      %v324 = vunpack.c.l.b16 %v285
      %v325 = vunpack.c.l.b16 %v286
      %v326 = vunpack.c.l.b16 %v287
      %v327 = vunpack.c.l.b16 %v288
      %v328 = vunpack.c.l.b16 %v289
      %v329 = vunpack.c.l.b16 %v290
      %v330 = vunpack.c.l.b16 %v291
      %v331 = vpack.c.b16 %v316, %v315
      %v332 = vpack.c.b16 %v318, %v317
      %v333 = vpack.c.b16 %v320, %v319
      %v334 = vpack.c.b16 %v322, %v321
      %v335 = vpack.c.b16 %v324, %v323
      %v336 = vpack.c.b16 %v326, %v325
      %v337 = vpack.c.b16 %v328, %v327
      %v338 = vpack.c.b16 %v330, %v329
      %347 = vmatprep.subr.bf16.mxu0 0
      %348 = vmatpush1.bf16.msra.mxu0 %v331
      %349 = vmatprep.subr.bf16.mxu0 0
      %350 = vmatpush1.bf16.msra.mxu0 %v332
      %351 = vmatprep.subr.bf16.mxu0 0
      %352 = vmatpush1.bf16.msra.mxu0 %v333
      %353 = vmatprep.subr.bf16.mxu0 0
      %354 = vmatpush1.bf16.msra.mxu0 %v334
      %355 = vmatprep.subr.bf16.mxu0 0
      %356 = vmatpush1.bf16.msra.mxu0 %v335
      %357 = vmatprep.subr.bf16.mxu0 0
      %358 = vmatpush1.bf16.msra.mxu0 %v336
      %359 = vmatprep.subr.bf16.mxu0 0
      %360 = vmatpush1.bf16.msra.mxu0 %v337
      %361 = vmatprep.subr.bf16.mxu0 0
      %362 = vmatpush1.bf16.msra.mxu0 %v338
      %363 = vmatprep.subr.bf16.mxu0 0
      %364 = vmatpush1.bf16.msra.mxu0 0
      %365 = vmatprep.subr.bf16.mxu0 0
      %366 = vmatpush1.bf16.msra.mxu0 0
      %367 = vmatprep.subr.bf16.mxu0 0
      %368 = vmatpush1.bf16.msra.mxu0 0
      %369 = vmatprep.subr.bf16.mxu0 0
      %370 = vmatpush1.bf16.msra.mxu0 0
      %371 = vmatprep.subr.bf16.mxu0 0
      %372 = vmatpush1.bf16.msra.mxu0 0
      %373 = vmatprep.subr.bf16.mxu0 0
      %374 = vmatpush1.bf16.msra.mxu0 0
      %375 = vmatprep.subr.bf16.mxu0 0
      %376 = vmatpush1.bf16.msra.mxu0 0
      %377 = vmatprep.subr.bf16.mxu0 0
      %378 = vmatpush1.bf16.msra.mxu0 0
      %379 = vmatprep.mubr.bf16.mxu0 0
      %380 = vmatmul.mubr.bf16.gmra.mrb[0].mxu0 %v275
      %v381 = vpop.f32.mrb[0].mxu0
      %v382 = vadd.f32 %v297, %v381
      %v383 = vpop.f32.mrb[0].mxu0
      %v384 = vpop.f32.mrb[0].mxu0
      %v385 = vpop.f32.mrb[0].mxu0
      %386 = vdwg.mxu0
      %v387 = vtanh.pop %v382
      %v388 = vpack.c.bf16 %v387, %v387
      %v389 = vld [vmem:[%s3] sm:$0xff]
      %v390 = vld [vmem:[%s3 + $0x8] sm:$0xff]
      %v391 = vld [vmem:[%s3 + $0x10] sm:$0xff]
      %v392 = vld [vmem:[%s3 + $0x18] sm:$0xff]
      %v393 = vld [vmem:[%s3 + $0x20] sm:$0xff]
      %v394 = vld [vmem:[%s3 + $0x28] sm:$0xff]
      %v395 = vld [vmem:[%s3 + $0x30] sm:$0xff]
      %v396 = vld [vmem:[%s3 + $0x38] sm:$0xff]
      %v397 = vld [vmem:[%s3 + $0x40] sm:$0xff]
      %v398 = vld [vmem:[%s3 + $0x48] sm:$0xff]
      %v399 = vld [vmem:[%s3 + $0x50] sm:$0xff]
      %v400 = vld [vmem:[%s3 + $0x58] sm:$0xff]
      %v401 = vld [vmem:[%s3 + $0x60] sm:$0xff]
      %v402 = vld [vmem:[%s3 + $0x68] sm:$0xff]
      %v403 = vld [vmem:[%s3 + $0x70] sm:$0xff]
      %v404 = vld [vmem:[%s3 + $0x78] sm:$0xff]
      %v405 = vld [vmem:[%s3 + $0x80] sm:$0xff]
      %v406 = vld [vmem:[%s3 + $0x88] sm:$0xff]
      %v407 = vld [vmem:[%s3 + $0x90] sm:$0xff]
      %v408 = vld [vmem:[%s3 + $0x98] sm:$0xff]
      %v409 = vld [vmem:[%s3 + $0xa0] sm:$0xff]
      %v410 = vld [vmem:[%s3 + $0xa8] sm:$0xff]
      %v411 = vld [vmem:[%s3 + $0xb0] sm:$0xff]
      %v412 = vld [vmem:[%s3 + $0xb8] sm:$0xff]
      %v413 = vld [vmem:[%s3 + $0xc0] sm:$0xff]
      %v414 = vld [vmem:[%s3 + $0xc8] sm:$0xff]
      %v415 = vld [vmem:[%s3 + $0xd0] sm:$0xff]
      %v416 = vld [vmem:[%s3 + $0xd8] sm:$0xff]
      %v417 = vld [vmem:[%s3 + $0xe0] sm:$0xff]
      %v418 = vld [vmem:[%s3 + $0xe8] sm:$0xff]
      %v419 = vld [vmem:[%s3 + $0xf0] sm:$0xff]
      %v420 = vld [vmem:[%s3 + $0xf8] sm:$0xff]
      %v421 = vld [vmem:[%s4] sm:$0xf]
      %v423 = vlaneseq
      %v424 = vshrl.u32 %v423, 7
      %v425 = vsub.s32 0, %v424
      %v426 = vrot.slane %v421, %v425
      %v427 = vlaneseq
      %v428 = vshrl.u32 %v427, 7
      %v429 = vsub.s32 1, %v428
      %v430 = vrot.slane %v421, %v429
      %v431 = vlaneseq
      %v432 = vshrl.u32 %v431, 7
      %v433 = vsub.s32 2, %v432
      %v434 = vrot.slane %v421, %v433
      %v435 = vlaneseq
      %v436 = vshrl.u32 %v435, 7
      %v437 = vsub.s32 3, %v436
      %v438 = vrot.slane %v421, %v437
      %v475 = vunpack.c.l.b16 %v389
      %v476 = vunpack.c.h.b16 %v389
      %v477 = vunpack.c.l.b16 %v390
      %v478 = vunpack.c.h.b16 %v390
      %v479 = vunpack.c.l.b16 %v391
      %v480 = vunpack.c.h.b16 %v391
      %v481 = vunpack.c.l.b16 %v392
      %v482 = vunpack.c.h.b16 %v392
      %v483 = vunpack.c.l.b16 %v393
      %v484 = vunpack.c.h.b16 %v393
      %v485 = vunpack.c.l.b16 %v394
      %v486 = vunpack.c.h.b16 %v394
      %v487 = vunpack.c.l.b16 %v395
      %v488 = vunpack.c.h.b16 %v395
      %v489 = vunpack.c.l.b16 %v396
      %v490 = vunpack.c.h.b16 %v396
      %v491 = vunpack.c.l.b16 %v397
      %v492 = vunpack.c.h.b16 %v397
      %v493 = vunpack.c.l.b16 %v398
      %v494 = vunpack.c.h.b16 %v398
      %v495 = vunpack.c.l.b16 %v399
      %v496 = vunpack.c.h.b16 %v399
      %v497 = vunpack.c.l.b16 %v400
      %v498 = vunpack.c.h.b16 %v400
      %v499 = vunpack.c.l.b16 %v401
      %v500 = vunpack.c.h.b16 %v401
      %v501 = vunpack.c.l.b16 %v402
      %v502 = vunpack.c.h.b16 %v402
      %v503 = vunpack.c.l.b16 %v403
      %v504 = vunpack.c.h.b16 %v403
      %v505 = vunpack.c.l.b16 %v404
      %v506 = vunpack.c.h.b16 %v404
      %v507 = vunpack.c.l.b16 %v405
      %v508 = vunpack.c.h.b16 %v405
      %v509 = vunpack.c.l.b16 %v406
      %v510 = vunpack.c.h.b16 %v406
      %v511 = vunpack.c.l.b16 %v407
      %v512 = vunpack.c.h.b16 %v407
      %v513 = vunpack.c.l.b16 %v408
      %v514 = vunpack.c.h.b16 %v408
      %v515 = vunpack.c.l.b16 %v409
      %v516 = vunpack.c.h.b16 %v409
      %v517 = vunpack.c.l.b16 %v410
      %v518 = vunpack.c.h.b16 %v410
      %v519 = vunpack.c.l.b16 %v411
      %v520 = vunpack.c.h.b16 %v411
      %v521 = vunpack.c.l.b16 %v412
      %v522 = vunpack.c.h.b16 %v412
      %v523 = vunpack.c.l.b16 %v413
      %v524 = vunpack.c.h.b16 %v413
      %v525 = vunpack.c.l.b16 %v414
      %v526 = vunpack.c.h.b16 %v414
      %v527 = vunpack.c.l.b16 %v415
      %v528 = vunpack.c.h.b16 %v415
      %v529 = vunpack.c.l.b16 %v416
      %v530 = vunpack.c.h.b16 %v416
      %v531 = vunpack.c.l.b16 %v417
      %v532 = vunpack.c.h.b16 %v417
      %v533 = vunpack.c.l.b16 %v418
      %v534 = vunpack.c.h.b16 %v418
      %v535 = vunpack.c.l.b16 %v419
      %v536 = vunpack.c.h.b16 %v419
      %v537 = vunpack.c.l.b16 %v420
      %v538 = vunpack.c.h.b16 %v420
      %v539 = vpack.c.b16 %v479, %v475
      %v540 = vpack.c.b16 %v480, %v476
      %v541 = vpack.c.b16 %v481, %v477
      %v542 = vpack.c.b16 %v482, %v478
      %v543 = vpack.c.b16 %v487, %v483
      %v544 = vpack.c.b16 %v488, %v484
      %v545 = vpack.c.b16 %v489, %v485
      %v546 = vpack.c.b16 %v490, %v486
      %v547 = vpack.c.b16 %v495, %v491
      %v548 = vpack.c.b16 %v496, %v492
      %v549 = vpack.c.b16 %v497, %v493
      %v550 = vpack.c.b16 %v498, %v494
      %v551 = vpack.c.b16 %v503, %v499
      %v552 = vpack.c.b16 %v504, %v500
      %v553 = vpack.c.b16 %v505, %v501
      %v554 = vpack.c.b16 %v506, %v502
      %v555 = vpack.c.b16 %v511, %v507
      %v556 = vpack.c.b16 %v512, %v508
      %v557 = vpack.c.b16 %v513, %v509
      %v558 = vpack.c.b16 %v514, %v510
      %v559 = vpack.c.b16 %v519, %v515
      %v560 = vpack.c.b16 %v520, %v516
      %v561 = vpack.c.b16 %v521, %v517
      %v562 = vpack.c.b16 %v522, %v518
      %v563 = vpack.c.b16 %v527, %v523
      %v564 = vpack.c.b16 %v528, %v524
      %v565 = vpack.c.b16 %v529, %v525
      %v566 = vpack.c.b16 %v530, %v526
      %v567 = vpack.c.b16 %v535, %v531
      %v568 = vpack.c.b16 %v536, %v532
      %v569 = vpack.c.b16 %v537, %v533
      %v570 = vpack.c.b16 %v538, %v534
      %603 = vmatprep.subr.bf16.mxu0 %v540
      %604 = vmatpush1.bf16.msra.mxu0 %v539
      %605 = vmatprep.subr.bf16.mxu0 %v544
      %606 = vmatpush1.bf16.msra.mxu0 %v543
      %607 = vmatprep.subr.bf16.mxu0 %v548
      %608 = vmatpush1.bf16.msra.mxu0 %v547
      %609 = vmatprep.subr.bf16.mxu0 %v552
      %610 = vmatpush1.bf16.msra.mxu0 %v551
      %611 = vmatprep.subr.bf16.mxu0 %v556
      %612 = vmatpush1.bf16.msra.mxu0 %v555
      %613 = vmatprep.subr.bf16.mxu0 %v560
      %614 = vmatpush1.bf16.msra.mxu0 %v559
      %615 = vmatprep.subr.bf16.mxu0 %v564
      %616 = vmatpush1.bf16.msra.mxu0 %v563
      %617 = vmatprep.subr.bf16.mxu0 %v568
      %618 = vmatpush1.bf16.msra.mxu0 %v567
      %619 = vmatprep.subr.bf16.mxu0 0
      %620 = vmatpush1.bf16.msra.mxu0 0
      %621 = vmatprep.subr.bf16.mxu0 0
      %622 = vmatpush1.bf16.msra.mxu0 0
      %623 = vmatprep.subr.bf16.mxu0 0
      %624 = vmatpush1.bf16.msra.mxu0 0
      %625 = vmatprep.subr.bf16.mxu0 0
      %626 = vmatpush1.bf16.msra.mxu0 0
      %627 = vmatprep.subr.bf16.mxu0 0
      %628 = vmatpush1.bf16.msra.mxu0 0
      %629 = vmatprep.subr.bf16.mxu0 0
      %630 = vmatpush1.bf16.msra.mxu0 0
      %631 = vmatprep.subr.bf16.mxu0 0
      %632 = vmatpush1.bf16.msra.mxu0 0
      %633 = vmatprep.subr.bf16.mxu0 0
      %634 = vmatpush1.bf16.msra.mxu0 0
      %635 = vmatprep.mubr.bf16.mxu0 0
      %636 = vmatmul.mubr.bf16.gmra.mrb[0].mxu0 %v388
      %v637 = vpop.f32.mrb[0].mxu0
      %v638 = vadd.f32 %v426, %v637
      %v639 = vpop.f32.mrb[0].mxu0
      %v640 = vadd.f32 %v430, %v639
      %v641 = vpop.f32.mrb[0].mxu0
      %v642 = vpop.f32.mrb[0].mxu0
      %643 = vdwg.mxu0
      %644 = vmatprep.subr.bf16.mxu0 %v542
      %645 = vmatpush1.bf16.msra.mxu0 %v541
      %646 = vmatprep.subr.bf16.mxu0 %v546
      %647 = vmatpush1.bf16.msra.mxu0 %v545
      %648 = vmatprep.subr.bf16.mxu0 %v550
      %649 = vmatpush1.bf16.msra.mxu0 %v549
      %650 = vmatprep.subr.bf16.mxu0 %v554
      %651 = vmatpush1.bf16.msra.mxu0 %v553
      %652 = vmatprep.subr.bf16.mxu0 %v558
      %653 = vmatpush1.bf16.msra.mxu0 %v557
      %654 = vmatprep.subr.bf16.mxu0 %v562
      %655 = vmatpush1.bf16.msra.mxu0 %v561
      %656 = vmatprep.subr.bf16.mxu0 %v566
      %657 = vmatpush1.bf16.msra.mxu0 %v565
      %658 = vmatprep.subr.bf16.mxu0 %v570
      %659 = vmatpush1.bf16.msra.mxu0 %v569
      %660 = vmatprep.subr.bf16.mxu0 0
      %661 = vmatpush1.bf16.msra.mxu0 0
      %662 = vmatprep.subr.bf16.mxu0 0
      %663 = vmatpush1.bf16.msra.mxu0 0
      %664 = vmatprep.subr.bf16.mxu0 0
      %665 = vmatpush1.bf16.msra.mxu0 0
      %666 = vmatprep.subr.bf16.mxu0 0
      %667 = vmatpush1.bf16.msra.mxu0 0
      %668 = vmatprep.subr.bf16.mxu0 0
      %669 = vmatpush1.bf16.msra.mxu0 0
      %670 = vmatprep.subr.bf16.mxu0 0
      %671 = vmatpush1.bf16.msra.mxu0 0
      %672 = vmatprep.subr.bf16.mxu0 0
      %673 = vmatpush1.bf16.msra.mxu0 0
      %674 = vmatprep.subr.bf16.mxu0 0
      %675 = vmatpush1.bf16.msra.mxu0 0
      %676 = vmatprep.mubr.bf16.mxu0 0
      %677 = vmatmul.mubr.bf16.gmra.mrb[0].mxu0 %v388
      %v678 = vpop.f32.mrb[0].mxu0
      %v679 = vadd.f32 %v434, %v678
      %v680 = vpop.f32.mrb[0].mxu0
      %v681 = vadd.f32 %v438, %v680
      %v682 = vpop.f32.mrb[0].mxu0
      %v683 = vpop.f32.mrb[0].mxu0
      %684 = vdwg.mxu0
      %v685 = vtanh.pop %v638
      %v686 = vtanh.pop %v640
      %v687 = vtanh.pop %v679
      %v688 = vtanh.pop %v681
      %v689 = vpack.c.bf16 %v685, %v685
      %v690 = vpack.c.bf16 %v686, %v686
      %v691 = vpack.c.bf16 %v687, %v687
      %v692 = vpack.c.bf16 %v688, %v688
      %v693 = vld [vmem:[%s5] sm:$0xf]
      %v694 = vld [vmem:[%s5 + $0x4] sm:$0xf]
      %v695 = vld [vmem:[%s5 + $0x8] sm:$0xf]
      %v696 = vld [vmem:[%s5 + $0xc] sm:$0xf]
      %v697 = vld [vmem:[%s5 + $0x10] sm:$0xf]
      %v698 = vld [vmem:[%s5 + $0x14] sm:$0xf]
      %v699 = vld [vmem:[%s5 + $0x18] sm:$0xf]
      %v700 = vld [vmem:[%s5 + $0x1c] sm:$0xf]
      %v701 = vld [vmem:[%s5 + $0x20] sm:$0xf]
      %v702 = vld [vmem:[%s5 + $0x24] sm:$0xf]
      %v703 = vld [vmem:[%s5 + $0x28] sm:$0xf]
      %v704 = vld [vmem:[%s5 + $0x2c] sm:$0xf]
      %v705 = vld [vmem:[%s5 + $0x30] sm:$0xf]
      %v706 = vld [vmem:[%s5 + $0x34] sm:$0xf]
      %v707 = vld [vmem:[%s5 + $0x38] sm:$0xf]
      %v708 = vld [vmem:[%s5 + $0x3c] sm:$0xf]
      %v709 = vld [vmem:[%s5 + $0x40] sm:$0xf]
      %v710 = vld [vmem:[%s5 + $0x44] sm:$0xf]
      %v711 = vld [vmem:[%s5 + $0x48] sm:$0xf]
      %v712 = vld [vmem:[%s5 + $0x4c] sm:$0xf]
      %v713 = vld [vmem:[%s5 + $0x50] sm:$0xf]
      %v714 = vld [vmem:[%s5 + $0x54] sm:$0xf]
      %v715 = vld [vmem:[%s5 + $0x58] sm:$0xf]
      %v716 = vld [vmem:[%s5 + $0x5c] sm:$0xf]
      %v717 = vld [vmem:[%s5 + $0x60] sm:$0xf]
      %v718 = vld [vmem:[%s5 + $0x64] sm:$0xf]
      %v719 = vld [vmem:[%s5 + $0x68] sm:$0xf]
      %v720 = vld [vmem:[%s5 + $0x6c] sm:$0xf]
      %v721 = vld [vmem:[%s5 + $0x70] sm:$0xf]
      %v722 = vld [vmem:[%s5 + $0x74] sm:$0xf]
      %v723 = vld [vmem:[%s5 + $0x78] sm:$0xf]
      %v724 = vld [vmem:[%s5 + $0x7c] sm:$0xf]
      %v725 = vld [vmem:[%s5 + $0x80] sm:$0xf]
      %v726 = vld [vmem:[%s5 + $0x84] sm:$0xf]
      %v727 = vld [vmem:[%s5 + $0x88] sm:$0xf]
      %v728 = vld [vmem:[%s5 + $0x8c] sm:$0xf]
      %v729 = vld [vmem:[%s5 + $0x90] sm:$0xf]
      %v730 = vld [vmem:[%s5 + $0x94] sm:$0xf]
      %v731 = vld [vmem:[%s5 + $0x98] sm:$0xf]
      %v732 = vld [vmem:[%s5 + $0x9c] sm:$0xf]
      %v733 = vld [vmem:[%s5 + $0xa0] sm:$0xf]
      %v734 = vld [vmem:[%s5 + $0xa4] sm:$0xf]
      %v735 = vld [vmem:[%s5 + $0xa8] sm:$0xf]
      %v736 = vld [vmem:[%s5 + $0xac] sm:$0xf]
      %v737 = vld [vmem:[%s5 + $0xb0] sm:$0xf]
      %v738 = vld [vmem:[%s5 + $0xb4] sm:$0xf]
      %v739 = vld [vmem:[%s5 + $0xb8] sm:$0xf]
      %v740 = vld [vmem:[%s5 + $0xbc] sm:$0xf]
      %v741 = vld [vmem:[%s5 + $0xc0] sm:$0xf]
      %v742 = vld [vmem:[%s5 + $0xc4] sm:$0xf]
      %v743 = vld [vmem:[%s5 + $0xc8] sm:$0xf]
      %v744 = vld [vmem:[%s5 + $0xcc] sm:$0xf]
      %v745 = vld [vmem:[%s5 + $0xd0] sm:$0xf]
      %v746 = vld [vmem:[%s5 + $0xd4] sm:$0xf]
      %v747 = vld [vmem:[%s5 + $0xd8] sm:$0xf]
      %v748 = vld [vmem:[%s5 + $0xdc] sm:$0xf]
      %v749 = vld [vmem:[%s5 + $0xe0] sm:$0xf]
      %v750 = vld [vmem:[%s5 + $0xe4] sm:$0xf]
      %v751 = vld [vmem:[%s5 + $0xe8] sm:$0xf]
      %v752 = vld [vmem:[%s5 + $0xec] sm:$0xf]
      %v753 = vld [vmem:[%s5 + $0xf0] sm:$0xf]
      %v754 = vld [vmem:[%s5 + $0xf4] sm:$0xf]
      %v755 = vld [vmem:[%s5 + $0xf8] sm:$0xf]
      %v756 = vld [vmem:[%s5 + $0xfc] sm:$0xf]
      %v757 = vld [vmem:[%s6] sm:$0x1]
      %v759 = vlaneseq
      %v760 = vshrl.u32 %v759, 7
      %v761 = vsub.s32 0, %v760
      %v762 = vrot.slane %v757, %v761
      %v828 = vunpack.c.l.b16 %v693
      %v829 = vunpack.c.l.b16 %v694
      %v830 = vunpack.c.l.b16 %v695
      %v831 = vunpack.c.l.b16 %v696
      %v832 = vunpack.c.l.b16 %v697
      %v833 = vunpack.c.l.b16 %v698
      %v834 = vunpack.c.l.b16 %v699
      %v835 = vunpack.c.l.b16 %v700
      %v836 = vunpack.c.l.b16 %v701
      %v837 = vunpack.c.l.b16 %v702
      %v838 = vunpack.c.l.b16 %v703
      %v839 = vunpack.c.l.b16 %v704
      %v840 = vunpack.c.l.b16 %v705
      %v841 = vunpack.c.l.b16 %v706
      %v842 = vunpack.c.l.b16 %v707
      %v843 = vunpack.c.l.b16 %v708
      %v844 = vunpack.c.l.b16 %v709
      %v845 = vunpack.c.l.b16 %v710
      %v846 = vunpack.c.l.b16 %v711
      %v847 = vunpack.c.l.b16 %v712
      %v848 = vunpack.c.l.b16 %v713
      %v849 = vunpack.c.l.b16 %v714
      %v850 = vunpack.c.l.b16 %v715
      %v851 = vunpack.c.l.b16 %v716
      %v852 = vunpack.c.l.b16 %v717
      %v853 = vunpack.c.l.b16 %v718
      %v854 = vunpack.c.l.b16 %v719
      %v855 = vunpack.c.l.b16 %v720
      %v856 = vunpack.c.l.b16 %v721
      %v857 = vunpack.c.l.b16 %v722
      %v858 = vunpack.c.l.b16 %v723
      %v859 = vunpack.c.l.b16 %v724
      %v860 = vunpack.c.l.b16 %v725
      %v861 = vunpack.c.l.b16 %v726
      %v862 = vunpack.c.l.b16 %v727
      %v863 = vunpack.c.l.b16 %v728
      %v864 = vunpack.c.l.b16 %v729
      %v865 = vunpack.c.l.b16 %v730
      %v866 = vunpack.c.l.b16 %v731
      %v867 = vunpack.c.l.b16 %v732
      %v868 = vunpack.c.l.b16 %v733
      %v869 = vunpack.c.l.b16 %v734
      %v870 = vunpack.c.l.b16 %v735
      %v871 = vunpack.c.l.b16 %v736
      %v872 = vunpack.c.l.b16 %v737
      %v873 = vunpack.c.l.b16 %v738
      %v874 = vunpack.c.l.b16 %v739
      %v875 = vunpack.c.l.b16 %v740
      %v876 = vunpack.c.l.b16 %v741
      %v877 = vunpack.c.l.b16 %v742
      %v878 = vunpack.c.l.b16 %v743
      %v879 = vunpack.c.l.b16 %v744
      %v880 = vunpack.c.l.b16 %v745
      %v881 = vunpack.c.l.b16 %v746
      %v882 = vunpack.c.l.b16 %v747
      %v883 = vunpack.c.l.b16 %v748
      %v884 = vunpack.c.l.b16 %v749
      %v885 = vunpack.c.l.b16 %v750
      %v886 = vunpack.c.l.b16 %v751
      %v887 = vunpack.c.l.b16 %v752
      %v888 = vunpack.c.l.b16 %v753
      %v889 = vunpack.c.l.b16 %v754
      %v890 = vunpack.c.l.b16 %v755
      %v891 = vunpack.c.l.b16 %v756
      %v892 = vpack.c.b16 %v829, %v828
      %v893 = vpack.c.b16 %v831, %v830
      %v894 = vpack.c.b16 %v833, %v832
      %v895 = vpack.c.b16 %v835, %v834
      %v896 = vpack.c.b16 %v837, %v836
      %v897 = vpack.c.b16 %v839, %v838
      %v898 = vpack.c.b16 %v841, %v840
      %v899 = vpack.c.b16 %v843, %v842
      %v900 = vpack.c.b16 %v845, %v844
      %v901 = vpack.c.b16 %v847, %v846
      %v902 = vpack.c.b16 %v849, %v848
      %v903 = vpack.c.b16 %v851, %v850
      %v904 = vpack.c.b16 %v853, %v852
      %v905 = vpack.c.b16 %v855, %v854
      %v906 = vpack.c.b16 %v857, %v856
      %v907 = vpack.c.b16 %v859, %v858
      %v908 = vpack.c.b16 %v861, %v860
      %v909 = vpack.c.b16 %v863, %v862
      %v910 = vpack.c.b16 %v865, %v864
      %v911 = vpack.c.b16 %v867, %v866
      %v912 = vpack.c.b16 %v869, %v868
      %v913 = vpack.c.b16 %v871, %v870
      %v914 = vpack.c.b16 %v873, %v872
      %v915 = vpack.c.b16 %v875, %v874
      %v916 = vpack.c.b16 %v877, %v876
      %v917 = vpack.c.b16 %v879, %v878
      %v918 = vpack.c.b16 %v881, %v880
      %v919 = vpack.c.b16 %v883, %v882
      %v920 = vpack.c.b16 %v885, %v884
      %v921 = vpack.c.b16 %v887, %v886
      %v922 = vpack.c.b16 %v889, %v888
      %v923 = vpack.c.b16 %v891, %v890
      %956 = vmatprep.subr.bf16.mxu0 0
      %957 = vmatpush1.bf16.msra.mxu0 %v892
      %958 = vmatprep.subr.bf16.mxu0 0
      %959 = vmatpush1.bf16.msra.mxu0 %v893
      %960 = vmatprep.subr.bf16.mxu0 0
      %961 = vmatpush1.bf16.msra.mxu0 %v894
      %962 = vmatprep.subr.bf16.mxu0 0
      %963 = vmatpush1.bf16.msra.mxu0 %v895
      %964 = vmatprep.subr.bf16.mxu0 0
      %965 = vmatpush1.bf16.msra.mxu0 %v896
      %966 = vmatprep.subr.bf16.mxu0 0
      %967 = vmatpush1.bf16.msra.mxu0 %v897
      %968 = vmatprep.subr.bf16.mxu0 0
      %969 = vmatpush1.bf16.msra.mxu0 %v898
      %970 = vmatprep.subr.bf16.mxu0 0
      %971 = vmatpush1.bf16.msra.mxu0 %v899
      %972 = vmatprep.subr.bf16.mxu0 0
      %973 = vmatpush1.bf16.msra.mxu0 %v900
      %974 = vmatprep.subr.bf16.mxu0 0
      %975 = vmatpush1.bf16.msra.mxu0 %v901
      %976 = vmatprep.subr.bf16.mxu0 0
      %977 = vmatpush1.bf16.msra.mxu0 %v902
      %978 = vmatprep.subr.bf16.mxu0 0
      %979 = vmatpush1.bf16.msra.mxu0 %v903
      %980 = vmatprep.subr.bf16.mxu0 0
      %981 = vmatpush1.bf16.msra.mxu0 %v904
      %982 = vmatprep.subr.bf16.mxu0 0
      %983 = vmatpush1.bf16.msra.mxu0 %v905
      %984 = vmatprep.subr.bf16.mxu0 0
      %985 = vmatpush1.bf16.msra.mxu0 %v906
      %986 = vmatprep.subr.bf16.mxu0 0
      %987 = vmatpush1.bf16.msra.mxu0 %v907
      %988 = vmatprep.mubr.bf16.mxu0 %v690
      %989 = vmatmul.mubr.bf16.gmra.mrb[0].mxu0 %v689
      %v990 = vpop.f32.mrb[0].mxu0
      %v991 = vadd.f32 %v762, %v990
      %v992 = vpop.f32.mrb[0].mxu0
      %v993 = vpop.f32.mrb[0].mxu0
      %v994 = vpop.f32.mrb[0].mxu0
      %995 = vdwg.mxu0
      %996 = vmatprep.subr.bf16.mxu0 0
      %997 = vmatpush1.bf16.msra.mxu0 %v908
      %998 = vmatprep.subr.bf16.mxu0 0
      %999 = vmatpush1.bf16.msra.mxu0 %v909
      %1000 = vmatprep.subr.bf16.mxu0 0
      %1001 = vmatpush1.bf16.msra.mxu0 %v910
      %1002 = vmatprep.subr.bf16.mxu0 0
      %1003 = vmatpush1.bf16.msra.mxu0 %v911
      %1004 = vmatprep.subr.bf16.mxu0 0
      %1005 = vmatpush1.bf16.msra.mxu0 %v912
      %1006 = vmatprep.subr.bf16.mxu0 0
      %1007 = vmatpush1.bf16.msra.mxu0 %v913
      %1008 = vmatprep.subr.bf16.mxu0 0
      %1009 = vmatpush1.bf16.msra.mxu0 %v914
      %1010 = vmatprep.subr.bf16.mxu0 0
      %1011 = vmatpush1.bf16.msra.mxu0 %v915
      %1012 = vmatprep.subr.bf16.mxu0 0
      %1013 = vmatpush1.bf16.msra.mxu0 %v916
      %1014 = vmatprep.subr.bf16.mxu0 0
      %1015 = vmatpush1.bf16.msra.mxu0 %v917
      %1016 = vmatprep.subr.bf16.mxu0 0
      %1017 = vmatpush1.bf16.msra.mxu0 %v918
      %1018 = vmatprep.subr.bf16.mxu0 0
      %1019 = vmatpush1.bf16.msra.mxu0 %v919
      %1020 = vmatprep.subr.bf16.mxu0 0
      %1021 = vmatpush1.bf16.msra.mxu0 %v920
      %1022 = vmatprep.subr.bf16.mxu0 0
      %1023 = vmatpush1.bf16.msra.mxu0 %v921
      %1024 = vmatprep.subr.bf16.mxu0 0
      %1025 = vmatpush1.bf16.msra.mxu0 %v922
      %1026 = vmatprep.subr.bf16.mxu0 0
      %1027 = vmatpush1.bf16.msra.mxu0 %v923
      %1028 = vmatprep.mubr.bf16.mxu0 %v692
      %1029 = vmatmul.mubr.bf16.gmra.mrb[0].mxu0 %v691
      %v1030 = vpop.f32.mrb[0].mxu0
      %v1031 = vadd.f32 %v991, %v1030
      %v1032 = vpop.f32.mrb[0].mxu0
      %v1033 = vpop.f32.mrb[0].mxu0
      %v1034 = vpop.f32.mrb[0].mxu0
      %1035 = vdwg.mxu0
      %v1036 = vtanh.pop %v1031
      %v1037 = vpack.c.bf16 %v1036, %v1036
      %1038 = vst [vmem:[%s273] sm:$0xf] %v1037
      %p1039 = scmp.lt.s32.totalorder %s18, 1
      %s1040 = scalar_select %p1039, %s18, 1
      %s1041 = smul.addr %s1040, 4
      %s1042 = scalar_lea.vmem %s7, %s1041
      // Predicated region
      $region49: #{_fnn_lm_forward.2} parent=47 // pred_check
        %p1043 = pneg %p188
      $region50: #{_fnn_lm_forward.2} parent=47 // pred_check_branch
        %1045 = sbr.rel (%p1043) target = $region52
      $region51: #{_fnn_lm_forward.2} parent=47 // pred_region
        _
      $region52: #{_fnn_lm_forward.2} parent=47 // pred_fallthru
        _
    $region48: #{_fnn_lm_forward.2} parent=5 // pred_fallthru
      _
    %p1046 = scmp.le.s32.totalorder 2, %s13
    // Predicated region
    $region53: #{_fnn_lm_forward.2} parent=5 // pred_check
      %p1047 = pneg %p1046
    $region54: #{_fnn_lm_forward.2} parent=5 // pred_check_branch
      %1049 = sbr.rel (%p1047) target = $region56
    $region55: #{_fnn_lm_forward.2} parent=5 // pred_region
      %s1050 = ssub.s32 %s13, 2
      // Predicated region
      $region57: #{_fnn_lm_forward.2} parent=55 // pred_check
        %p1051 = pneg %p194
      $region58: #{_fnn_lm_forward.2} parent=55 // pred_check_branch
        %1053 = sbr.rel (%p1051) target = $region60
      $region59: #{_fnn_lm_forward.2} parent=55 // pred_region
        %p1054 = scmp.lt.s32.totalorder %s19, 1
        %s1055 = scalar_select %p1054, %s19, 1
        %s1056 = smul.addr %s1055, 4
        %s1057 = scalar_lea.vmem %s7, %s1056
      $region60: #{_fnn_lm_forward.2} parent=55 // pred_fallthru
        _
    $region56: #{_fnn_lm_forward.2} parent=5 // pred_fallthru
      _
  $region6: #{_fnn_lm_forward.2} parent=0 // loop_footer
    %s17 = sadd.s32 1, %s13
  $region7: #{_fnn_lm_forward.2} parent=0 // loop_footer_branch
    %12 = sbr.rel target = $region3
  $region8: #{_fnn_lm_forward.2} parent=0 // loop_exit
    _

// kernel: _fnn_lm_forward.3
$region0: #{_fnn_lm_forward.3}
  #allocation0 [shape = 'u32[]', space=smem, size = 0x4, offset = 0x4, fixed_abs, tag = 'smem constant byte address 0x4 - core index']
  #allocation1 [shape = 'u32[144,128]{1,0:T(1,128)}', space=vmem, size = 0x12000, scoped, tag = 'internal scratch']
  %s0 = inlined_call_operand.vmem [shape: bf16[16,128], index: 0, kind: input, shape index: {}]
  %s1 = inlined_call_operand.vmem [shape: bf16[128,512], index: 1, kind: input, shape index: {}]
  %s2 = inlined_call_operand.vmem [shape: f32[1,512], index: 2, kind: input, shape index: {}]
  %s3 = inlined_call_operand.hbm [shape: bf16[16,512], index: 3, kind: output, shape index: {}]
  %s4 = sld [smem:[#allocation0]]
  $region83: #{_fnn_lm_forward.3} parent=0
    _
  %s6 = ssub.s32 1, %s4
  %s7 = scalar_select 0, %s6, %s4
  $region1: #{_fnn_lm_forward.3} parent=0
    #allocation2 [shape = 'u8[131072]{0}', space=vmem, size = 0x20000, scoped, tag = 'input window, operand 1']
    #allocation3 [shape = 'u8[8192]{0}', space=vmem, size = 0x2000, scoped, tag = 'output window, operand 0']
    #allocation4 [shape = 's32[2]{0}', space=sflag, size = 0x8, scoped, tag = 'scoped memory for _fnn_lm_forward.3']
    %8 = vsyncpa [#allocation4], 0
    %s9 = scalar_lea.sflag [#allocation4], 1
    %10 = vsyncpa %s9, 0
    loop: start=0, step=1, limit=6
    $region2: #{_fnn_lm_forward.3} parent=1 // loop_pre_header
      _
    $region3: #{_fnn_lm_forward.3} parent=1 // loop_header
      %s12 = sphi 0, %s16
      %p13 = scmp.ge.s32.totalorder %s12, 6
      %s19 = sphi 0, %s31
      %s20 = sphi 0, %s27
      %s21 = sphi 0, %s19
      %s22 = sphi 0, %s20
      %s23 = sphi 0, %s21
      %s24 = sphi 0, %s22
      %s34 = sphi 0, %s36
      %s37 = sphi 0, %s34
      %s38 = sphi 0, %s37
      %s54 = sphi 0, %s38
      %s60 = sphi 0, %s62
      %s63 = sphi 0, %s60
      %s64 = sphi 0, %s63
      %s80 = sphi 0, %s64
      %s86 = sphi 0, %s88
      %s89 = sphi 0, %s86
      %s90 = sphi 0, %s89
      %s106 = sphi 0, %s90
      %s114 = sphi 0, %s116
      %s117 = sphi 0, %s114
      %s118 = sphi 0, %s117
      %s134 = sphi 0, %s118
    $region4: #{_fnn_lm_forward.3} parent=1 // loop_header_branch
      %15 = sbr.rel (%p13) target = $region8
    $region5: #{_fnn_lm_forward.3} parent=1 // loop_body
      %s17 = ssub.s32 %s12, 1
      %s18 = ssub.s32 %s12, 2
      %s25 = sadd.s32 1, %s20
      %p26 = scmp.ge.s32.totalorder %s25, 2
      %s27 = scalar_select %p26, 0, %s25
      %s28 = sadd.s32 1, %s19
      %s29 = scalar_select %p26, %s28, %s19
      %p30 = scmp.ge.s32.totalorder %s29, 2
      %s31 = scalar_select %p30, 0, %s29
      %s32 = ssub.s32 %s20, %s27
      %p33 = scmp.eq.s32.totalorder %s32, 0
      %s35 = sadd.s32 %s34, 1
      %s36 = scalar_select %p33, %s34, %s35
      %p39 = pneg %p33
      %p40 = scmp.eq.s32.totalorder %s12, 3
      %p41 = por %p39, %p40
      %p42 = scmp.ne.s32.totalorder %s34, %s37
      %p43 = scmp.eq.s32.totalorder %s12, 0
      %p44 = por %p42, %p43
      %p45 = scmp.ne.s32.totalorder %s34, %s37
      %p46 = scmp.eq.s32.totalorder %s17, 3
      %p47 = por %p45, %p46
      %p48 = scmp.ne.s32.totalorder %s37, %s38
      %p49 = scmp.eq.s32.totalorder %s17, 0
      %p50 = por %p48, %p49
      %p51 = scmp.ne.s32.totalorder %s37, %s38
      %p52 = scmp.eq.s32.totalorder %s18, 3
      %p53 = por %p51, %p52
      %p55 = scmp.ne.s32.totalorder %s38, %s54
      %p56 = scmp.eq.s32.totalorder %s18, 0
      %p57 = por %p55, %p56
      %s58 = ssub.s32 %s19, %s31
      %p59 = scmp.eq.s32.totalorder %s58, 0
      %s61 = sadd.s32 %s60, 1
      %s62 = scalar_select %p59, %s60, %s61
      %p65 = pneg %p59
      %p66 = scmp.eq.s32.totalorder %s12, 3
      %p67 = por %p65, %p66
      %p68 = scmp.ne.s32.totalorder %s60, %s63
      %p69 = scmp.eq.s32.totalorder %s12, 0
      %p70 = por %p68, %p69
      %p71 = scmp.ne.s32.totalorder %s60, %s63
      %p72 = scmp.eq.s32.totalorder %s17, 3
      %p73 = por %p71, %p72
      %p74 = scmp.ne.s32.totalorder %s63, %s64
      %p75 = scmp.eq.s32.totalorder %s17, 0
      %p76 = por %p74, %p75
      %p77 = scmp.ne.s32.totalorder %s63, %s64
      %p78 = scmp.eq.s32.totalorder %s18, 3
      %p79 = por %p77, %p78
      %p81 = scmp.ne.s32.totalorder %s64, %s80
      %p82 = scmp.eq.s32.totalorder %s18, 0
      %p83 = por %p81, %p82
      %s84 = ssub.s32 %s19, %s31
      %p85 = scmp.eq.s32.totalorder %s84, 0
      %s87 = sadd.s32 %s86, 1
      %s88 = scalar_select %p85, %s86, %s87
      %p91 = pneg %p85
      %p92 = scmp.eq.s32.totalorder %s12, 3
      %p93 = por %p91, %p92
      %p94 = scmp.ne.s32.totalorder %s86, %s89
      %p95 = scmp.eq.s32.totalorder %s12, 0
      %p96 = por %p94, %p95
      %p97 = scmp.ne.s32.totalorder %s86, %s89
      %p98 = scmp.eq.s32.totalorder %s17, 3
      %p99 = por %p97, %p98
      %p100 = scmp.ne.s32.totalorder %s89, %s90
      %p101 = scmp.eq.s32.totalorder %s17, 0
      %p102 = por %p100, %p101
      %p103 = scmp.ne.s32.totalorder %s89, %s90
      %p104 = scmp.eq.s32.totalorder %s18, 3
      %p105 = por %p103, %p104
      %p107 = scmp.ne.s32.totalorder %s90, %s106
      %p108 = scmp.eq.s32.totalorder %s18, 0
      %p109 = por %p107, %p108
      %s110 = ssub.s32 %s20, %s27
      %s111 = ssub.s32 %s19, %s31
      %s112 = sor.u32 %s110, %s111
      %p113 = scmp.eq.s32.totalorder %s112, 0
      %s115 = sadd.s32 %s114, 1
      %s116 = scalar_select %p113, %s114, %s115
      %p119 = pneg %p113
      %p120 = scmp.eq.s32.totalorder %s12, 3
      %p121 = por %p119, %p120
      %p122 = scmp.ne.s32.totalorder %s114, %s117
      %p123 = scmp.eq.s32.totalorder %s12, 0
      %p124 = por %p122, %p123
      %p125 = scmp.ne.s32.totalorder %s114, %s117
      %p126 = scmp.eq.s32.totalorder %s17, 3
      %p127 = por %p125, %p126
      %p128 = scmp.ne.s32.totalorder %s117, %s118
      %p129 = scmp.eq.s32.totalorder %s17, 0
      %p130 = por %p128, %p129
      %p131 = scmp.ne.s32.totalorder %s117, %s118
      %p132 = scmp.eq.s32.totalorder %s18, 3
      %p133 = por %p131, %p132
      %p135 = scmp.ne.s32.totalorder %s118, %s134
      %p136 = scmp.eq.s32.totalorder %s18, 0
      %p137 = por %p135, %p136
      %p138 = scmp.le.s32.totalorder 1, %s12
      %p139 = scmp.lt.s32.totalorder %s12, 5
      %p140 = pnand %p138, %p139
      %p141 = pneg %p140
      // Predicated region
      $region9: #{_fnn_lm_forward.3} parent=5 // pred_check
        _
      $region10: #{_fnn_lm_forward.3} parent=5 // pred_check_branch
        %143 = sbr.rel (%p140) target = $region12
      $region11: #{_fnn_lm_forward.3} parent=5 // pred_region
        %s144 = ssub.s32 %s12, 1
      $region12: #{_fnn_lm_forward.3} parent=5 // pred_fallthru
        _
      %p145 = scmp.lt.s32.totalorder %s12, 4
      // Predicated region
      $region13: #{_fnn_lm_forward.3} parent=5 // pred_check
        %p146 = pneg %p145
      $region14: #{_fnn_lm_forward.3} parent=5 // pred_check_branch
        %148 = sbr.rel (%p146) target = $region16
      $region15: #{_fnn_lm_forward.3} parent=5 // pred_region
        // Predicated region
        $region17: #{_fnn_lm_forward.3} parent=15 // pred_check
          %p149 = pneg %p44
        $region18: #{_fnn_lm_forward.3} parent=15 // pred_check_branch
          %151 = sbr.rel (%p149) target = $region20
        $region19: #{_fnn_lm_forward.3} parent=15 // pred_region
          %p152 = scmp.lt.s32.totalorder %s20, 1
          %s153 = scalar_select %p152, %s20, 1
          %s154 = smul.addr %s153, 4
          %s155 = scalar_lea.vmem %s0, %s154
        $region20: #{_fnn_lm_forward.3} parent=15 // pred_fallthru
          _
        // Predicated region
        $region21: #{_fnn_lm_forward.3} parent=15 // pred_check
          %p156 = pneg %p70
        $region22: #{_fnn_lm_forward.3} parent=15 // pred_check_branch
          %158 = sbr.rel (%p156) target = $region24
        $region23: #{_fnn_lm_forward.3} parent=15 // pred_region
          %s159 = sand.u32 %s60, 1
          %s160 = sand.u32 %s60, 1
          %s161 = smul.addr %s160, 128
          %s162 = scalar_lea.vmem [#allocation2], %s161
          %s163 = smul.u32 2, %s19
          %s164 = smul.addr %s163, 4
          %s165 = scalar_lea.vmem %s1, %s164
          // Predicated region
          $region25: #{_fnn_lm_forward.3} parent=23 // pred_check
            _
          $region26: #{_fnn_lm_forward.3} parent=23 // pred_check_branch
            %167 = sbr.rel (0) target = $region28
          $region27: #{_fnn_lm_forward.3} parent=23 // pred_region
            // Predicated region
            $region29: #{_fnn_lm_forward.3} parent=27 // pred_check
              _
            $region30: #{_fnn_lm_forward.3} parent=27 // pred_check_branch
              %169 = sbr.rel (0) target = $region32
            $region31: #{_fnn_lm_forward.3} parent=27 // pred_region
              // Predicated region
              $region44: #{_fnn_lm_forward.3} parent=31 // pred_check
                _
              $region45: #{_fnn_lm_forward.3} parent=31 // pred_check_branch
                %214 = sbr.rel (0) target = $region47
              $region46: #{_fnn_lm_forward.3} parent=31 // pred_region
                loop: start=0, step=1, limit=1
                $region48: #{_fnn_lm_forward.3} parent=46 // loop_pre_header
                  _
                $region49: #{_fnn_lm_forward.3} parent=46 // loop_header
                  %s216 = sphi 0, %s220
                  %p217 = scmp.ge.s32.totalorder %s216, 1
                  %s221 = sphi %s165, %s165
                  %s222 = sphi %s162, %s162
                $region50: #{_fnn_lm_forward.3} parent=46 // loop_header_branch
                  %219 = sbr.rel (%p217) target = $region54
                $region51: #{_fnn_lm_forward.3} parent=46 // loop_body
                  %v223 = vld [vmem:[%s221] sm:$0xff]
                  %224 = vst [vmem:[%s222] sm:$0xff] %v223
                  %v225 = vld [vmem:[%s221 + $0x10] sm:$0xff]
                  %226 = vst [vmem:[%s222 + $0x8] sm:$0xff] %v225
                  %v227 = vld [vmem:[%s221 + $0x20] sm:$0xff]
                  %228 = vst [vmem:[%s222 + $0x10] sm:$0xff] %v227
                  %v229 = vld [vmem:[%s221 + $0x30] sm:$0xff]
                  %230 = vst [vmem:[%s222 + $0x18] sm:$0xff] %v229
                  %v231 = vld [vmem:[%s221 + $0x40] sm:$0xff]
                  %232 = vst [vmem:[%s222 + $0x20] sm:$0xff] %v231
                  %v233 = vld [vmem:[%s221 + $0x50] sm:$0xff]
                  %234 = vst [vmem:[%s222 + $0x28] sm:$0xff] %v233
                  %v235 = vld [vmem:[%s221 + $0x60] sm:$0xff]
                  %236 = vst [vmem:[%s222 + $0x30] sm:$0xff] %v235
                  %v237 = vld [vmem:[%s221 + $0x70] sm:$0xff]
                  %238 = vst [vmem:[%s222 + $0x38] sm:$0xff] %v237
                  %v239 = vld [vmem:[%s221 + $0x80] sm:$0xff]
                  %240 = vst [vmem:[%s222 + $0x40] sm:$0xff] %v239
                  %v241 = vld [vmem:[%s221 + $0x90] sm:$0xff]
                  %242 = vst [vmem:[%s222 + $0x48] sm:$0xff] %v241
                  %v243 = vld [vmem:[%s221 + $0xa0] sm:$0xff]
                  %244 = vst [vmem:[%s222 + $0x50] sm:$0xff] %v243
                  %v245 = vld [vmem:[%s221 + $0xb0] sm:$0xff]
                  %246 = vst [vmem:[%s222 + $0x58] sm:$0xff] %v245
                  %v247 = vld [vmem:[%s221 + $0xc0] sm:$0xff]
                  %248 = vst [vmem:[%s222 + $0x60] sm:$0xff] %v247
                  %v249 = vld [vmem:[%s221 + $0xd0] sm:$0xff]
                  %250 = vst [vmem:[%s222 + $0x68] sm:$0xff] %v249
                  %v251 = vld [vmem:[%s221 + $0xe0] sm:$0xff]
                  %252 = vst [vmem:[%s222 + $0x70] sm:$0xff] %v251
                  %v253 = vld [vmem:[%s221 + $0xf0] sm:$0xff]
                  %254 = vst [vmem:[%s222 + $0x78] sm:$0xff] %v253
                $region52: #{_fnn_lm_forward.3} parent=46 // loop_footer
                  %s220 = sadd.s32 1, %s216
                $region53: #{_fnn_lm_forward.3} parent=46 // loop_footer_branch
                  %215 = sbr.rel target = $region49
                $region54: #{_fnn_lm_forward.3} parent=46 // loop_exit
                  _
              $region47: #{_fnn_lm_forward.3} parent=31 // pred_fallthru
                _
              // Predicated region
              $region55: #{_fnn_lm_forward.3} parent=31 // pred_check
                _
              $region56: #{_fnn_lm_forward.3} parent=31 // pred_check_branch
                %256 = sbr.rel target = $region58
              $region57: #{_fnn_lm_forward.3} parent=31 // pred_region
                _
              $region58: #{_fnn_lm_forward.3} parent=31 // pred_fallthru
                _
            $region32: #{_fnn_lm_forward.3} parent=27 // pred_fallthru
              _
            // Predicated region
            $region33: #{_fnn_lm_forward.3} parent=27 // pred_check
              _
            $region34: #{_fnn_lm_forward.3} parent=27 // pred_check_branch
              %171 = sbr.rel target = $region36
            $region35: #{_fnn_lm_forward.3} parent=27 // pred_region
              loop: start=0, step=1, limit=1
              $region37: #{_fnn_lm_forward.3} parent=35 // loop_pre_header
                _
              $region38: #{_fnn_lm_forward.3} parent=35 // loop_header
                %s174 = sphi 0, %s178
                %p175 = scmp.ge.s32.totalorder %s174, 1
                %s179 = sphi %s165, %s165
                %s180 = sphi %s162, %s162
              $region39: #{_fnn_lm_forward.3} parent=35 // loop_header_branch
                %177 = sbr.rel (%p175) target = $region43
              $region40: #{_fnn_lm_forward.3} parent=35 // loop_body
                %v181 = vld [vmem:[%s179] sm:$0xff]
                %182 = vst [vmem:[%s180] sm:$0xff] %v181
                %v183 = vld [vmem:[%s179 + $0x10] sm:$0xff]
                %184 = vst [vmem:[%s180 + $0x8] sm:$0xff] %v183
                %v185 = vld [vmem:[%s179 + $0x20] sm:$0xff]
                %186 = vst [vmem:[%s180 + $0x10] sm:$0xff] %v185
                %v187 = vld [vmem:[%s179 + $0x30] sm:$0xff]
                %188 = vst [vmem:[%s180 + $0x18] sm:$0xff] %v187
                %v189 = vld [vmem:[%s179 + $0x40] sm:$0xff]
                %190 = vst [vmem:[%s180 + $0x20] sm:$0xff] %v189
                %v191 = vld [vmem:[%s179 + $0x50] sm:$0xff]
                %192 = vst [vmem:[%s180 + $0x28] sm:$0xff] %v191
                %v193 = vld [vmem:[%s179 + $0x60] sm:$0xff]
                %194 = vst [vmem:[%s180 + $0x30] sm:$0xff] %v193
                %v195 = vld [vmem:[%s179 + $0x70] sm:$0xff]
                %196 = vst [vmem:[%s180 + $0x38] sm:$0xff] %v195
                %v197 = vld [vmem:[%s179 + $0x80] sm:$0xff]
                %198 = vst [vmem:[%s180 + $0x40] sm:$0xff] %v197
                %v199 = vld [vmem:[%s179 + $0x90] sm:$0xff]
                %200 = vst [vmem:[%s180 + $0x48] sm:$0xff] %v199
                %v201 = vld [vmem:[%s179 + $0xa0] sm:$0xff]
                %202 = vst [vmem:[%s180 + $0x50] sm:$0xff] %v201
                %v203 = vld [vmem:[%s179 + $0xb0] sm:$0xff]
                %204 = vst [vmem:[%s180 + $0x58] sm:$0xff] %v203
                %v205 = vld [vmem:[%s179 + $0xc0] sm:$0xff]
                %206 = vst [vmem:[%s180 + $0x60] sm:$0xff] %v205
                %v207 = vld [vmem:[%s179 + $0xd0] sm:$0xff]
                %208 = vst [vmem:[%s180 + $0x68] sm:$0xff] %v207
                %v209 = vld [vmem:[%s179 + $0xe0] sm:$0xff]
                %210 = vst [vmem:[%s180 + $0x70] sm:$0xff] %v209
                %v211 = vld [vmem:[%s179 + $0xf0] sm:$0xff]
                %212 = vst [vmem:[%s180 + $0x78] sm:$0xff] %v211
              $region41: #{_fnn_lm_forward.3} parent=35 // loop_footer
                %s178 = sadd.s32 1, %s174
              $region42: #{_fnn_lm_forward.3} parent=35 // loop_footer_branch
                %173 = sbr.rel target = $region38
              $region43: #{_fnn_lm_forward.3} parent=35 // loop_exit
                _
            $region36: #{_fnn_lm_forward.3} parent=27 // pred_fallthru
              _
          $region28: #{_fnn_lm_forward.3} parent=23 // pred_fallthru
            _
          %257 = vnop
        $region24: #{_fnn_lm_forward.3} parent=15 // pred_fallthru
          _
        // Predicated region
        $region59: #{_fnn_lm_forward.3} parent=15 // pred_check
          %p258 = pneg %p96
        $region60: #{_fnn_lm_forward.3} parent=15 // pred_check_branch
          %260 = sbr.rel (%p258) target = $region62
        $region61: #{_fnn_lm_forward.3} parent=15 // pred_region
          %s261 = smul.u32 2, %s19
          %p262 = scmp.lt.s32.totalorder %s261, 3
          %s263 = scalar_select %p262, %s261, 3
          %s264 = scalar_lea.vmem %s2, %s263
          %s265 = smul.u32 2, %s19
        $region62: #{_fnn_lm_forward.3} parent=15 // pred_fallthru
          _
      $region16: #{_fnn_lm_forward.3} parent=5 // pred_fallthru
        _
      %p266 = scmp.le.s32.totalorder 1, %s12
      %p267 = scmp.lt.s32.totalorder %s12, 5
      %p268 = pnand %p266, %p267
      %p269 = pneg %p268
      // Predicated region
      $region63: #{_fnn_lm_forward.3} parent=5 // pred_check
        _
      $region64: #{_fnn_lm_forward.3} parent=5 // pred_check_branch
        %271 = sbr.rel (%p268) target = $region66
      $region65: #{_fnn_lm_forward.3} parent=5 // pred_region
        %s272 = ssub.s32 %s12, 1
        %s273 = sand.u32 %s63, 1
        %s274 = sand.u32 %s63, 1
        %s275 = smul.addr %s274, 128
        %s276 = scalar_lea.vmem [#allocation2], %s275
        // Predicated region
        $region67: #{_fnn_lm_forward.3} parent=65 // pred_check
          %p277 = pneg %p76
        $region68: #{_fnn_lm_forward.3} parent=65 // pred_check_branch
          %279 = sbr.rel (%p277) target = $region70
        $region69: #{_fnn_lm_forward.3} parent=65 // pred_region
          _
        $region70: #{_fnn_lm_forward.3} parent=65 // pred_fallthru
          _
        %p280 = scmp.lt.s32.totalorder %s22, 1
        %s281 = scalar_select %p280, %s22, 1
        %s282 = smul.addr %s281, 4
        %s283 = scalar_lea.vmem %s0, %s282
        %p284 = pneg %p50
        %p285 = pneg %p47
        %s286 = sand.u32 %s63, 1
        %s287 = sand.u32 %s63, 1
        %s288 = smul.addr %s287, 128
        %s289 = scalar_lea.vmem [#allocation2], %s288
        %p290 = pneg %p76
        %p291 = pneg %p73
        %s292 = smul.u32 2, %s21
        %p293 = scmp.lt.s32.totalorder %s292, 3
        %s294 = scalar_select %p293, %s292, 3
        %s295 = scalar_lea.vmem %s2, %s294
        %p296 = pneg %p102
        %p297 = pneg %p99
        %p298 = pneg %p130
        %p299 = pneg %p127
        %s300 = sand.u32 %s117, 1
        %s301 = scalar_lea.sflag [#allocation4], %s300
        %s302 = sand.u32 %s117, 1
        %s303 = smul.addr %s302, 8
        %s304 = scalar_lea.vmem [#allocation3], %s303
        %p305 = scmp.lt.s32.totalorder %s22, 1
        %s306 = scalar_select %p305, %s22, 1
        %s307 = smul.addr %s306, 4
        %s308 = scalar_lea.vmem %s0, %s307
        %s309 = smul.u32 2, %s21
        %s310 = smul.u32 2, %s21
        %p311 = scmp.lt.s32.totalorder %s310, 3
        %s312 = scalar_select %p311, %s310, 3
        %s313 = scalar_lea.vmem %s2, %s312
        %s314 = smul.u32 2, %s21
        %s315 = smul.u32 2, %s21
        %v317 = vld [vmem:[%s308] sm:$0xf]
        %v318 = vld [vmem:[%s276] sm:$0xff]
        %v319 = vld [vmem:[%s276 + $0x8] sm:$0xff]
        %v320 = vld [vmem:[%s276 + $0x10] sm:$0xff]
        %v321 = vld [vmem:[%s276 + $0x18] sm:$0xff]
        %v322 = vld [vmem:[%s276 + $0x20] sm:$0xff]
        %v323 = vld [vmem:[%s276 + $0x28] sm:$0xff]
        %v324 = vld [vmem:[%s276 + $0x30] sm:$0xff]
        %v325 = vld [vmem:[%s276 + $0x38] sm:$0xff]
        %v326 = vld [vmem:[%s276 + $0x40] sm:$0xff]
        %v327 = vld [vmem:[%s276 + $0x48] sm:$0xff]
        %v328 = vld [vmem:[%s276 + $0x50] sm:$0xff]
        %v329 = vld [vmem:[%s276 + $0x58] sm:$0xff]
        %v330 = vld [vmem:[%s276 + $0x60] sm:$0xff]
        %v331 = vld [vmem:[%s276 + $0x68] sm:$0xff]
        %v332 = vld [vmem:[%s276 + $0x70] sm:$0xff]
        %v333 = vld [vmem:[%s276 + $0x78] sm:$0xff]
        %v334 = vld [vmem:[%s313] sm:$0x3]
        %v336 = vlaneseq
        %v337 = vshrl.u32 %v336, 7
        %v338 = vsub.s32 0, %v337
        %v339 = vrot.slane %v334, %v338
        %v340 = vlaneseq
        %v341 = vshrl.u32 %v340, 7
        %v342 = vsub.s32 1, %v341
        %v343 = vrot.slane %v334, %v342
        %v362 = vunpack.c.l.b16 %v318
        %v363 = vunpack.c.h.b16 %v318
        %v364 = vunpack.c.l.b16 %v319
        %v365 = vunpack.c.h.b16 %v319
        %v366 = vunpack.c.l.b16 %v320
        %v367 = vunpack.c.h.b16 %v320
        %v368 = vunpack.c.l.b16 %v321
        %v369 = vunpack.c.h.b16 %v321
        %v370 = vunpack.c.l.b16 %v322
        %v371 = vunpack.c.h.b16 %v322
        %v372 = vunpack.c.l.b16 %v323
        %v373 = vunpack.c.h.b16 %v323
        %v374 = vunpack.c.l.b16 %v324
        %v375 = vunpack.c.h.b16 %v324
        %v376 = vunpack.c.l.b16 %v325
        %v377 = vunpack.c.h.b16 %v325
        %v378 = vunpack.c.l.b16 %v326
        %v379 = vunpack.c.h.b16 %v326
        %v380 = vunpack.c.l.b16 %v327
        %v381 = vunpack.c.h.b16 %v327
        %v382 = vunpack.c.l.b16 %v328
        %v383 = vunpack.c.h.b16 %v328
        %v384 = vunpack.c.l.b16 %v329
        %v385 = vunpack.c.h.b16 %v329
        %v386 = vunpack.c.l.b16 %v330
        %v387 = vunpack.c.h.b16 %v330
        %v388 = vunpack.c.l.b16 %v331
        %v389 = vunpack.c.h.b16 %v331
        %v390 = vunpack.c.l.b16 %v332
        %v391 = vunpack.c.h.b16 %v332
        %v392 = vunpack.c.l.b16 %v333
        %v393 = vunpack.c.h.b16 %v333
        %v394 = vpack.c.b16 %v364, %v362
        %v395 = vpack.c.b16 %v365, %v363
        %v396 = vpack.c.b16 %v368, %v366
        %v397 = vpack.c.b16 %v369, %v367
        %v398 = vpack.c.b16 %v372, %v370
        %v399 = vpack.c.b16 %v373, %v371
        %v400 = vpack.c.b16 %v376, %v374
        %v401 = vpack.c.b16 %v377, %v375
        %v402 = vpack.c.b16 %v380, %v378
        %v403 = vpack.c.b16 %v381, %v379
        %v404 = vpack.c.b16 %v384, %v382
        %v405 = vpack.c.b16 %v385, %v383
        %v406 = vpack.c.b16 %v388, %v386
        %v407 = vpack.c.b16 %v389, %v387
        %v408 = vpack.c.b16 %v392, %v390
        %v409 = vpack.c.b16 %v393, %v391
        %426 = vmatprep.subr.bf16.mxu0 %v395
        %427 = vmatpush1.bf16.msra.mxu0 %v394
        %428 = vmatprep.subr.bf16.mxu0 %v397
        %429 = vmatpush1.bf16.msra.mxu0 %v396
        %430 = vmatprep.subr.bf16.mxu0 %v399
        %431 = vmatpush1.bf16.msra.mxu0 %v398
        %432 = vmatprep.subr.bf16.mxu0 %v401
        %433 = vmatpush1.bf16.msra.mxu0 %v400
        %434 = vmatprep.subr.bf16.mxu0 %v403
        %435 = vmatpush1.bf16.msra.mxu0 %v402
        %436 = vmatprep.subr.bf16.mxu0 %v405
        %437 = vmatpush1.bf16.msra.mxu0 %v404
        %438 = vmatprep.subr.bf16.mxu0 %v407
        %439 = vmatpush1.bf16.msra.mxu0 %v406
        %440 = vmatprep.subr.bf16.mxu0 %v409
        %441 = vmatpush1.bf16.msra.mxu0 %v408
        %442 = vmatprep.subr.bf16.mxu0 0
        %443 = vmatpush1.bf16.msra.mxu0 0
        %444 = vmatprep.subr.bf16.mxu0 0
        %445 = vmatpush1.bf16.msra.mxu0 0
        %446 = vmatprep.subr.bf16.mxu0 0
        %447 = vmatpush1.bf16.msra.mxu0 0
        %448 = vmatprep.subr.bf16.mxu0 0
        %449 = vmatpush1.bf16.msra.mxu0 0
        %450 = vmatprep.subr.bf16.mxu0 0
        %451 = vmatpush1.bf16.msra.mxu0 0
        %452 = vmatprep.subr.bf16.mxu0 0
        %453 = vmatpush1.bf16.msra.mxu0 0
        %454 = vmatprep.subr.bf16.mxu0 0
        %455 = vmatpush1.bf16.msra.mxu0 0
        %456 = vmatprep.subr.bf16.mxu0 0
        %457 = vmatpush1.bf16.msra.mxu0 0
        %458 = vmatprep.mubr.bf16.mxu0 0
        %459 = vmatmul.mubr.bf16.gmra.mrb[0].mxu0 %v317
        %v460 = vpop.f32.mrb[0].mxu0
        %v461 = vadd.f32 %v339, %v460
        %v462 = vpop.f32.mrb[0].mxu0
        %v463 = vadd.f32 %v343, %v462
        %v464 = vpop.f32.mrb[0].mxu0
        %v465 = vpop.f32.mrb[0].mxu0
        %466 = vdwg.mxu0
        %v467 = vpack.c.bf16 %v461, %v461
        %v468 = vpack.c.bf16 %v463, %v463
        %v471 = vunpack.c.l.b16 %v467
        %v472 = vunpack.c.l.b16 %v468
        %v473 = vpack.c.b16 %v472, %v471
        %475 = vst [vmem:[%s304] sm:$0xff] %v473
        %s476 = sand.u32 %s117, 1
        %s477 = scalar_lea.sflag [#allocation4], %s476
        %s478 = sand.u32 %s117, 1
        %s479 = smul.addr %s478, 8
        %s480 = scalar_lea.vmem [#allocation3], %s479
        // Predicated region
        $region71: #{_fnn_lm_forward.3} parent=65 // pred_check
          %p481 = pneg %p127
        $region72: #{_fnn_lm_forward.3} parent=65 // pred_check_branch
          %483 = sbr.rel (%p481) target = $region74
        $region73: #{_fnn_lm_forward.3} parent=65 // pred_region
          %s484 = smul.u32 2, %s21
          %s486 = ssub.s32 128, 128
          %487 = vsyncadd %s477, %s486
          %s488 = smul.addr %s22, 4
          %s489 = sadd.s32 %s484, %s488
          %s490 = smul.addr %s489, 64
          %s491 = scalar_lea.hbm %s3, %s490
          %s493 = sshll.u32 %s480, 4
          %s494 = int_to_ptr.vmem [resolvable:$true] %s493
          %496 = dma.vmem_to_hbm [thread:$0]  %s494, 128, %s491, %s477
        $region74: #{_fnn_lm_forward.3} parent=65 // pred_fallthru
          _
      $region66: #{_fnn_lm_forward.3} parent=5 // pred_fallthru
        _
      %p497 = scmp.le.s32.totalorder 2, %s12
      // Predicated region
      $region75: #{_fnn_lm_forward.3} parent=5 // pred_check
        %p498 = pneg %p497
      $region76: #{_fnn_lm_forward.3} parent=5 // pred_check_branch
        %500 = sbr.rel (%p498) target = $region78
      $region77: #{_fnn_lm_forward.3} parent=5 // pred_region
        %s501 = ssub.s32 %s12, 2
        // Predicated region
        $region79: #{_fnn_lm_forward.3} parent=77 // pred_check
          %p502 = pneg %p133
        $region80: #{_fnn_lm_forward.3} parent=77 // pred_check_branch
          %504 = sbr.rel (%p502) target = $region82
        $region81: #{_fnn_lm_forward.3} parent=77 // pred_region
          %s505 = sand.u32 %s118, 1
          %s506 = scalar_lea.sflag [#allocation4], %s505
          %s507 = sand.u32 %s118, 1
          %s508 = smul.addr %s507, 8
          %s509 = scalar_lea.vmem [#allocation3], %s508
          %510 = dma.done %s506, 128
        $region82: #{_fnn_lm_forward.3} parent=77 // pred_fallthru
          _
      $region78: #{_fnn_lm_forward.3} parent=5 // pred_fallthru
        _
    $region6: #{_fnn_lm_forward.3} parent=1 // loop_footer
      %s16 = sadd.s32 1, %s12
    $region7: #{_fnn_lm_forward.3} parent=1 // loop_footer_branch
      %11 = sbr.rel target = $region3
    $region8: #{_fnn_lm_forward.3} parent=1 // loop_exit
      _
    %511 = vsyncpa [#allocation4], 1
    %s512 = scalar_lea.sflag [#allocation4], 1
    %513 = vsyncpa %s512, 1

// kernel: _fnn_lm_forward.2
$region0: #{_fnn_lm_forward.2}
  #allocation0 [shape = 'u32[]', space=smem, size = 0x4, offset = 0x4, fixed_abs, tag = 'smem constant byte address 0x4 - core index']
  #allocation1 [shape = 'u32[144,128]{1,0:T(1,128)}', space=vmem, size = 0x12000, scoped, tag = 'internal scratch']
  %s0 = inlined_call_operand.vmem [shape: bf16[16,128], index: 0, kind: input, shape index: {}]
  %s1 = inlined_call_operand.vmem [shape: bf16[128,128], index: 1, kind: input, shape index: {}]
  %s2 = inlined_call_operand.vmem [shape: f32[1,128], index: 2, kind: input, shape index: {}]
  %s3 = inlined_call_operand.vmem [shape: bf16[128,512], index: 3, kind: input, shape index: {}]
  %s4 = inlined_call_operand.vmem [shape: f32[1,512], index: 4, kind: input, shape index: {}]
  %s5 = inlined_call_operand.vmem [shape: bf16[512,128], index: 5, kind: input, shape index: {}]
  %s6 = inlined_call_operand.vmem [shape: f32[1,128], index: 6, kind: input, shape index: {}]
  %s7 = inlined_call_operand.vmem [shape: bf16[16,128], index: 7, kind: output, shape index: {}]
  %s8 = sld [smem:[#allocation0]]
  $region61: #{_fnn_lm_forward.2} parent=0
    _
  %s10 = ssub.s32 1, %s8
  %s11 = scalar_select 0, %s10, %s8
  loop: start=0, step=1, limit=4
  $region2: #{_fnn_lm_forward.2} parent=0 // loop_pre_header
    _
  $region3: #{_fnn_lm_forward.2} parent=0 // loop_header
    %s13 = sphi 0, %s17
    %p14 = scmp.ge.s32.totalorder %s13, 4
    %s23 = sphi 0, %s25
    %s26 = sphi 0, %s23
    %s27 = sphi 0, %s26
    %s43 = sphi 0, %s27
    %s47 = sphi 0, %s47
    %s49 = sphi 0, %s47
    %s50 = sphi 0, %s49
    %s64 = sphi 0, %s50
    %s68 = sphi 0, %s68
    %s70 = sphi 0, %s68
    %s71 = sphi 0, %s70
    %s85 = sphi 0, %s71
    %s89 = sphi 0, %s89
    %s91 = sphi 0, %s89
    %s92 = sphi 0, %s91
    %s106 = sphi 0, %s92
    %s110 = sphi 0, %s110
    %s112 = sphi 0, %s110
    %s113 = sphi 0, %s112
    %s127 = sphi 0, %s113
    %s131 = sphi 0, %s131
    %s133 = sphi 0, %s131
    %s134 = sphi 0, %s133
    %s148 = sphi 0, %s134
    %s152 = sphi 0, %s152
    %s154 = sphi 0, %s152
    %s155 = sphi 0, %s154
    %s169 = sphi 0, %s155
    %s175 = sphi 0, %s177
    %s178 = sphi 0, %s175
    %s179 = sphi 0, %s178
    %s195 = sphi 0, %s179
  $region4: #{_fnn_lm_forward.2} parent=0 // loop_header_branch
    %16 = sbr.rel (%p14) target = $region8
  $region5: #{_fnn_lm_forward.2} parent=0 // loop_body
    %s18 = ssub.s32 %s13, 1
    %s19 = ssub.s32 %s13, 2
    %s20 = sadd.s32 %s13, 1
    %s21 = ssub.s32 %s13, %s20
    %p22 = scmp.eq.s32.totalorder %s21, 0
    %s24 = sadd.s32 %s23, 1
    %s25 = scalar_select %p22, %s23, %s24
    %p28 = pneg %p22
    %p29 = scmp.eq.s32.totalorder %s13, 1
    %p30 = por %p28, %p29
    %p31 = scmp.ne.s32.totalorder %s23, %s26
    %p32 = scmp.eq.s32.totalorder %s13, 0
    %p33 = por %p31, %p32
    %p34 = scmp.ne.s32.totalorder %s23, %s26
    %p35 = scmp.eq.s32.totalorder %s18, 1
    %p36 = por %p34, %p35
    %p37 = scmp.ne.s32.totalorder %s26, %s27
    %p38 = scmp.eq.s32.totalorder %s18, 0
    %p39 = por %p37, %p38
    %p40 = scmp.ne.s32.totalorder %s26, %s27
    %p41 = scmp.eq.s32.totalorder %s19, 1
    %p42 = por %p40, %p41
    %p44 = scmp.ne.s32.totalorder %s27, %s43
    %p45 = scmp.eq.s32.totalorder %s19, 0
    %p46 = por %p44, %p45
    %s48 = sadd.s32 %s47, 1
    %p51 = scmp.eq.s32.totalorder %s13, 1
    %p52 = scmp.ne.s32.totalorder %s47, %s49
    %p53 = scmp.eq.s32.totalorder %s13, 0
    %p54 = por %p52, %p53
    %p55 = scmp.ne.s32.totalorder %s47, %s49
    %p56 = scmp.eq.s32.totalorder %s18, 1
    %p57 = por %p55, %p56
    %p58 = scmp.ne.s32.totalorder %s49, %s50
    %p59 = scmp.eq.s32.totalorder %s18, 0
    %p60 = por %p58, %p59
    %p61 = scmp.ne.s32.totalorder %s49, %s50
    %p62 = scmp.eq.s32.totalorder %s19, 1
    %p63 = por %p61, %p62
    %p65 = scmp.ne.s32.totalorder %s50, %s64
    %p66 = scmp.eq.s32.totalorder %s19, 0
    %p67 = por %p65, %p66
    %s69 = sadd.s32 %s68, 1
    %p72 = scmp.eq.s32.totalorder %s13, 1
    %p73 = scmp.ne.s32.totalorder %s68, %s70
    %p74 = scmp.eq.s32.totalorder %s13, 0
    %p75 = por %p73, %p74
    %p76 = scmp.ne.s32.totalorder %s68, %s70
    %p77 = scmp.eq.s32.totalorder %s18, 1
    %p78 = por %p76, %p77
    %p79 = scmp.ne.s32.totalorder %s70, %s71
    %p80 = scmp.eq.s32.totalorder %s18, 0
    %p81 = por %p79, %p80
    %p82 = scmp.ne.s32.totalorder %s70, %s71
    %p83 = scmp.eq.s32.totalorder %s19, 1
    %p84 = por %p82, %p83
    %p86 = scmp.ne.s32.totalorder %s71, %s85
    %p87 = scmp.eq.s32.totalorder %s19, 0
    %p88 = por %p86, %p87
    %s90 = sadd.s32 %s89, 1
    %p93 = scmp.eq.s32.totalorder %s13, 1
    %p94 = scmp.ne.s32.totalorder %s89, %s91
    %p95 = scmp.eq.s32.totalorder %s13, 0
    %p96 = por %p94, %p95
    %p97 = scmp.ne.s32.totalorder %s89, %s91
    %p98 = scmp.eq.s32.totalorder %s18, 1
    %p99 = por %p97, %p98
    %p100 = scmp.ne.s32.totalorder %s91, %s92
    %p101 = scmp.eq.s32.totalorder %s18, 0
    %p102 = por %p100, %p101
    %p103 = scmp.ne.s32.totalorder %s91, %s92
    %p104 = scmp.eq.s32.totalorder %s19, 1
    %p105 = por %p103, %p104
    %p107 = scmp.ne.s32.totalorder %s92, %s106
    %p108 = scmp.eq.s32.totalorder %s19, 0
    %p109 = por %p107, %p108
    %s111 = sadd.s32 %s110, 1
    %p114 = scmp.eq.s32.totalorder %s13, 1
    %p115 = scmp.ne.s32.totalorder %s110, %s112
    %p116 = scmp.eq.s32.totalorder %s13, 0
    %p117 = por %p115, %p116
    %p118 = scmp.ne.s32.totalorder %s110, %s112
    %p119 = scmp.eq.s32.totalorder %s18, 1
    %p120 = por %p118, %p119
    %p121 = scmp.ne.s32.totalorder %s112, %s113
    %p122 = scmp.eq.s32.totalorder %s18, 0
    %p123 = por %p121, %p122
    %p124 = scmp.ne.s32.totalorder %s112, %s113
    %p125 = scmp.eq.s32.totalorder %s19, 1
    %p126 = por %p124, %p125
    %p128 = scmp.ne.s32.totalorder %s113, %s127
    %p129 = scmp.eq.s32.totalorder %s19, 0
    %p130 = por %p128, %p129
    %s132 = sadd.s32 %s131, 1
    %p135 = scmp.eq.s32.totalorder %s13, 1
    %p136 = scmp.ne.s32.totalorder %s131, %s133
    %p137 = scmp.eq.s32.totalorder %s13, 0
    %p138 = por %p136, %p137
    %p139 = scmp.ne.s32.totalorder %s131, %s133
    %p140 = scmp.eq.s32.totalorder %s18, 1
    %p141 = por %p139, %p140
    %p142 = scmp.ne.s32.totalorder %s133, %s134
    %p143 = scmp.eq.s32.totalorder %s18, 0
    %p144 = por %p142, %p143
    %p145 = scmp.ne.s32.totalorder %s133, %s134
    %p146 = scmp.eq.s32.totalorder %s19, 1
    %p147 = por %p145, %p146
    %p149 = scmp.ne.s32.totalorder %s134, %s148
    %p150 = scmp.eq.s32.totalorder %s19, 0
    %p151 = por %p149, %p150
    %s153 = sadd.s32 %s152, 1
    %p156 = scmp.eq.s32.totalorder %s13, 1
    %p157 = scmp.ne.s32.totalorder %s152, %s154
    %p158 = scmp.eq.s32.totalorder %s13, 0
    %p159 = por %p157, %p158
    %p160 = scmp.ne.s32.totalorder %s152, %s154
    %p161 = scmp.eq.s32.totalorder %s18, 1
    %p162 = por %p160, %p161
    %p163 = scmp.ne.s32.totalorder %s154, %s155
    %p164 = scmp.eq.s32.totalorder %s18, 0
    %p165 = por %p163, %p164
    %p166 = scmp.ne.s32.totalorder %s154, %s155
    %p167 = scmp.eq.s32.totalorder %s19, 1
    %p168 = por %p166, %p167
    %p170 = scmp.ne.s32.totalorder %s155, %s169
    %p171 = scmp.eq.s32.totalorder %s19, 0
    %p172 = por %p170, %p171
    %s173 = ssub.s32 %s13, %s20
    %p174 = scmp.eq.s32.totalorder %s173, 0
    %s176 = sadd.s32 %s175, 1
    %s177 = scalar_select %p174, %s175, %s176
    %p180 = pneg %p174
    %p181 = scmp.eq.s32.totalorder %s13, 1
    %p182 = por %p180, %p181
    %p183 = scmp.ne.s32.totalorder %s175, %s178
    %p184 = scmp.eq.s32.totalorder %s13, 0
    %p185 = por %p183, %p184
    %p186 = scmp.ne.s32.totalorder %s175, %s178
    %p187 = scmp.eq.s32.totalorder %s18, 1
    %p188 = por %p186, %p187
    %p189 = scmp.ne.s32.totalorder %s178, %s179
    %p190 = scmp.eq.s32.totalorder %s18, 0
    %p191 = por %p189, %p190
    %p192 = scmp.ne.s32.totalorder %s178, %s179
    %p193 = scmp.eq.s32.totalorder %s19, 1
    %p194 = por %p192, %p193
    %p196 = scmp.ne.s32.totalorder %s179, %s195
    %p197 = scmp.eq.s32.totalorder %s19, 0
    %p198 = por %p196, %p197
    %p199 = scmp.le.s32.totalorder 1, %s13
    %p200 = scmp.lt.s32.totalorder %s13, 3
    %p201 = pnand %p199, %p200
    %p202 = pneg %p201
    // Predicated region
    $region9: #{_fnn_lm_forward.2} parent=5 // pred_check
      _
    $region10: #{_fnn_lm_forward.2} parent=5 // pred_check_branch
      %204 = sbr.rel (%p201) target = $region12
    $region11: #{_fnn_lm_forward.2} parent=5 // pred_region
      %s205 = ssub.s32 %s13, 1
      // Predicated region
      $region13: #{_fnn_lm_forward.2} parent=11 // pred_check
        %p206 = pneg %p60
      $region14: #{_fnn_lm_forward.2} parent=11 // pred_check_branch
        %208 = sbr.rel (%p206) target = $region16
      $region15: #{_fnn_lm_forward.2} parent=11 // pred_region
        _
      $region16: #{_fnn_lm_forward.2} parent=11 // pred_fallthru
        _
      // Predicated region
      $region17: #{_fnn_lm_forward.2} parent=11 // pred_check
        %p209 = pneg %p81
      $region18: #{_fnn_lm_forward.2} parent=11 // pred_check_branch
        %211 = sbr.rel (%p209) target = $region20
      $region19: #{_fnn_lm_forward.2} parent=11 // pred_region
        _
      $region20: #{_fnn_lm_forward.2} parent=11 // pred_fallthru
        _
      // Predicated region
      $region21: #{_fnn_lm_forward.2} parent=11 // pred_check
        %p212 = pneg %p102
      $region22: #{_fnn_lm_forward.2} parent=11 // pred_check_branch
        %214 = sbr.rel (%p212) target = $region24
      $region23: #{_fnn_lm_forward.2} parent=11 // pred_region
        _
      $region24: #{_fnn_lm_forward.2} parent=11 // pred_fallthru
        _
      // Predicated region
      $region25: #{_fnn_lm_forward.2} parent=11 // pred_check
        %p215 = pneg %p123
      $region26: #{_fnn_lm_forward.2} parent=11 // pred_check_branch
        %217 = sbr.rel (%p215) target = $region28
      $region27: #{_fnn_lm_forward.2} parent=11 // pred_region
        _
      $region28: #{_fnn_lm_forward.2} parent=11 // pred_fallthru
        _
      // Predicated region
      $region29: #{_fnn_lm_forward.2} parent=11 // pred_check
        %p218 = pneg %p144
      $region30: #{_fnn_lm_forward.2} parent=11 // pred_check_branch
        %220 = sbr.rel (%p218) target = $region32
      $region31: #{_fnn_lm_forward.2} parent=11 // pred_region
        _
      $region32: #{_fnn_lm_forward.2} parent=11 // pred_fallthru
        _
      // Predicated region
      $region33: #{_fnn_lm_forward.2} parent=11 // pred_check
        %p221 = pneg %p165
      $region34: #{_fnn_lm_forward.2} parent=11 // pred_check_branch
        %223 = sbr.rel (%p221) target = $region36
      $region35: #{_fnn_lm_forward.2} parent=11 // pred_region
        _
      $region36: #{_fnn_lm_forward.2} parent=11 // pred_fallthru
        _
    $region12: #{_fnn_lm_forward.2} parent=5 // pred_fallthru
      _
    %p224 = scmp.lt.s32.totalorder %s13, 2
    // Predicated region
    $region37: #{_fnn_lm_forward.2} parent=5 // pred_check
      %p225 = pneg %p224
    $region38: #{_fnn_lm_forward.2} parent=5 // pred_check_branch
      %227 = sbr.rel (%p225) target = $region40
    $region39: #{_fnn_lm_forward.2} parent=5 // pred_region
      // Predicated region
      $region41: #{_fnn_lm_forward.2} parent=39 // pred_check
        %p228 = pneg %p33
      $region42: #{_fnn_lm_forward.2} parent=39 // pred_check_branch
        %230 = sbr.rel (%p228) target = $region44
      $region43: #{_fnn_lm_forward.2} parent=39 // pred_region
        %p231 = scmp.lt.s32.totalorder %s13, 1
        %s232 = scalar_select %p231, %s13, 1
        %s233 = smul.addr %s232, 4
        %s234 = scalar_lea.vmem %s0, %s233
      $region44: #{_fnn_lm_forward.2} parent=39 // pred_fallthru
        _
    $region40: #{_fnn_lm_forward.2} parent=5 // pred_fallthru
      _
    %p235 = scmp.le.s32.totalorder 1, %s13
    %p236 = scmp.lt.s32.totalorder %s13, 3
    %p237 = pnand %p235, %p236
    %p238 = pneg %p237
    // Predicated region
    $region45: #{_fnn_lm_forward.2} parent=5 // pred_check
      _
    $region46: #{_fnn_lm_forward.2} parent=5 // pred_check_branch
      %240 = sbr.rel (%p237) target = $region48
    $region47: #{_fnn_lm_forward.2} parent=5 // pred_region
      %s241 = ssub.s32 %s13, 1
      %p242 = scmp.lt.s32.totalorder %s18, 1
      %s243 = scalar_select %p242, %s18, 1
      %s244 = smul.addr %s243, 4
      %s245 = scalar_lea.vmem %s0, %s244
      %p246 = pneg %p39
      %p247 = pneg %p36
      %p248 = pneg %p60
      %p249 = pneg %p57
      %p250 = pneg %p81
      %p251 = pneg %p78
      %p252 = pneg %p102
      %p253 = pneg %p99
      %p254 = pneg %p123
      %p255 = pneg %p120
      %p256 = pneg %p144
      %p257 = pneg %p141
      %p258 = pneg %p165
      %p259 = pneg %p162
      %p260 = pneg %p191
      %p261 = pneg %p188
      %p262 = scmp.lt.s32.totalorder %s18, 1
      %s263 = scalar_select %p262, %s18, 1
      %s264 = smul.addr %s263, 4
      %s265 = scalar_lea.vmem %s7, %s264
      %p266 = scmp.lt.s32.totalorder %s18, 1
      %s267 = scalar_select %p266, %s18, 1
      %s268 = smul.addr %s267, 4
      %s269 = scalar_lea.vmem %s0, %s268
      %p270 = scmp.lt.s32.totalorder %s18, 1
      %s271 = scalar_select %p270, %s18, 1
      %s272 = smul.addr %s271, 4
      %s273 = scalar_lea.vmem %s7, %s272
      %v275 = vld [vmem:[%s269] sm:$0xf]
      %v276 = vld [vmem:[%s1] sm:$0xf]
      %v277 = vld [vmem:[%s1 + $0x4] sm:$0xf]
      %v278 = vld [vmem:[%s1 + $0x8] sm:$0xf]
      %v279 = vld [vmem:[%s1 + $0xc] sm:$0xf]
      %v280 = vld [vmem:[%s1 + $0x10] sm:$0xf]
      %v281 = vld [vmem:[%s1 + $0x14] sm:$0xf]
      %v282 = vld [vmem:[%s1 + $0x18] sm:$0xf]
      %v283 = vld [vmem:[%s1 + $0x1c] sm:$0xf]
      %v284 = vld [vmem:[%s1 + $0x20] sm:$0xf]
      %v285 = vld [vmem:[%s1 + $0x24] sm:$0xf]
      %v286 = vld [vmem:[%s1 + $0x28] sm:$0xf]
      %v287 = vld [vmem:[%s1 + $0x2c] sm:$0xf]
      %v288 = vld [vmem:[%s1 + $0x30] sm:$0xf]
      %v289 = vld [vmem:[%s1 + $0x34] sm:$0xf]
      %v290 = vld [vmem:[%s1 + $0x38] sm:$0xf]
      %v291 = vld [vmem:[%s1 + $0x3c] sm:$0xf]
      %v292 = vld [vmem:[%s2] sm:$0x1]
      %v294 = vlaneseq
      %v295 = vshrl.u32 %v294, 7
      %v296 = vsub.s32 0, %v295
      %v297 = vrot.slane %v292, %v296
      %v315 = vunpack.c.l.b16 %v276
      %v316 = vunpack.c.l.b16 %v277
      %v317 = vunpack.c.l.b16 %v278
      %v318 = vunpack.c.l.b16 %v279
      %v319 = vunpack.c.l.b16 %v280
      %v320 = vunpack.c.l.b16 %v281
      %v321 = vunpack.c.l.b16 %v282
      %v322 = vunpack.c.l.b16 %v283
      %v323 = vunpack.c.l.b16 %v284
      %v324 = vunpack.c.l.b16 %v285
      %v325 = vunpack.c.l.b16 %v286
      %v326 = vunpack.c.l.b16 %v287
      %v327 = vunpack.c.l.b16 %v288
      %v328 = vunpack.c.l.b16 %v289
      %v329 = vunpack.c.l.b16 %v290
      %v330 = vunpack.c.l.b16 %v291
      %v331 = vpack.c.b16 %v316, %v315
      %v332 = vpack.c.b16 %v318, %v317
      %v333 = vpack.c.b16 %v320, %v319
      %v334 = vpack.c.b16 %v322, %v321
      %v335 = vpack.c.b16 %v324, %v323
      %v336 = vpack.c.b16 %v326, %v325
      %v337 = vpack.c.b16 %v328, %v327
      %v338 = vpack.c.b16 %v330, %v329
      %347 = vmatprep.subr.bf16.mxu0 0
      %348 = vmatpush1.bf16.msra.mxu0 %v331
      %349 = vmatprep.subr.bf16.mxu0 0
      %350 = vmatpush1.bf16.msra.mxu0 %v332
      %351 = vmatprep.subr.bf16.mxu0 0
      %352 = vmatpush1.bf16.msra.mxu0 %v333
      %353 = vmatprep.subr.bf16.mxu0 0
      %354 = vmatpush1.bf16.msra.mxu0 %v334
      %355 = vmatprep.subr.bf16.mxu0 0
      %356 = vmatpush1.bf16.msra.mxu0 %v335
      %357 = vmatprep.subr.bf16.mxu0 0
      %358 = vmatpush1.bf16.msra.mxu0 %v336
      %359 = vmatprep.subr.bf16.mxu0 0
      %360 = vmatpush1.bf16.msra.mxu0 %v337
      %361 = vmatprep.subr.bf16.mxu0 0
      %362 = vmatpush1.bf16.msra.mxu0 %v338
      %363 = vmatprep.subr.bf16.mxu0 0
      %364 = vmatpush1.bf16.msra.mxu0 0
      %365 = vmatprep.subr.bf16.mxu0 0
      %366 = vmatpush1.bf16.msra.mxu0 0
      %367 = vmatprep.subr.bf16.mxu0 0
      %368 = vmatpush1.bf16.msra.mxu0 0
      %369 = vmatprep.subr.bf16.mxu0 0
      %370 = vmatpush1.bf16.msra.mxu0 0
      %371 = vmatprep.subr.bf16.mxu0 0
      %372 = vmatpush1.bf16.msra.mxu0 0
      %373 = vmatprep.subr.bf16.mxu0 0
      %374 = vmatpush1.bf16.msra.mxu0 0
      %375 = vmatprep.subr.bf16.mxu0 0
      %376 = vmatpush1.bf16.msra.mxu0 0
      %377 = vmatprep.subr.bf16.mxu0 0
      %378 = vmatpush1.bf16.msra.mxu0 0
      %379 = vmatprep.mubr.bf16.mxu0 0
      %380 = vmatmul.mubr.bf16.gmra.mrb[0].mxu0 %v275
      %v381 = vpop.f32.mrb[0].mxu0
      %v382 = vadd.f32 %v297, %v381
      %v383 = vpop.f32.mrb[0].mxu0
      %v384 = vpop.f32.mrb[0].mxu0
      %v385 = vpop.f32.mrb[0].mxu0
      %386 = vdwg.mxu0
      %v387 = vtanh.pop %v382
      %v388 = vpack.c.bf16 %v387, %v387
      %v389 = vld [vmem:[%s3] sm:$0xff]
      %v390 = vld [vmem:[%s3 + $0x8] sm:$0xff]
      %v391 = vld [vmem:[%s3 + $0x10] sm:$0xff]
      %v392 = vld [vmem:[%s3 + $0x18] sm:$0xff]
      %v393 = vld [vmem:[%s3 + $0x20] sm:$0xff]
      %v394 = vld [vmem:[%s3 + $0x28] sm:$0xff]
      %v395 = vld [vmem:[%s3 + $0x30] sm:$0xff]
      %v396 = vld [vmem:[%s3 + $0x38] sm:$0xff]
      %v397 = vld [vmem:[%s3 + $0x40] sm:$0xff]
      %v398 = vld [vmem:[%s3 + $0x48] sm:$0xff]
      %v399 = vld [vmem:[%s3 + $0x50] sm:$0xff]
      %v400 = vld [vmem:[%s3 + $0x58] sm:$0xff]
      %v401 = vld [vmem:[%s3 + $0x60] sm:$0xff]
      %v402 = vld [vmem:[%s3 + $0x68] sm:$0xff]
      %v403 = vld [vmem:[%s3 + $0x70] sm:$0xff]
      %v404 = vld [vmem:[%s3 + $0x78] sm:$0xff]
      %v405 = vld [vmem:[%s3 + $0x80] sm:$0xff]
      %v406 = vld [vmem:[%s3 + $0x88] sm:$0xff]
      %v407 = vld [vmem:[%s3 + $0x90] sm:$0xff]
      %v408 = vld [vmem:[%s3 + $0x98] sm:$0xff]
      %v409 = vld [vmem:[%s3 + $0xa0] sm:$0xff]
      %v410 = vld [vmem:[%s3 + $0xa8] sm:$0xff]
      %v411 = vld [vmem:[%s3 + $0xb0] sm:$0xff]
      %v412 = vld [vmem:[%s3 + $0xb8] sm:$0xff]
      %v413 = vld [vmem:[%s3 + $0xc0] sm:$0xff]
      %v414 = vld [vmem:[%s3 + $0xc8] sm:$0xff]
      %v415 = vld [vmem:[%s3 + $0xd0] sm:$0xff]
      %v416 = vld [vmem:[%s3 + $0xd8] sm:$0xff]
      %v417 = vld [vmem:[%s3 + $0xe0] sm:$0xff]
      %v418 = vld [vmem:[%s3 + $0xe8] sm:$0xff]
      %v419 = vld [vmem:[%s3 + $0xf0] sm:$0xff]
      %v420 = vld [vmem:[%s3 + $0xf8] sm:$0xff]
      %v421 = vld [vmem:[%s4] sm:$0xf]
      %v423 = vlaneseq
      %v424 = vshrl.u32 %v423, 7
      %v425 = vsub.s32 0, %v424
      %v426 = vrot.slane %v421, %v425
      %v427 = vlaneseq
      %v428 = vshrl.u32 %v427, 7
      %v429 = vsub.s32 1, %v428
      %v430 = vrot.slane %v421, %v429
      %v431 = vlaneseq
      %v432 = vshrl.u32 %v431, 7
      %v433 = vsub.s32 2, %v432
      %v434 = vrot.slane %v421, %v433
      %v435 = vlaneseq
      %v436 = vshrl.u32 %v435, 7
      %v437 = vsub.s32 3, %v436
      %v438 = vrot.slane %v421, %v437
      %v475 = vunpack.c.l.b16 %v389
      %v476 = vunpack.c.h.b16 %v389
      %v477 = vunpack.c.l.b16 %v390
      %v478 = vunpack.c.h.b16 %v390
      %v479 = vunpack.c.l.b16 %v391
      %v480 = vunpack.c.h.b16 %v391
      %v481 = vunpack.c.l.b16 %v392
      %v482 = vunpack.c.h.b16 %v392
      %v483 = vunpack.c.l.b16 %v393
      %v484 = vunpack.c.h.b16 %v393
      %v485 = vunpack.c.l.b16 %v394
      %v486 = vunpack.c.h.b16 %v394
      %v487 = vunpack.c.l.b16 %v395
      %v488 = vunpack.c.h.b16 %v395
      %v489 = vunpack.c.l.b16 %v396
      %v490 = vunpack.c.h.b16 %v396
      %v491 = vunpack.c.l.b16 %v397
      %v492 = vunpack.c.h.b16 %v397
      %v493 = vunpack.c.l.b16 %v398
      %v494 = vunpack.c.h.b16 %v398
      %v495 = vunpack.c.l.b16 %v399
      %v496 = vunpack.c.h.b16 %v399
      %v497 = vunpack.c.l.b16 %v400
      %v498 = vunpack.c.h.b16 %v400
      %v499 = vunpack.c.l.b16 %v401
      %v500 = vunpack.c.h.b16 %v401
      %v501 = vunpack.c.l.b16 %v402
      %v502 = vunpack.c.h.b16 %v402
      %v503 = vunpack.c.l.b16 %v403
      %v504 = vunpack.c.h.b16 %v403
      %v505 = vunpack.c.l.b16 %v404
      %v506 = vunpack.c.h.b16 %v404
      %v507 = vunpack.c.l.b16 %v405
      %v508 = vunpack.c.h.b16 %v405
      %v509 = vunpack.c.l.b16 %v406
      %v510 = vunpack.c.h.b16 %v406
      %v511 = vunpack.c.l.b16 %v407
      %v512 = vunpack.c.h.b16 %v407
      %v513 = vunpack.c.l.b16 %v408
      %v514 = vunpack.c.h.b16 %v408
      %v515 = vunpack.c.l.b16 %v409
      %v516 = vunpack.c.h.b16 %v409
      %v517 = vunpack.c.l.b16 %v410
      %v518 = vunpack.c.h.b16 %v410
      %v519 = vunpack.c.l.b16 %v411
      %v520 = vunpack.c.h.b16 %v411
      %v521 = vunpack.c.l.b16 %v412
      %v522 = vunpack.c.h.b16 %v412
      %v523 = vunpack.c.l.b16 %v413
      %v524 = vunpack.c.h.b16 %v413
      %v525 = vunpack.c.l.b16 %v414
      %v526 = vunpack.c.h.b16 %v414
      %v527 = vunpack.c.l.b16 %v415
      %v528 = vunpack.c.h.b16 %v415
      %v529 = vunpack.c.l.b16 %v416
      %v530 = vunpack.c.h.b16 %v416
      %v531 = vunpack.c.l.b16 %v417
      %v532 = vunpack.c.h.b16 %v417
      %v533 = vunpack.c.l.b16 %v418
      %v534 = vunpack.c.h.b16 %v418
      %v535 = vunpack.c.l.b16 %v419
      %v536 = vunpack.c.h.b16 %v419
      %v537 = vunpack.c.l.b16 %v420
      %v538 = vunpack.c.h.b16 %v420
      %v539 = vpack.c.b16 %v479, %v475
      %v540 = vpack.c.b16 %v480, %v476
      %v541 = vpack.c.b16 %v481, %v477
      %v542 = vpack.c.b16 %v482, %v478
      %v543 = vpack.c.b16 %v487, %v483
      %v544 = vpack.c.b16 %v488, %v484
      %v545 = vpack.c.b16 %v489, %v485
      %v546 = vpack.c.b16 %v490, %v486
      %v547 = vpack.c.b16 %v495, %v491
      %v548 = vpack.c.b16 %v496, %v492
      %v549 = vpack.c.b16 %v497, %v493
      %v550 = vpack.c.b16 %v498, %v494
      %v551 = vpack.c.b16 %v503, %v499
      %v552 = vpack.c.b16 %v504, %v500
      %v553 = vpack.c.b16 %v505, %v501
      %v554 = vpack.c.b16 %v506, %v502
      %v555 = vpack.c.b16 %v511, %v507
      %v556 = vpack.c.b16 %v512, %v508
      %v557 = vpack.c.b16 %v513, %v509
      %v558 = vpack.c.b16 %v514, %v510
      %v559 = vpack.c.b16 %v519, %v515
      %v560 = vpack.c.b16 %v520, %v516
      %v561 = vpack.c.b16 %v521, %v517
      %v562 = vpack.c.b16 %v522, %v518
      %v563 = vpack.c.b16 %v527, %v523
      %v564 = vpack.c.b16 %v528, %v524
      %v565 = vpack.c.b16 %v529, %v525
      %v566 = vpack.c.b16 %v530, %v526
      %v567 = vpack.c.b16 %v535, %v531
      %v568 = vpack.c.b16 %v536, %v532
      %v569 = vpack.c.b16 %v537, %v533
      %v570 = vpack.c.b16 %v538, %v534
      %603 = vmatprep.subr.bf16.mxu0 %v540
      %604 = vmatpush1.bf16.msra.mxu0 %v539
      %605 = vmatprep.subr.bf16.mxu0 %v544
      %606 = vmatpush1.bf16.msra.mxu0 %v543
      %607 = vmatprep.subr.bf16.mxu0 %v548
      %608 = vmatpush1.bf16.msra.mxu0 %v547
      %609 = vmatprep.subr.bf16.mxu0 %v552
      %610 = vmatpush1.bf16.msra.mxu0 %v551
      %611 = vmatprep.subr.bf16.mxu0 %v556
      %612 = vmatpush1.bf16.msra.mxu0 %v555
      %613 = vmatprep.subr.bf16.mxu0 %v560
      %614 = vmatpush1.bf16.msra.mxu0 %v559
      %615 = vmatprep.subr.bf16.mxu0 %v564
      %616 = vmatpush1.bf16.msra.mxu0 %v563
      %617 = vmatprep.subr.bf16.mxu0 %v568
      %618 = vmatpush1.bf16.msra.mxu0 %v567
      %619 = vmatprep.subr.bf16.mxu0 0
      %620 = vmatpush1.bf16.msra.mxu0 0
      %621 = vmatprep.subr.bf16.mxu0 0
      %622 = vmatpush1.bf16.msra.mxu0 0
      %623 = vmatprep.subr.bf16.mxu0 0
      %624 = vmatpush1.bf16.msra.mxu0 0
      %625 = vmatprep.subr.bf16.mxu0 0
      %626 = vmatpush1.bf16.msra.mxu0 0
      %627 = vmatprep.subr.bf16.mxu0 0
      %628 = vmatpush1.bf16.msra.mxu0 0
      %629 = vmatprep.subr.bf16.mxu0 0
      %630 = vmatpush1.bf16.msra.mxu0 0
      %631 = vmatprep.subr.bf16.mxu0 0
      %632 = vmatpush1.bf16.msra.mxu0 0
      %633 = vmatprep.subr.bf16.mxu0 0
      %634 = vmatpush1.bf16.msra.mxu0 0
      %635 = vmatprep.mubr.bf16.mxu0 0
      %636 = vmatmul.mubr.bf16.gmra.mrb[0].mxu0 %v388
      %v637 = vpop.f32.mrb[0].mxu0
      %v638 = vadd.f32 %v426, %v637
      %v639 = vpop.f32.mrb[0].mxu0
      %v640 = vadd.f32 %v430, %v639
      %v641 = vpop.f32.mrb[0].mxu0
      %v642 = vpop.f32.mrb[0].mxu0
      %643 = vdwg.mxu0
      %644 = vmatprep.subr.bf16.mxu0 %v542
      %645 = vmatpush1.bf16.msra.mxu0 %v541
      %646 = vmatprep.subr.bf16.mxu0 %v546
      %647 = vmatpush1.bf16.msra.mxu0 %v545
      %648 = vmatprep.subr.bf16.mxu0 %v550
      %649 = vmatpush1.bf16.msra.mxu0 %v549
      %650 = vmatprep.subr.bf16.mxu0 %v554
      %651 = vmatpush1.bf16.msra.mxu0 %v553
      %652 = vmatprep.subr.bf16.mxu0 %v558
      %653 = vmatpush1.bf16.msra.mxu0 %v557
      %654 = vmatprep.subr.bf16.mxu0 %v562
      %655 = vmatpush1.bf16.msra.mxu0 %v561
      %656 = vmatprep.subr.bf16.mxu0 %v566
      %657 = vmatpush1.bf16.msra.mxu0 %v565
      %658 = vmatprep.subr.bf16.mxu0 %v570
      %659 = vmatpush1.bf16.msra.mxu0 %v569
      %660 = vmatprep.subr.bf16.mxu0 0
      %661 = vmatpush1.bf16.msra.mxu0 0
      %662 = vmatprep.subr.bf16.mxu0 0
      %663 = vmatpush1.bf16.msra.mxu0 0
      %664 = vmatprep.subr.bf16.mxu0 0
      %665 = vmatpush1.bf16.msra.mxu0 0
      %666 = vmatprep.subr.bf16.mxu0 0
      %667 = vmatpush1.bf16.msra.mxu0 0
      %668 = vmatprep.subr.bf16.mxu0 0
      %669 = vmatpush1.bf16.msra.mxu0 0
      %670 = vmatprep.subr.bf16.mxu0 0
      %671 = vmatpush1.bf16.msra.mxu0 0
      %672 = vmatprep.subr.bf16.mxu0 0
      %673 = vmatpush1.bf16.msra.mxu0 0
      %674 = vmatprep.subr.bf16.mxu0 0
      %675 = vmatpush1.bf16.msra.mxu0 0
      %676 = vmatprep.mubr.bf16.mxu0 0
      %677 = vmatmul.mubr.bf16.gmra.mrb[0].mxu0 %v388
      %v678 = vpop.f32.mrb[0].mxu0
      %v679 = vadd.f32 %v434, %v678
      %v680 = vpop.f32.mrb[0].mxu0
      %v681 = vadd.f32 %v438, %v680
      %v682 = vpop.f32.mrb[0].mxu0
      %v683 = vpop.f32.mrb[0].mxu0
      %684 = vdwg.mxu0
      %v685 = vtanh.pop %v638
      %v686 = vtanh.pop %v640
      %v687 = vtanh.pop %v679
      %v688 = vtanh.pop %v681
      %v689 = vpack.c.bf16 %v685, %v685
      %v690 = vpack.c.bf16 %v686, %v686
      %v691 = vpack.c.bf16 %v687, %v687
      %v692 = vpack.c.bf16 %v688, %v688
      %v693 = vld [vmem:[%s5] sm:$0xf]
      %v694 = vld [vmem:[%s5 + $0x4] sm:$0xf]
      %v695 = vld [vmem:[%s5 + $0x8] sm:$0xf]
      %v696 = vld [vmem:[%s5 + $0xc] sm:$0xf]
      %v697 = vld [vmem:[%s5 + $0x10] sm:$0xf]
      %v698 = vld [vmem:[%s5 + $0x14] sm:$0xf]
      %v699 = vld [vmem:[%s5 + $0x18] sm:$0xf]
      %v700 = vld [vmem:[%s5 + $0x1c] sm:$0xf]
      %v701 = vld [vmem:[%s5 + $0x20] sm:$0xf]
      %v702 = vld [vmem:[%s5 + $0x24] sm:$0xf]
      %v703 = vld [vmem:[%s5 + $0x28] sm:$0xf]
      %v704 = vld [vmem:[%s5 + $0x2c] sm:$0xf]
      %v705 = vld [vmem:[%s5 + $0x30] sm:$0xf]
      %v706 = vld [vmem:[%s5 + $0x34] sm:$0xf]
      %v707 = vld [vmem:[%s5 + $0x38] sm:$0xf]
      %v708 = vld [vmem:[%s5 + $0x3c] sm:$0xf]
      %v709 = vld [vmem:[%s5 + $0x40] sm:$0xf]
      %v710 = vld [vmem:[%s5 + $0x44] sm:$0xf]
      %v711 = vld [vmem:[%s5 + $0x48] sm:$0xf]
      %v712 = vld [vmem:[%s5 + $0x4c] sm:$0xf]
      %v713 = vld [vmem:[%s5 + $0x50] sm:$0xf]
      %v714 = vld [vmem:[%s5 + $0x54] sm:$0xf]
      %v715 = vld [vmem:[%s5 + $0x58] sm:$0xf]
      %v716 = vld [vmem:[%s5 + $0x5c] sm:$0xf]
      %v717 = vld [vmem:[%s5 + $0x60] sm:$0xf]
      %v718 = vld [vmem:[%s5 + $0x64] sm:$0xf]
      %v719 = vld [vmem:[%s5 + $0x68] sm:$0xf]
      %v720 = vld [vmem:[%s5 + $0x6c] sm:$0xf]
      %v721 = vld [vmem:[%s5 + $0x70] sm:$0xf]
      %v722 = vld [vmem:[%s5 + $0x74] sm:$0xf]
      %v723 = vld [vmem:[%s5 + $0x78] sm:$0xf]
      %v724 = vld [vmem:[%s5 + $0x7c] sm:$0xf]
      %v725 = vld [vmem:[%s5 + $0x80] sm:$0xf]
      %v726 = vld [vmem:[%s5 + $0x84] sm:$0xf]
      %v727 = vld [vmem:[%s5 + $0x88] sm:$0xf]
      %v728 = vld [vmem:[%s5 + $0x8c] sm:$0xf]
      %v729 = vld [vmem:[%s5 + $0x90] sm:$0xf]
      %v730 = vld [vmem:[%s5 + $0x94] sm:$0xf]
      %v731 = vld [vmem:[%s5 + $0x98] sm:$0xf]
      %v732 = vld [vmem:[%s5 + $0x9c] sm:$0xf]
      %v733 = vld [vmem:[%s5 + $0xa0] sm:$0xf]
      %v734 = vld [vmem:[%s5 + $0xa4] sm:$0xf]
      %v735 = vld [vmem:[%s5 + $0xa8] sm:$0xf]
      %v736 = vld [vmem:[%s5 + $0xac] sm:$0xf]
      %v737 = vld [vmem:[%s5 + $0xb0] sm:$0xf]
      %v738 = vld [vmem:[%s5 + $0xb4] sm:$0xf]
      %v739 = vld [vmem:[%s5 + $0xb8] sm:$0xf]
      %v740 = vld [vmem:[%s5 + $0xbc] sm:$0xf]
      %v741 = vld [vmem:[%s5 + $0xc0] sm:$0xf]
      %v742 = vld [vmem:[%s5 + $0xc4] sm:$0xf]
      %v743 = vld [vmem:[%s5 + $0xc8] sm:$0xf]
      %v744 = vld [vmem:[%s5 + $0xcc] sm:$0xf]
      %v745 = vld [vmem:[%s5 + $0xd0] sm:$0xf]
      %v746 = vld [vmem:[%s5 + $0xd4] sm:$0xf]
      %v747 = vld [vmem:[%s5 + $0xd8] sm:$0xf]
      %v748 = vld [vmem:[%s5 + $0xdc] sm:$0xf]
      %v749 = vld [vmem:[%s5 + $0xe0] sm:$0xf]
      %v750 = vld [vmem:[%s5 + $0xe4] sm:$0xf]
      %v751 = vld [vmem:[%s5 + $0xe8] sm:$0xf]
      %v752 = vld [vmem:[%s5 + $0xec] sm:$0xf]
      %v753 = vld [vmem:[%s5 + $0xf0] sm:$0xf]
      %v754 = vld [vmem:[%s5 + $0xf4] sm:$0xf]
      %v755 = vld [vmem:[%s5 + $0xf8] sm:$0xf]
      %v756 = vld [vmem:[%s5 + $0xfc] sm:$0xf]
      %v757 = vld [vmem:[%s6] sm:$0x1]
      %v759 = vlaneseq
      %v760 = vshrl.u32 %v759, 7
      %v761 = vsub.s32 0, %v760
      %v762 = vrot.slane %v757, %v761
      %v828 = vunpack.c.l.b16 %v693
      %v829 = vunpack.c.l.b16 %v694
      %v830 = vunpack.c.l.b16 %v695
      %v831 = vunpack.c.l.b16 %v696
      %v832 = vunpack.c.l.b16 %v697
      %v833 = vunpack.c.l.b16 %v698
      %v834 = vunpack.c.l.b16 %v699
      %v835 = vunpack.c.l.b16 %v700
      %v836 = vunpack.c.l.b16 %v701
      %v837 = vunpack.c.l.b16 %v702
      %v838 = vunpack.c.l.b16 %v703
      %v839 = vunpack.c.l.b16 %v704
      %v840 = vunpack.c.l.b16 %v705
      %v841 = vunpack.c.l.b16 %v706
      %v842 = vunpack.c.l.b16 %v707
      %v843 = vunpack.c.l.b16 %v708
      %v844 = vunpack.c.l.b16 %v709
      %v845 = vunpack.c.l.b16 %v710
      %v846 = vunpack.c.l.b16 %v711
      %v847 = vunpack.c.l.b16 %v712
      %v848 = vunpack.c.l.b16 %v713
      %v849 = vunpack.c.l.b16 %v714
      %v850 = vunpack.c.l.b16 %v715
      %v851 = vunpack.c.l.b16 %v716
      %v852 = vunpack.c.l.b16 %v717
      %v853 = vunpack.c.l.b16 %v718
      %v854 = vunpack.c.l.b16 %v719
      %v855 = vunpack.c.l.b16 %v720
      %v856 = vunpack.c.l.b16 %v721
      %v857 = vunpack.c.l.b16 %v722
      %v858 = vunpack.c.l.b16 %v723
      %v859 = vunpack.c.l.b16 %v724
      %v860 = vunpack.c.l.b16 %v725
      %v861 = vunpack.c.l.b16 %v726
      %v862 = vunpack.c.l.b16 %v727
      %v863 = vunpack.c.l.b16 %v728
      %v864 = vunpack.c.l.b16 %v729
      %v865 = vunpack.c.l.b16 %v730
      %v866 = vunpack.c.l.b16 %v731
      %v867 = vunpack.c.l.b16 %v732
      %v868 = vunpack.c.l.b16 %v733
      %v869 = vunpack.c.l.b16 %v734
      %v870 = vunpack.c.l.b16 %v735
      %v871 = vunpack.c.l.b16 %v736
      %v872 = vunpack.c.l.b16 %v737
      %v873 = vunpack.c.l.b16 %v738
      %v874 = vunpack.c.l.b16 %v739
      %v875 = vunpack.c.l.b16 %v740
      %v876 = vunpack.c.l.b16 %v741
      %v877 = vunpack.c.l.b16 %v742
      %v878 = vunpack.c.l.b16 %v743
      %v879 = vunpack.c.l.b16 %v744
      %v880 = vunpack.c.l.b16 %v745
      %v881 = vunpack.c.l.b16 %v746
      %v882 = vunpack.c.l.b16 %v747
      %v883 = vunpack.c.l.b16 %v748
      %v884 = vunpack.c.l.b16 %v749
      %v885 = vunpack.c.l.b16 %v750
      %v886 = vunpack.c.l.b16 %v751
      %v887 = vunpack.c.l.b16 %v752
      %v888 = vunpack.c.l.b16 %v753
      %v889 = vunpack.c.l.b16 %v754
      %v890 = vunpack.c.l.b16 %v755
      %v891 = vunpack.c.l.b16 %v756
      %v892 = vpack.c.b16 %v829, %v828
      %v893 = vpack.c.b16 %v831, %v830
      %v894 = vpack.c.b16 %v833, %v832
      %v895 = vpack.c.b16 %v835, %v834
      %v896 = vpack.c.b16 %v837, %v836
      %v897 = vpack.c.b16 %v839, %v838
      %v898 = vpack.c.b16 %v841, %v840
      %v899 = vpack.c.b16 %v843, %v842
      %v900 = vpack.c.b16 %v845, %v844
      %v901 = vpack.c.b16 %v847, %v846
      %v902 = vpack.c.b16 %v849, %v848
      %v903 = vpack.c.b16 %v851, %v850
      %v904 = vpack.c.b16 %v853, %v852
      %v905 = vpack.c.b16 %v855, %v854
      %v906 = vpack.c.b16 %v857, %v856
      %v907 = vpack.c.b16 %v859, %v858
      %v908 = vpack.c.b16 %v861, %v860
      %v909 = vpack.c.b16 %v863, %v862
      %v910 = vpack.c.b16 %v865, %v864
      %v911 = vpack.c.b16 %v867, %v866
      %v912 = vpack.c.b16 %v869, %v868
      %v913 = vpack.c.b16 %v871, %v870
      %v914 = vpack.c.b16 %v873, %v872
      %v915 = vpack.c.b16 %v875, %v874
      %v916 = vpack.c.b16 %v877, %v876
      %v917 = vpack.c.b16 %v879, %v878
      %v918 = vpack.c.b16 %v881, %v880
      %v919 = vpack.c.b16 %v883, %v882
      %v920 = vpack.c.b16 %v885, %v884
      %v921 = vpack.c.b16 %v887, %v886
      %v922 = vpack.c.b16 %v889, %v888
      %v923 = vpack.c.b16 %v891, %v890
      %956 = vmatprep.subr.bf16.mxu0 0
      %957 = vmatpush1.bf16.msra.mxu0 %v892
      %958 = vmatprep.subr.bf16.mxu0 0
      %959 = vmatpush1.bf16.msra.mxu0 %v893
      %960 = vmatprep.subr.bf16.mxu0 0
      %961 = vmatpush1.bf16.msra.mxu0 %v894
      %962 = vmatprep.subr.bf16.mxu0 0
      %963 = vmatpush1.bf16.msra.mxu0 %v895
      %964 = vmatprep.subr.bf16.mxu0 0
      %965 = vmatpush1.bf16.msra.mxu0 %v896
      %966 = vmatprep.subr.bf16.mxu0 0
      %967 = vmatpush1.bf16.msra.mxu0 %v897
      %968 = vmatprep.subr.bf16.mxu0 0
      %969 = vmatpush1.bf16.msra.mxu0 %v898
      %970 = vmatprep.subr.bf16.mxu0 0
      %971 = vmatpush1.bf16.msra.mxu0 %v899
      %972 = vmatprep.subr.bf16.mxu0 0
      %973 = vmatpush1.bf16.msra.mxu0 %v900
      %974 = vmatprep.subr.bf16.mxu0 0
      %975 = vmatpush1.bf16.msra.mxu0 %v901
      %976 = vmatprep.subr.bf16.mxu0 0
      %977 = vmatpush1.bf16.msra.mxu0 %v902
      %978 = vmatprep.subr.bf16.mxu0 0
      %979 = vmatpush1.bf16.msra.mxu0 %v903
      %980 = vmatprep.subr.bf16.mxu0 0
      %981 = vmatpush1.bf16.msra.mxu0 %v904
      %982 = vmatprep.subr.bf16.mxu0 0
      %983 = vmatpush1.bf16.msra.mxu0 %v905
      %984 = vmatprep.subr.bf16.mxu0 0
      %985 = vmatpush1.bf16.msra.mxu0 %v906
      %986 = vmatprep.subr.bf16.mxu0 0
      %987 = vmatpush1.bf16.msra.mxu0 %v907
      %988 = vmatprep.mubr.bf16.mxu0 %v690
      %989 = vmatmul.mubr.bf16.gmra.mrb[0].mxu0 %v689
      %v990 = vpop.f32.mrb[0].mxu0
      %v991 = vadd.f32 %v762, %v990
      %v992 = vpop.f32.mrb[0].mxu0
      %v993 = vpop.f32.mrb[0].mxu0
      %v994 = vpop.f32.mrb[0].mxu0
      %995 = vdwg.mxu0
      %996 = vmatprep.subr.bf16.mxu0 0
      %997 = vmatpush1.bf16.msra.mxu0 %v908
      %998 = vmatprep.subr.bf16.mxu0 0
      %999 = vmatpush1.bf16.msra.mxu0 %v909
      %1000 = vmatprep.subr.bf16.mxu0 0
      %1001 = vmatpush1.bf16.msra.mxu0 %v910
      %1002 = vmatprep.subr.bf16.mxu0 0
      %1003 = vmatpush1.bf16.msra.mxu0 %v911
      %1004 = vmatprep.subr.bf16.mxu0 0
      %1005 = vmatpush1.bf16.msra.mxu0 %v912
      %1006 = vmatprep.subr.bf16.mxu0 0
      %1007 = vmatpush1.bf16.msra.mxu0 %v913
      %1008 = vmatprep.subr.bf16.mxu0 0
      %1009 = vmatpush1.bf16.msra.mxu0 %v914
      %1010 = vmatprep.subr.bf16.mxu0 0
      %1011 = vmatpush1.bf16.msra.mxu0 %v915
      %1012 = vmatprep.subr.bf16.mxu0 0
      %1013 = vmatpush1.bf16.msra.mxu0 %v916
      %1014 = vmatprep.subr.bf16.mxu0 0
      %1015 = vmatpush1.bf16.msra.mxu0 %v917
      %1016 = vmatprep.subr.bf16.mxu0 0
      %1017 = vmatpush1.bf16.msra.mxu0 %v918
      %1018 = vmatprep.subr.bf16.mxu0 0
      %1019 = vmatpush1.bf16.msra.mxu0 %v919
      %1020 = vmatprep.subr.bf16.mxu0 0
      %1021 = vmatpush1.bf16.msra.mxu0 %v920
      %1022 = vmatprep.subr.bf16.mxu0 0
      %1023 = vmatpush1.bf16.msra.mxu0 %v921
      %1024 = vmatprep.subr.bf16.mxu0 0
      %1025 = vmatpush1.bf16.msra.mxu0 %v922
      %1026 = vmatprep.subr.bf16.mxu0 0
      %1027 = vmatpush1.bf16.msra.mxu0 %v923
      %1028 = vmatprep.mubr.bf16.mxu0 %v692
      %1029 = vmatmul.mubr.bf16.gmra.mrb[0].mxu0 %v691
      %v1030 = vpop.f32.mrb[0].mxu0
      %v1031 = vadd.f32 %v991, %v1030
      %v1032 = vpop.f32.mrb[0].mxu0
      %v1033 = vpop.f32.mrb[0].mxu0
      %v1034 = vpop.f32.mrb[0].mxu0
      %1035 = vdwg.mxu0
      %v1036 = vtanh.pop %v1031
      %v1037 = vpack.c.bf16 %v1036, %v1036
      %1038 = vst [vmem:[%s273] sm:$0xf] %v1037
      %p1039 = scmp.lt.s32.totalorder %s18, 1
      %s1040 = scalar_select %p1039, %s18, 1
      %s1041 = smul.addr %s1040, 4
      %s1042 = scalar_lea.vmem %s7, %s1041
      // Predicated region
      $region49: #{_fnn_lm_forward.2} parent=47 // pred_check
        %p1043 = pneg %p188
      $region50: #{_fnn_lm_forward.2} parent=47 // pred_check_branch
        %1045 = sbr.rel (%p1043) target = $region52
      $region51: #{_fnn_lm_forward.2} parent=47 // pred_region
        _
      $region52: #{_fnn_lm_forward.2} parent=47 // pred_fallthru
        _
    $region48: #{_fnn_lm_forward.2} parent=5 // pred_fallthru
      _
    %p1046 = scmp.le.s32.totalorder 2, %s13
    // Predicated region
    $region53: #{_fnn_lm_forward.2} parent=5 // pred_check
      %p1047 = pneg %p1046
    $region54: #{_fnn_lm_forward.2} parent=5 // pred_check_branch
      %1049 = sbr.rel (%p1047) target = $region56
    $region55: #{_fnn_lm_forward.2} parent=5 // pred_region
      %s1050 = ssub.s32 %s13, 2
      // Predicated region
      $region57: #{_fnn_lm_forward.2} parent=55 // pred_check
        %p1051 = pneg %p194
      $region58: #{_fnn_lm_forward.2} parent=55 // pred_check_branch
        %1053 = sbr.rel (%p1051) target = $region60
      $region59: #{_fnn_lm_forward.2} parent=55 // pred_region
        %p1054 = scmp.lt.s32.totalorder %s19, 1
        %s1055 = scalar_select %p1054, %s19, 1
        %s1056 = smul.addr %s1055, 4
        %s1057 = scalar_lea.vmem %s7, %s1056
      $region60: #{_fnn_lm_forward.2} parent=55 // pred_fallthru
        _
    $region56: #{_fnn_lm_forward.2} parent=5 // pred_fallthru
      _
  $region6: #{_fnn_lm_forward.2} parent=0 // loop_footer
    %s17 = sadd.s32 1, %s13
  $region7: #{_fnn_lm_forward.2} parent=0 // loop_footer_branch
    %12 = sbr.rel target = $region3
  $region8: #{_fnn_lm_forward.2} parent=0 // loop_exit
    _

</llo_original>
